<compile_context>
chip_gen: v7x
topology: tpu7x:2x2x1
jax: 0.10.0
libtpu: 0.0.40
codegen_flags: <defaults>
</compile_context>

<pallas_src>
import functools

import jax
import jax.numpy as jnp
from jax.experimental import pallas as pl
from jax.experimental.pallas import tpu as pltpu


def transtab_layer_kernel(
    x_ref, mask_ref,
    wqkv_ref, bqkv_ref, wo_ref,
    w1g_ref, w2p_ref, b1g_ref, pk_ref,
    o_ref,
    *, nhead, gate_idx, eps):
  Bb, S, D = x_ref.shape
  dh = D // nhead
  R = Bb * S
  f32 = jnp.float32
  bf16 = jnp.bfloat16

  x3 = x_ref[...].astype(f32)                   # (Bb, S, D)
  xf = x3.reshape(R, D)                         # leading-dim merge: free

  pk = pk_ref[...].astype(f32)                  # (6, D) packed params
  bo, b2 = pk[0:1, :], pk[1:2, :]
  g1, beta1 = pk[2:3, :], pk[3:4, :]
  g2, beta2 = pk[4:5, :], pk[5:6, :]

  # ---- fused QKV projection: bf16 operands, f32 accumulation ----
  # 1/sqrt(dh) is already folded into the Q columns of wqkv/bqkv.
  qkv = jnp.dot(xf.astype(bf16), wqkv_ref[...],
                preferred_element_type=f32) + bqkv_ref[...]
  q = qkv[:, 0:D].reshape(Bb, S, D)
  k = qkv[:, D:2 * D].reshape(Bb, S, D)
  v = qkv[:, 2 * D:3 * D].reshape(Bb, S, D)

  # ---- head-major batched layout: (nhead*Bb, S, dh) ----
  # Attention matmuls now contract over dh only -> 1x (not nhead x) MXU work.
  def split_heads(t):
    return jnp.concatenate(
        [t[:, :, h * dh:(h + 1) * dh] for h in range(nhead)], axis=0)

  qh = split_heads(q).astype(bf16)              # (H*Bb, S, dh)
  kh = split_heads(k).astype(bf16)
  vh = split_heads(v).astype(bf16)

  mask = mask_ref[...].astype(f32)              # (Bb, 1, S), 1 = valid key
  neg = jnp.where(mask > 0.5, 0.0, -1e30)       # f32 additive key bias
  negh = jnp.concatenate([neg] * nhead, axis=0)  # (H*Bb, 1, S)

  s = jnp.einsum('bqd,bkd->bqk', qh, kh,
                 preferred_element_type=f32) + negh       # f32 scores
  m = jnp.max(s, axis=-1, keepdims=True)
  p = jnp.exp(s - m)
  p = p * pl.reciprocal(jnp.sum(p, axis=-1, keepdims=True), approx=True)
  ctxh = jnp.einsum('bqk,bkd->bqd', p.astype(bf16), vh,
                    preferred_element_type=f32)           # (H*Bb, S, dh)

  # merge heads back to (Bb, S, D)
  ctx = jnp.concatenate(
      [ctxh[h * Bb:(h + 1) * Bb] for h in range(nhead)], axis=-1)

  # single full-K output projection (dropout1 identity in eval mode)
  sa = jnp.dot(ctx.reshape(R, D).astype(bf16), wo_ref[...],
               preferred_element_type=f32) + bo

  # ---- residual + LayerNorm 1 (post-norm), f32 ----
  y = xf + sa
  mu = jnp.mean(y, axis=-1, keepdims=True)
  var = jnp.mean((y - mu) ** 2, axis=-1, keepdims=True)
  y = (y - mu) * jax.lax.rsqrt(var + eps) * g1 + beta1

  # ---- gated FFN: [W1 | 0 | wg@gate_idx | 0] fused into one matmul ----
  h1 = jnp.dot(y.astype(bf16), w1g_ref[...],
               preferred_element_type=f32) + b1g_ref[...]
  g = jax.nn.sigmoid(h1[:, gate_idx:gate_idx + 1])  # 128-aligned gate column
  h1 = jnp.maximum(h1 * g, 0.0)                 # relu(h * gate); pad/gate cols
  ff = jnp.dot(h1.astype(bf16), w2p_ref[...],   # die against W2's zero rows
               preferred_element_type=f32) + b2
  # dropout / dropout2 identity in eval mode.

  # ---- residual + LayerNorm 2, f32 ----
  z = y + ff
  mu2 = jnp.mean(z, axis=-1, keepdims=True)
  var2 = jnp.mean((z - mu2) ** 2, axis=-1, keepdims=True)
  z = (z - mu2) * jax.lax.rsqrt(var2 + eps) * g2 + beta2

  o_ref[...] = z.reshape(Bb, S, D).astype(o_ref.dtype)


def transtab_transformer_layer(x, key_padding_mask, params, *, nhead, eps=1e-5):
  B, S, D = x.shape
  dff = params['w1'].shape[0]
  dh = D // nhead
  scale = 1.0 / (dh ** 0.5)
  f32 = jnp.float32
  bf16 = jnp.bfloat16

  # Gate column sits at the first lane of its own 128-lane tile (aligned
  # extract); padded columns multiply into W2's zero rows -> exact zeros.
  gate_idx = ((dff + 127) // 128) * 128
  dffp = gate_idx + 128

  # --- fused / packed parameters (torch (out,in) -> (in,out) layout) ---
  # bf16 weights: MXU-native operands and half the resident weight VMEM.
  wqkv = jnp.concatenate(
      [params['wq'].T * scale, params['wk'].T, params['wv'].T],
      axis=1).astype(bf16)
  bqkv = jnp.concatenate(
      [params['bq'] * scale, params['bk'], params['bv']])[None, :].astype(f32)
  wo_t = params['wo'].T.astype(bf16)

  w1g = jnp.zeros((D, dffp), f32)
  w1g = w1g.at[:, :dff].set(params['w1'].T.astype(f32))
  w1g = w1g.at[:, gate_idx:gate_idx + 1].set(params['wg'].T.astype(f32))
  w1g = w1g.astype(bf16)
  b1g = jnp.zeros((1, dffp), f32).at[:, :dff].set(params['b1'][None, :])
  w2p = jnp.zeros((dffp, D), f32).at[:dff, :].set(
      params['w2'].T.astype(f32)).astype(bf16)

  pk = jnp.stack([params['bo'], params['b2'], params['g1'], params['beta1'],
                  params['g2'], params['beta2']], axis=0).astype(f32)  # (6, D)

  mask3 = key_padding_mask.reshape(B, 1, S).astype(f32)

  # --- batch blocking: target ~512 sublane rows per grid step; keep an even
  # number of grid steps when B > 1 so v7x's two TensorCores stay balanced. ---
  target_rows = 512
  Bb = max(1, min(B, target_rows // max(S, 1)))
  while B % Bb:
    Bb -= 1
  if B > 1 and (B // Bb) % 2 == 1:
    for cand in range(Bb, 0, -1):
      if B % cand == 0 and (B // cand) % 2 == 0:
        Bb = cand
        break
  grid = (B // Bb,)

  # --- per-generation VMEM budget: ~75% of physical (96 MiB v5e/v6e,
  # 48 MiB v7x); conservative fallback if the query is unavailable. ---
  try:
    cap = int(getattr(pltpu.get_tpu_info(), 'vmem_capacity_bytes', 0)) or 0
  except Exception:
    cap = 0
  vmem_limit = min((cap * 3) // 4, 100 * 1024 * 1024) if cap else 48 * 1024 * 1024

  kernel = functools.partial(transtab_layer_kernel, nhead=nhead,
                             gate_idx=gate_idx, eps=eps)
  out_shape = jax.ShapeDtypeStruct((B, S, D), x.dtype)

  def run(single_buffer_weights):
    # Constant-index weight/bias blocks never change between grid steps, so a
    # single VMEM buffer suffices (halves their footprint vs default Buffered(2)).
    pm = pl.Buffered(1) if single_buffer_weights else None

    def wspec(shape):
      if pm is None:
        return pl.BlockSpec(shape, lambda b: (0, 0))
      return pl.BlockSpec(shape, lambda b: (0, 0), pipeline_mode=pm)

    grid_spec = pltpu.PrefetchScalarGridSpec(
        num_scalar_prefetch=0,
        grid=grid,
        in_specs=[
            pl.BlockSpec((Bb, S, D), lambda b: (b, 0, 0)),   # x
            pl.BlockSpec((Bb, 1, S), lambda b: (b, 0, 0)),   # key padding mask
            wspec((D, 3 * D)),                               # [Wq*s | Wk | Wv]^T
            wspec((1, 3 * D)),                               # fused qkv bias
            wspec((D, D)),                                   # Wo^T
            wspec((D, dffp)),                                # [W1^T | wg^T | 0]
            wspec((dffp, D)),                                # [W2^T ; 0]
            wspec((1, dffp)),                                # [b1 | 0]
            wspec((6, D)),                                   # packed bo/b2/ln
        ],
        out_specs=pl.BlockSpec((Bb, S, D), lambda b: (b, 0, 0)),
    )
    return pl.pallas_call(
        kernel,
        out_shape=out_shape,
        grid_spec=grid_spec,
        compiler_params=pltpu.CompilerParams(
            dimension_semantics=("parallel",),
            vmem_limit_bytes=int(vmem_limit),
        ),
    )(x, mask3, wqkv, bqkv, wo_t, w1g, w2p, b1g, pk)

  try:
    return run(True)
  except Exception:
    # pipeline_mode / Buffered(1) not supported by this jax build -> default
    # double buffering (bf16 weights already halve the footprint).
    return run(False)


def ref_forward(x, key_padding_mask, params, *, nhead, eps=1e-5):
  """Pure-JAX f32 reference mirroring the PyTorch forward (eval mode)."""
  B, S, D = x.shape
  dh = D // nhead
  scale = 1.0 / (dh ** 0.5)
  q = x @ params['wq'].T + params['bq']
  k = x @ params['wk'].T + params['bk']
  v = x @ params['wv'].T + params['bv']
  q = q.reshape(B, S, nhead, dh).transpose(0, 2, 1, 3)
  k = k.reshape(B, S, nhead, dh).transpose(0, 2, 1, 3)
  v = v.reshape(B, S, nhead, dh).transpose(0, 2, 1, 3)
  s = jnp.einsum('bhqd,bhkd->bhqk', q, k) * scale
  neg = jnp.where(key_padding_mask > 0.5, 0.0, -1e30)[:, None, None, :]
  s = s + neg
  p = jax.nn.softmax(s, axis=-1)
  o = jnp.einsum('bhqk,bhkd->bhqd', p, v).transpose(0, 2, 1, 3).reshape(B, S, D)
  sa = o @ params['wo'].T + params['bo']
  y = x + sa
  y = (y - y.mean(-1, keepdims=True)) / jnp.sqrt(
      y.var(-1, keepdims=True) + eps) * params['g1'] + params['beta1']
  g = jax.nn.sigmoid(y @ params['wg'].T)
  h = (y @ params['w1'].T + params['b1']) * g
  ff = jnp.maximum(h, 0.0) @ params['w2'].T + params['b2']
  z = y + ff
  z = (z - z.mean(-1, keepdims=True)) / jnp.sqrt(
      z.var(-1, keepdims=True) + eps) * params['g2'] + params['beta2']
  return z


if __name__ == "__main__":
  B, S, D, H, DFF = 2, 8, 32, 4, 64

  key = jax.random.PRNGKey(0)
  ks = jax.random.split(key, 16)

  def init(k, shape, scale=0.1):
    return (scale * jax.random.normal(k, shape)).astype(jnp.float32)

  params = dict(
      wq=init(ks[0], (D, D)), wk=init(ks[1], (D, D)), wv=init(ks[2], (D, D)),
      bq=init(ks[3], (D,)), bk=init(ks[4], (D,)), bv=init(ks[5], (D,)),
      wo=init(ks[6], (D, D)), bo=init(ks[7], (D,)),
      wg=init(ks[8], (1, D)),
      w1=init(ks[9], (DFF, D)), b1=init(ks[10], (DFF,)),
      w2=init(ks[11], (D, DFF)), b2=init(ks[12], (D,)),
      g1=jnp.ones((D,), jnp.float32), beta1=jnp.zeros((D,), jnp.float32),
      g2=jnp.ones((D,), jnp.float32), beta2=jnp.zeros((D,), jnp.float32),
  )

  x = init(ks[13], (B, S, D), scale=1.0)
  # second batch element has its last two tokens padded (mask==0 -> ignored)
  key_padding_mask = jnp.array(
      [[1] * S, [1] * (S - 2) + [0, 0]], dtype=jnp.float32)

  out = transtab_transformer_layer(x, key_padding_mask, params, nhead=H)
  out = jax.block_until_ready(out)

  ref = ref_forward(x, key_padding_mask, params, nhead=H)
  assert out.shape == (B, S, D)
  # tolerance accounts for bf16 MXU operands (f32 accumulation) and the
  # approximate (EUP) softmax reciprocal; the reference is pure f32.
  assert jnp.allclose(out, ref, rtol=1e-2, atol=1e-2), "mismatch vs JAX reference"

  print("KERNEL_OK")
</pallas_src>

<mosaic_0001>
module attributes {stable_mosaic.version = 11 : i64} {
  func.func @transtab_layer_kernel(%arg0: i32, %arg1: memref<1x8x32xf32, #tpu.memory_space<vmem>>, %arg2: memref<1x1x8xf32, #tpu.memory_space<vmem>>, %arg3: memref<32x96xbf16, #tpu.memory_space<vmem>>, %arg4: memref<1x96xf32, #tpu.memory_space<vmem>>, %arg5: memref<32x32xbf16, #tpu.memory_space<vmem>>, %arg6: memref<32x256xbf16, #tpu.memory_space<vmem>>, %arg7: memref<256x32xbf16, #tpu.memory_space<vmem>>, %arg8: memref<1x256xf32, #tpu.memory_space<vmem>>, %arg9: memref<6x32xf32, #tpu.memory_space<vmem>>, %arg10: memref<1x8x32xf32, #tpu.memory_space<vmem>>) attributes {dimension_semantics = [#tpu.dimension_semantics<parallel>], iteration_bounds = array<i64: 2>, scalar_prefetch = 0 : i64, scratch_operands = 0 : i64, tpu.core_type = #tpu.core_type<tc>, window_params = [{transform_indices = @transform_0, window_bounds = array<i64: 1, 8, 32>}, {transform_indices = @transform_1, window_bounds = array<i64: 1, 1, 8>}, {pipeline_mode = #tpu.pipeline_mode<synchronous>, transform_indices = @transform_2, window_bounds = array<i64: 32, 96>}, {pipeline_mode = #tpu.pipeline_mode<synchronous>, transform_indices = @transform_3, window_bounds = array<i64: 1, 96>}, {pipeline_mode = #tpu.pipeline_mode<synchronous>, transform_indices = @transform_4, window_bounds = array<i64: 32, 32>}, {pipeline_mode = #tpu.pipeline_mode<synchronous>, transform_indices = @transform_5, window_bounds = array<i64: 32, 256>}, {pipeline_mode = #tpu.pipeline_mode<synchronous>, transform_indices = @transform_6, window_bounds = array<i64: 256, 32>}, {pipeline_mode = #tpu.pipeline_mode<synchronous>, transform_indices = @transform_7, window_bounds = array<i64: 1, 256>}, {pipeline_mode = #tpu.pipeline_mode<synchronous>, transform_indices = @transform_8, window_bounds = array<i64: 6, 32>}, {transform_indices = @transform_9, window_bounds = array<i64: 1, 8, 32>}]} {
    %c0 = arith.constant 0 : index
    %c0_0 = arith.constant 0 : index
    %c0_1 = arith.constant 0 : index
    %0 = vector.load %arg1[%c0, %c0_0, %c0_1] : memref<1x8x32xf32, #tpu.memory_space<vmem>>, vector<1x8x32xf32>
    %1 = vector.shape_cast %0 : vector<1x8x32xf32> to vector<8x32xf32>
    %c0_2 = arith.constant 0 : index
    %c0_3 = arith.constant 0 : index
    %2 = vector.load %arg9[%c0_2, %c0_3] : memref<6x32xf32, #tpu.memory_space<vmem>>, vector<6x32xf32>
    %3 = vector.extract_strided_slice %2 {offsets = [0, 0], sizes = [1, 32], strides = [1, 1]} : vector<6x32xf32> to vector<1x32xf32>
    %4 = vector.extract_strided_slice %2 {offsets = [1, 0], sizes = [1, 32], strides = [1, 1]} : vector<6x32xf32> to vector<1x32xf32>
    %5 = vector.extract_strided_slice %2 {offsets = [2, 0], sizes = [1, 32], strides = [1, 1]} : vector<6x32xf32> to vector<1x32xf32>
    %6 = vector.extract_strided_slice %2 {offsets = [3, 0], sizes = [1, 32], strides = [1, 1]} : vector<6x32xf32> to vector<1x32xf32>
    %7 = vector.extract_strided_slice %2 {offsets = [4, 0], sizes = [1, 32], strides = [1, 1]} : vector<6x32xf32> to vector<1x32xf32>
    %8 = vector.extract_strided_slice %2 {offsets = [5, 0], sizes = [1, 32], strides = [1, 1]} : vector<6x32xf32> to vector<1x32xf32>
    %9 = arith.truncf %1 : vector<8x32xf32> to vector<8x32xbf16>
    %c0_4 = arith.constant 0 : index
    %c0_5 = arith.constant 0 : index
    %10 = vector.load %arg3[%c0_4, %c0_5] : memref<32x96xbf16, #tpu.memory_space<vmem>>, vector<32x96xbf16>
    %cst = arith.constant dense<0.000000e+00> : vector<8x96xf32>
    %11 = tpu.matmul %9, %10, %cst {dimension_numbers = #tpu.dot_dimension_numbers<[1], [0], [0], [1], [0, 0, 1, 1], [], []>} : vector<8x32xbf16>, vector<32x96xbf16>, vector<8x96xf32> -> vector<8x96xf32>
    %c0_6 = arith.constant 0 : index
    %c0_7 = arith.constant 0 : index
    %12 = vector.load %arg4[%c0_6, %c0_7] : memref<1x96xf32, #tpu.memory_space<vmem>>, vector<1x96xf32>
    %13 = vector.broadcast %12 : vector<1x96xf32> to vector<8x96xf32>
    %14 = arith.addf %11, %13 : vector<8x96xf32>
    %15 = vector.extract_strided_slice %14 {offsets = [0, 0], sizes = [8, 32], strides = [1, 1]} : vector<8x96xf32> to vector<8x32xf32>
    %16 = vector.shape_cast %15 : vector<8x32xf32> to vector<1x8x32xf32>
    %17 = vector.extract_strided_slice %14 {offsets = [0, 32], sizes = [8, 32], strides = [1, 1]} : vector<8x96xf32> to vector<8x32xf32>
    %18 = vector.shape_cast %17 : vector<8x32xf32> to vector<1x8x32xf32>
    %19 = vector.extract_strided_slice %14 {offsets = [0, 64], sizes = [8, 32], strides = [1, 1]} : vector<8x96xf32> to vector<8x32xf32>
    %20 = vector.shape_cast %19 : vector<8x32xf32> to vector<1x8x32xf32>
    %21 = vector.extract_strided_slice %16 {offsets = [0, 0, 0], sizes = [1, 8, 8], strides = [1, 1, 1]} : vector<1x8x32xf32> to vector<1x8x8xf32>
    %22 = vector.extract_strided_slice %16 {offsets = [0, 0, 8], sizes = [1, 8, 8], strides = [1, 1, 1]} : vector<1x8x32xf32> to vector<1x8x8xf32>
    %23 = vector.extract_strided_slice %16 {offsets = [0, 0, 16], sizes = [1, 8, 8], strides = [1, 1, 1]} : vector<1x8x32xf32> to vector<1x8x8xf32>
    %24 = vector.extract_strided_slice %16 {offsets = [0, 0, 24], sizes = [1, 8, 8], strides = [1, 1, 1]} : vector<1x8x32xf32> to vector<1x8x8xf32>
    %25 = tpu.concatenate %21, %22, %23, %24 in 0 : vector<1x8x8xf32>, vector<1x8x8xf32>, vector<1x8x8xf32>, vector<1x8x8xf32> -> vector<4x8x8xf32>
    %26 = arith.truncf %25 : vector<4x8x8xf32> to vector<4x8x8xbf16>
    %27 = vector.extract_strided_slice %18 {offsets = [0, 0, 0], sizes = [1, 8, 8], strides = [1, 1, 1]} : vector<1x8x32xf32> to vector<1x8x8xf32>
    %28 = vector.extract_strided_slice %18 {offsets = [0, 0, 8], sizes = [1, 8, 8], strides = [1, 1, 1]} : vector<1x8x32xf32> to vector<1x8x8xf32>
    %29 = vector.extract_strided_slice %18 {offsets = [0, 0, 16], sizes = [1, 8, 8], strides = [1, 1, 1]} : vector<1x8x32xf32> to vector<1x8x8xf32>
    %30 = vector.extract_strided_slice %18 {offsets = [0, 0, 24], sizes = [1, 8, 8], strides = [1, 1, 1]} : vector<1x8x32xf32> to vector<1x8x8xf32>
    %31 = tpu.concatenate %27, %28, %29, %30 in 0 : vector<1x8x8xf32>, vector<1x8x8xf32>, vector<1x8x8xf32>, vector<1x8x8xf32> -> vector<4x8x8xf32>
    %32 = arith.truncf %31 : vector<4x8x8xf32> to vector<4x8x8xbf16>
    %33 = vector.extract_strided_slice %20 {offsets = [0, 0, 0], sizes = [1, 8, 8], strides = [1, 1, 1]} : vector<1x8x32xf32> to vector<1x8x8xf32>
    %34 = vector.extract_strided_slice %20 {offsets = [0, 0, 8], sizes = [1, 8, 8], strides = [1, 1, 1]} : vector<1x8x32xf32> to vector<1x8x8xf32>
    %35 = vector.extract_strided_slice %20 {offsets = [0, 0, 16], sizes = [1, 8, 8], strides = [1, 1, 1]} : vector<1x8x32xf32> to vector<1x8x8xf32>
    %36 = vector.extract_strided_slice %20 {offsets = [0, 0, 24], sizes = [1, 8, 8], strides = [1, 1, 1]} : vector<1x8x32xf32> to vector<1x8x8xf32>
    %37 = tpu.concatenate %33, %34, %35, %36 in 0 : vector<1x8x8xf32>, vector<1x8x8xf32>, vector<1x8x8xf32>, vector<1x8x8xf32> -> vector<4x8x8xf32>
    %38 = arith.truncf %37 : vector<4x8x8xf32> to vector<4x8x8xbf16>
    %c0_8 = arith.constant 0 : index
    %c0_9 = arith.constant 0 : index
    %c0_10 = arith.constant 0 : index
    %39 = vector.load %arg2[%c0_8, %c0_9, %c0_10] : memref<1x1x8xf32, #tpu.memory_space<vmem>>, vector<1x1x8xf32>
    %cst_11 = arith.constant 5.000000e-01 : f32
    %40 = vector.broadcast %cst_11 : f32 to vector<1x1x8xf32>
    %41 = arith.cmpf ogt, %39, %40 : vector<1x1x8xf32>
    %cst_12 = arith.constant 0.000000e+00 : f32
    %cst_13 = arith.constant -1.000000e+30 : f32
    %42 = vector.broadcast %cst_12 : f32 to vector<1x1x8xf32>
    %43 = vector.broadcast %cst_13 : f32 to vector<1x1x8xf32>
    %44 = arith.select %41, %42, %43 : vector<1x1x8xi1>, vector<1x1x8xf32>
    %45 = tpu.concatenate %44, %44, %44, %44 in 0 : vector<1x1x8xf32>, vector<1x1x8xf32>, vector<1x1x8xf32>, vector<1x1x8xf32> -> vector<4x1x8xf32>
    "tpu.trace_start"() <{level = 10 : i32, message = "bqd,bkd->bqk"}> : () -> ()
    %cst_14 = arith.constant dense<0.000000e+00> : vector<4x8x8xf32>
    %46 = tpu.matmul %26, %32, %cst_14 {dimension_numbers = #tpu.dot_dimension_numbers<[2], [2], [1], [1], [0, 0, 0, 1, 1, 1], [0], [0]>} : vector<4x8x8xbf16>, vector<4x8x8xbf16>, vector<4x8x8xf32> -> vector<4x8x8xf32>
    "tpu.trace_stop"() : () -> ()
    %47 = vector.broadcast %45 : vector<4x1x8xf32> to vector<4x8x8xf32>
    %48 = arith.addf %46, %47 : vector<4x8x8xf32>
    %cst_15 = arith.constant dense<0xFF800000> : vector<4x8xf32>
    %49 = vector.multi_reduction <maximumf>, %48, %cst_15 [2] : vector<4x8x8xf32> to vector<4x8xf32>
    %50 = vector.shape_cast %49 : vector<4x8xf32> to vector<4x8x1xf32>
    %51 = vector.broadcast %50 : vector<4x8x1xf32> to vector<4x8x8xf32>
    %52 = arith.subf %48, %51 : vector<4x8x8xf32>
    %53 = math.exp %52 : vector<4x8x8xf32>
    %cst_16 = arith.constant dense<0.000000e+00> : vector<4x8xf32>
    %54 = vector.multi_reduction <add>, %53, %cst_16 [2] : vector<4x8x8xf32> to vector<4x8xf32>
    %55 = vector.shape_cast %54 : vector<4x8xf32> to vector<4x8x1xf32>
    %56 = tpu.reciprocal %55 {approx = true} : vector<4x8x1xf32> -> vector<4x8x1xf32>
    %57 = vector.broadcast %56 : vector<4x8x1xf32> to vector<4x8x8xf32>
    %58 = arith.mulf %53, %57 : vector<4x8x8xf32>
    %59 = arith.truncf %58 : vector<4x8x8xf32> to vector<4x8x8xbf16>
    "tpu.trace_start"() <{level = 10 : i32, message = "bqk,bkd->bqd"}> : () -> ()
    %cst_17 = arith.constant dense<0.000000e+00> : vector<4x8x8xf32>
    %60 = tpu.matmul %59, %38, %cst_17 {dimension_numbers = #tpu.dot_dimension_numbers<[2], [1], [1], [2], [0, 0, 0, 1, 1, 2], [0], [0]>} : vector<4x8x8xbf16>, vector<4x8x8xbf16>, vector<4x8x8xf32> -> vector<4x8x8xf32>
    "tpu.trace_stop"() : () -> ()
    %61 = vector.extract_strided_slice %60 {offsets = [0, 0, 0], sizes = [1, 8, 8], strides = [1, 1, 1]} : vector<4x8x8xf32> to vector<1x8x8xf32>
    %62 = vector.extract_strided_slice %60 {offsets = [1, 0, 0], sizes = [1, 8, 8], strides = [1, 1, 1]} : vector<4x8x8xf32> to vector<1x8x8xf32>
    %63 = vector.extract_strided_slice %60 {offsets = [2, 0, 0], sizes = [1, 8, 8], strides = [1, 1, 1]} : vector<4x8x8xf32> to vector<1x8x8xf32>
    %64 = vector.extract_strided_slice %60 {offsets = [3, 0, 0], sizes = [1, 8, 8], strides = [1, 1, 1]} : vector<4x8x8xf32> to vector<1x8x8xf32>
    %65 = tpu.concatenate %61, %62, %63, %64 in 2 : vector<1x8x8xf32>, vector<1x8x8xf32>, vector<1x8x8xf32>, vector<1x8x8xf32> -> vector<1x8x32xf32>
    %66 = vector.shape_cast %65 : vector<1x8x32xf32> to vector<8x32xf32>
    %67 = arith.truncf %66 : vector<8x32xf32> to vector<8x32xbf16>
    %c0_18 = arith.constant 0 : index
    %c0_19 = arith.constant 0 : index
    %68 = vector.load %arg5[%c0_18, %c0_19] : memref<32x32xbf16, #tpu.memory_space<vmem>>, vector<32x32xbf16>
    %cst_20 = arith.constant dense<0.000000e+00> : vector<8x32xf32>
    %69 = tpu.matmul %67, %68, %cst_20 {dimension_numbers = #tpu.dot_dimension_numbers<[1], [0], [0], [1], [0, 0, 1, 1], [], []>} : vector<8x32xbf16>, vector<32x32xbf16>, vector<8x32xf32> -> vector<8x32xf32>
    %70 = vector.broadcast %3 : vector<1x32xf32> to vector<8x32xf32>
    %71 = arith.addf %69, %70 : vector<8x32xf32>
    %72 = arith.addf %1, %71 : vector<8x32xf32>
    %cst_21 = arith.constant dense<0.000000e+00> : vector<8xf32>
    %73 = vector.multi_reduction <add>, %72, %cst_21 [1] : vector<8x32xf32> to vector<8xf32>
    %74 = vector.shape_cast %73 : vector<8xf32> to vector<8x1xf32>
    %cst_22 = arith.constant 3.200000e+01 : f32
    %75 = vector.broadcast %cst_22 : f32 to vector<8x1xf32>
    %76 = arith.divf %74, %75 : vector<8x1xf32>
    %77 = vector.broadcast %76 : vector<8x1xf32> to vector<8x32xf32>
    %78 = arith.subf %72, %77 : vector<8x32xf32>
    %79 = arith.mulf %78, %78 : vector<8x32xf32>
    %cst_23 = arith.constant dense<0.000000e+00> : vector<8xf32>
    %80 = vector.multi_reduction <add>, %79, %cst_23 [1] : vector<8x32xf32> to vector<8xf32>
    %81 = vector.shape_cast %80 : vector<8xf32> to vector<8x1xf32>
    %cst_24 = arith.constant 3.200000e+01 : f32
    %82 = vector.broadcast %cst_24 : f32 to vector<8x1xf32>
    %83 = arith.divf %81, %82 : vector<8x1xf32>
    %84 = vector.broadcast %76 : vector<8x1xf32> to vector<8x32xf32>
    %85 = arith.subf %72, %84 : vector<8x32xf32>
    %cst_25 = arith.constant 9.99999974E-6 : f32
    %86 = vector.broadcast %cst_25 : f32 to vector<8x1xf32>
    %87 = arith.addf %83, %86 : vector<8x1xf32>
    %88 = math.rsqrt %87 : vector<8x1xf32>
    %89 = vector.broadcast %88 : vector<8x1xf32> to vector<8x32xf32>
    %90 = arith.mulf %85, %89 : vector<8x32xf32>
    %91 = vector.broadcast %5 : vector<1x32xf32> to vector<8x32xf32>
    %92 = arith.mulf %90, %91 : vector<8x32xf32>
    %93 = vector.broadcast %6 : vector<1x32xf32> to vector<8x32xf32>
    %94 = arith.addf %92, %93 : vector<8x32xf32>
    %95 = arith.truncf %94 : vector<8x32xf32> to vector<8x32xbf16>
    %c0_26 = arith.constant 0 : index
    %c0_27 = arith.constant 0 : index
    %96 = vector.load %arg6[%c0_26, %c0_27] : memref<32x256xbf16, #tpu.memory_space<vmem>>, vector<32x256xbf16>
    %cst_28 = arith.constant dense<0.000000e+00> : vector<8x256xf32>
    %97 = tpu.matmul %95, %96, %cst_28 {dimension_numbers = #tpu.dot_dimension_numbers<[1], [0], [0], [1], [0, 0, 1, 1], [], []>} : vector<8x32xbf16>, vector<32x256xbf16>, vector<8x256xf32> -> vector<8x256xf32>
    %c0_29 = arith.constant 0 : index
    %c0_30 = arith.constant 0 : index
    %98 = vector.load %arg8[%c0_29, %c0_30] : memref<1x256xf32, #tpu.memory_space<vmem>>, vector<1x256xf32>
    %99 = vector.broadcast %98 : vector<1x256xf32> to vector<8x256xf32>
    %100 = arith.addf %97, %99 : vector<8x256xf32>
    %101 = vector.extract_strided_slice %100 {offsets = [0, 128], sizes = [8, 1], strides = [1, 1]} : vector<8x256xf32> to vector<8x1xf32>
    %102 = arith.negf %101 : vector<8x1xf32>
    %103 = math.exp %102 : vector<8x1xf32>
    %cst_31 = arith.constant 1.000000e+00 : f32
    %104 = vector.broadcast %cst_31 : f32 to vector<8x1xf32>
    %105 = arith.addf %104, %103 : vector<8x1xf32>
    %106 = arith.divf %104, %105 : vector<8x1xf32>
    %107 = vector.broadcast %106 : vector<8x1xf32> to vector<8x256xf32>
    %108 = arith.mulf %100, %107 : vector<8x256xf32>
    %cst_32 = arith.constant 0.000000e+00 : f32
    %109 = vector.broadcast %cst_32 : f32 to vector<8x256xf32>
    %110 = arith.maximumf %108, %109 : vector<8x256xf32>
    %111 = arith.truncf %110 : vector<8x256xf32> to vector<8x256xbf16>
    %c0_33 = arith.constant 0 : index
    %c0_34 = arith.constant 0 : index
    %112 = vector.load %arg7[%c0_33, %c0_34] : memref<256x32xbf16, #tpu.memory_space<vmem>>, vector<256x32xbf16>
    %cst_35 = arith.constant dense<0.000000e+00> : vector<8x32xf32>
    %113 = tpu.matmul %111, %112, %cst_35 {dimension_numbers = #tpu.dot_dimension_numbers<[1], [0], [0], [1], [0, 0, 1, 1], [], []>} : vector<8x256xbf16>, vector<256x32xbf16>, vector<8x32xf32> -> vector<8x32xf32>
    %114 = vector.broadcast %4 : vector<1x32xf32> to vector<8x32xf32>
    %115 = arith.addf %113, %114 : vector<8x32xf32>
    %116 = arith.addf %94, %115 : vector<8x32xf32>
    %cst_36 = arith.constant dense<0.000000e+00> : vector<8xf32>
    %117 = vector.multi_reduction <add>, %116, %cst_36 [1] : vector<8x32xf32> to vector<8xf32>
    %118 = vector.shape_cast %117 : vector<8xf32> to vector<8x1xf32>
    %cst_37 = arith.constant 3.200000e+01 : f32
    %119 = vector.broadcast %cst_37 : f32 to vector<8x1xf32>
    %120 = arith.divf %118, %119 : vector<8x1xf32>
    %121 = vector.broadcast %120 : vector<8x1xf32> to vector<8x32xf32>
    %122 = arith.subf %116, %121 : vector<8x32xf32>
    %123 = arith.mulf %122, %122 : vector<8x32xf32>
    %cst_38 = arith.constant dense<0.000000e+00> : vector<8xf32>
    %124 = vector.multi_reduction <add>, %123, %cst_38 [1] : vector<8x32xf32> to vector<8xf32>
    %125 = vector.shape_cast %124 : vector<8xf32> to vector<8x1xf32>
    %cst_39 = arith.constant 3.200000e+01 : f32
    %126 = vector.broadcast %cst_39 : f32 to vector<8x1xf32>
    %127 = arith.divf %125, %126 : vector<8x1xf32>
    %128 = vector.broadcast %120 : vector<8x1xf32> to vector<8x32xf32>
    %129 = arith.subf %116, %128 : vector<8x32xf32>
    %cst_40 = arith.constant 9.99999974E-6 : f32
    %130 = vector.broadcast %cst_40 : f32 to vector<8x1xf32>
    %131 = arith.addf %127, %130 : vector<8x1xf32>
    %132 = math.rsqrt %131 : vector<8x1xf32>
    %133 = vector.broadcast %132 : vector<8x1xf32> to vector<8x32xf32>
    %134 = arith.mulf %129, %133 : vector<8x32xf32>
    %135 = vector.broadcast %7 : vector<1x32xf32> to vector<8x32xf32>
    %136 = arith.mulf %134, %135 : vector<8x32xf32>
    %137 = vector.broadcast %8 : vector<1x32xf32> to vector<8x32xf32>
    %138 = arith.addf %136, %137 : vector<8x32xf32>
    %139 = vector.shape_cast %138 : vector<8x32xf32> to vector<1x8x32xf32>
    %c0_41 = arith.constant 0 : index
    %c0_42 = arith.constant 0 : index
    %c0_43 = arith.constant 0 : index
    %140 = vector.load %arg10[%c0_41, %c0_42, %c0_43] : memref<1x8x32xf32, #tpu.memory_space<vmem>>, vector<1x8x32xf32>
    tpu.vector_store %arg10[%c0_41, %c0_42, %c0_43], %139 {strides = array<i32>} : memref<1x8x32xf32, #tpu.memory_space<vmem>>, vector<1x8x32xf32>,
    return
  }
  func.func @transform_0(%arg0: i32) -> (i32, i32, i32) {
    %c0_i32 = arith.constant 0 : i32
    %c0_i32_0 = arith.constant 0 : i32
    %c0_i32_1 = arith.constant 0 : i32
    return %arg0, %c0_i32, %c0_i32_0 : i32, i32, i32
  }
  func.func @transform_1(%arg0: i32) -> (i32, i32, i32) {
    %c0_i32 = arith.constant 0 : i32
    %c0_i32_0 = arith.constant 0 : i32
    %c0_i32_1 = arith.constant 0 : i32
    return %arg0, %c0_i32, %c0_i32_0 : i32, i32, i32
  }
  func.func @transform_2(%arg0: i32) -> (i32, i32) {
    %c0_i32 = arith.constant 0 : i32
    %c0_i32_0 = arith.constant 0 : i32
    %c0_i32_1 = arith.constant 0 : i32
    return %c0_i32, %c0_i32_0 : i32, i32
  }
  func.func @transform_3(%arg0: i32) -> (i32, i32) {
    %c0_i32 = arith.constant 0 : i32
    %c0_i32_0 = arith.constant 0 : i32
    %c0_i32_1 = arith.constant 0 : i32
    return %c0_i32, %c0_i32_0 : i32, i32
  }
  func.func @transform_4(%arg0: i32) -> (i32, i32) {
    %c0_i32 = arith.constant 0 : i32
    %c0_i32_0 = arith.constant 0 : i32
    %c0_i32_1 = arith.constant 0 : i32
    return %c0_i32, %c0_i32_0 : i32, i32
  }
  func.func @transform_5(%arg0: i32) -> (i32, i32) {
    %c0_i32 = arith.constant 0 : i32
    %c0_i32_0 = arith.constant 0 : i32
    %c0_i32_1 = arith.constant 0 : i32
    return %c0_i32, %c0_i32_0 : i32, i32
  }
  func.func @transform_6(%arg0: i32) -> (i32, i32) {
    %c0_i32 = arith.constant 0 : i32
    %c0_i32_0 = arith.constant 0 : i32
    %c0_i32_1 = arith.constant 0 : i32
    return %c0_i32, %c0_i32_0 : i32, i32
  }
  func.func @transform_7(%arg0: i32) -> (i32, i32) {
    %c0_i32 = arith.constant 0 : i32
    %c0_i32_0 = arith.constant 0 : i32
    %c0_i32_1 = arith.constant 0 : i32
    return %c0_i32, %c0_i32_0 : i32, i32
  }
  func.func @transform_8(%arg0: i32) -> (i32, i32) {
    %c0_i32 = arith.constant 0 : i32
    %c0_i32_0 = arith.constant 0 : i32
    %c0_i32_1 = arith.constant 0 : i32
    return %c0_i32, %c0_i32_0 : i32, i32
  }
  func.func @transform_9(%arg0: i32) -> (i32, i32, i32) {
    %c0_i32 = arith.constant 0 : i32
    %c0_i32_0 = arith.constant 0 : i32
    %c0_i32_1 = arith.constant 0 : i32
    return %arg0, %c0_i32, %c0_i32_0 : i32, i32, i32
  }
}

module attributes {stable_mosaic.version = 11 : i64} {
  func.func @transtab_layer_kernel(%arg0: i32, %arg1: memref<1x8x32xf32, #tpu.memory_space<vmem>>, %arg2: memref<1x1x8xf32, #tpu.memory_space<vmem>>, %arg3: memref<32x96xbf16, #tpu.memory_space<vmem>>, %arg4: memref<1x96xf32, #tpu.memory_space<vmem>>, %arg5: memref<32x32xbf16, #tpu.memory_space<vmem>>, %arg6: memref<32x256xbf16, #tpu.memory_space<vmem>>, %arg7: memref<256x32xbf16, #tpu.memory_space<vmem>>, %arg8: memref<1x256xf32, #tpu.memory_space<vmem>>, %arg9: memref<6x32xf32, #tpu.memory_space<vmem>>, %arg10: memref<1x8x32xf32, #tpu.memory_space<vmem>>) attributes {dimension_semantics = [#tpu.dimension_semantics<parallel>], iteration_bounds = array<i64: 2>, scalar_prefetch = 0 : i64, scratch_operands = 0 : i64, tpu.core_type = #tpu.core_type<tc>, window_params = [{transform_indices = @transform_0, window_bounds = array<i64: 1, 8, 32>}, {transform_indices = @transform_1, window_bounds = array<i64: 1, 1, 8>}, {pipeline_mode = #tpu.pipeline_mode<synchronous>, transform_indices = @transform_2, window_bounds = array<i64: 32, 96>}, {pipeline_mode = #tpu.pipeline_mode<synchronous>, transform_indices = @transform_3, window_bounds = array<i64: 1, 96>}, {pipeline_mode = #tpu.pipeline_mode<synchronous>, transform_indices = @transform_4, window_bounds = array<i64: 32, 32>}, {pipeline_mode = #tpu.pipeline_mode<synchronous>, transform_indices = @transform_5, window_bounds = array<i64: 32, 256>}, {pipeline_mode = #tpu.pipeline_mode<synchronous>, transform_indices = @transform_6, window_bounds = array<i64: 256, 32>}, {pipeline_mode = #tpu.pipeline_mode<synchronous>, transform_indices = @transform_7, window_bounds = array<i64: 1, 256>}, {pipeline_mode = #tpu.pipeline_mode<synchronous>, transform_indices = @transform_8, window_bounds = array<i64: 6, 32>}, {transform_indices = @transform_9, window_bounds = array<i64: 1, 8, 32>}]} {
    %c0 = arith.constant 0 : index
    %c0_0 = arith.constant 0 : index
    %c0_1 = arith.constant 0 : index
    %0 = vector.load %arg1[%c0, %c0_0, %c0_1] : memref<1x8x32xf32, #tpu.memory_space<vmem>>, vector<1x8x32xf32>
    %1 = vector.shape_cast %0 : vector<1x8x32xf32> to vector<8x32xf32>
    %c0_2 = arith.constant 0 : index
    %c0_3 = arith.constant 0 : index
    %2 = vector.load %arg9[%c0_2, %c0_3] : memref<6x32xf32, #tpu.memory_space<vmem>>, vector<6x32xf32>
    %3 = vector.extract_strided_slice %2 {offsets = [0, 0], sizes = [1, 32], strides = [1, 1]} : vector<6x32xf32> to vector<1x32xf32>
    %4 = vector.extract_strided_slice %2 {offsets = [1, 0], sizes = [1, 32], strides = [1, 1]} : vector<6x32xf32> to vector<1x32xf32>
    %5 = vector.extract_strided_slice %2 {offsets = [2, 0], sizes = [1, 32], strides = [1, 1]} : vector<6x32xf32> to vector<1x32xf32>
    %6 = vector.extract_strided_slice %2 {offsets = [3, 0], sizes = [1, 32], strides = [1, 1]} : vector<6x32xf32> to vector<1x32xf32>
    %7 = vector.extract_strided_slice %2 {offsets = [4, 0], sizes = [1, 32], strides = [1, 1]} : vector<6x32xf32> to vector<1x32xf32>
    %8 = vector.extract_strided_slice %2 {offsets = [5, 0], sizes = [1, 32], strides = [1, 1]} : vector<6x32xf32> to vector<1x32xf32>
    %9 = arith.truncf %1 : vector<8x32xf32> to vector<8x32xbf16>
    %c0_4 = arith.constant 0 : index
    %c0_5 = arith.constant 0 : index
    %10 = vector.load %arg3[%c0_4, %c0_5] : memref<32x96xbf16, #tpu.memory_space<vmem>>, vector<32x96xbf16>
    %cst = arith.constant dense<0.000000e+00> : vector<8x96xf32>
    %11 = tpu.matmul %9, %10, %cst {dimension_numbers = #tpu.dot_dimension_numbers<[1], [0], [0], [1], [0, 0, 1, 1], [], []>} : vector<8x32xbf16>, vector<32x96xbf16>, vector<8x96xf32> -> vector<8x96xf32>
    %c0_6 = arith.constant 0 : index
    %c0_7 = arith.constant 0 : index
    %12 = vector.load %arg4[%c0_6, %c0_7] : memref<1x96xf32, #tpu.memory_space<vmem>>, vector<1x96xf32>
    %13 = vector.broadcast %12 : vector<1x96xf32> to vector<8x96xf32>
    %14 = arith.addf %11, %13 : vector<8x96xf32>
    %15 = vector.extract_strided_slice %14 {offsets = [0, 0], sizes = [8, 32], strides = [1, 1]} : vector<8x96xf32> to vector<8x32xf32>
    %16 = vector.shape_cast %15 : vector<8x32xf32> to vector<1x8x32xf32>
    %17 = vector.extract_strided_slice %14 {offsets = [0, 32], sizes = [8, 32], strides = [1, 1]} : vector<8x96xf32> to vector<8x32xf32>
    %18 = vector.shape_cast %17 : vector<8x32xf32> to vector<1x8x32xf32>
    %19 = vector.extract_strided_slice %14 {offsets = [0, 64], sizes = [8, 32], strides = [1, 1]} : vector<8x96xf32> to vector<8x32xf32>
    %20 = vector.shape_cast %19 : vector<8x32xf32> to vector<1x8x32xf32>
    %21 = vector.extract_strided_slice %16 {offsets = [0, 0, 0], sizes = [1, 8, 8], strides = [1, 1, 1]} : vector<1x8x32xf32> to vector<1x8x8xf32>
    %22 = vector.extract_strided_slice %16 {offsets = [0, 0, 8], sizes = [1, 8, 8], strides = [1, 1, 1]} : vector<1x8x32xf32> to vector<1x8x8xf32>
    %23 = vector.extract_strided_slice %16 {offsets = [0, 0, 16], sizes = [1, 8, 8], strides = [1, 1, 1]} : vector<1x8x32xf32> to vector<1x8x8xf32>
    %24 = vector.extract_strided_slice %16 {offsets = [0, 0, 24], sizes = [1, 8, 8], strides = [1, 1, 1]} : vector<1x8x32xf32> to vector<1x8x8xf32>
    %25 = tpu.concatenate %21, %22, %23, %24 in 0 : vector<1x8x8xf32>, vector<1x8x8xf32>, vector<1x8x8xf32>, vector<1x8x8xf32> -> vector<4x8x8xf32>
    %26 = arith.truncf %25 : vector<4x8x8xf32> to vector<4x8x8xbf16>
    %27 = vector.extract_strided_slice %18 {offsets = [0, 0, 0], sizes = [1, 8, 8], strides = [1, 1, 1]} : vector<1x8x32xf32> to vector<1x8x8xf32>
    %28 = vector.extract_strided_slice %18 {offsets = [0, 0, 8], sizes = [1, 8, 8], strides = [1, 1, 1]} : vector<1x8x32xf32> to vector<1x8x8xf32>
    %29 = vector.extract_strided_slice %18 {offsets = [0, 0, 16], sizes = [1, 8, 8], strides = [1, 1, 1]} : vector<1x8x32xf32> to vector<1x8x8xf32>
    %30 = vector.extract_strided_slice %18 {offsets = [0, 0, 24], sizes = [1, 8, 8], strides = [1, 1, 1]} : vector<1x8x32xf32> to vector<1x8x8xf32>
    %31 = tpu.concatenate %27, %28, %29, %30 in 0 : vector<1x8x8xf32>, vector<1x8x8xf32>, vector<1x8x8xf32>, vector<1x8x8xf32> -> vector<4x8x8xf32>
    %32 = arith.truncf %31 : vector<4x8x8xf32> to vector<4x8x8xbf16>
    %33 = vector.extract_strided_slice %20 {offsets = [0, 0, 0], sizes = [1, 8, 8], strides = [1, 1, 1]} : vector<1x8x32xf32> to vector<1x8x8xf32>
    %34 = vector.extract_strided_slice %20 {offsets = [0, 0, 8], sizes = [1, 8, 8], strides = [1, 1, 1]} : vector<1x8x32xf32> to vector<1x8x8xf32>
    %35 = vector.extract_strided_slice %20 {offsets = [0, 0, 16], sizes = [1, 8, 8], strides = [1, 1, 1]} : vector<1x8x32xf32> to vector<1x8x8xf32>
    %36 = vector.extract_strided_slice %20 {offsets = [0, 0, 24], sizes = [1, 8, 8], strides = [1, 1, 1]} : vector<1x8x32xf32> to vector<1x8x8xf32>
    %37 = tpu.concatenate %33, %34, %35, %36 in 0 : vector<1x8x8xf32>, vector<1x8x8xf32>, vector<1x8x8xf32>, vector<1x8x8xf32> -> vector<4x8x8xf32>
    %38 = arith.truncf %37 : vector<4x8x8xf32> to vector<4x8x8xbf16>
    %c0_8 = arith.constant 0 : index
    %c0_9 = arith.constant 0 : index
    %c0_10 = arith.constant 0 : index
    %39 = vector.load %arg2[%c0_8, %c0_9, %c0_10] : memref<1x1x8xf32, #tpu.memory_space<vmem>>, vector<1x1x8xf32>
    %cst_11 = arith.constant 5.000000e-01 : f32
    %40 = vector.broadcast %cst_11 : f32 to vector<1x1x8xf32>
    %41 = arith.cmpf ogt, %39, %40 : vector<1x1x8xf32>
    %cst_12 = arith.constant 0.000000e+00 : f32
    %cst_13 = arith.constant -1.000000e+30 : f32
    %42 = vector.broadcast %cst_12 : f32 to vector<1x1x8xf32>
    %43 = vector.broadcast %cst_13 : f32 to vector<1x1x8xf32>
    %44 = arith.select %41, %42, %43 : vector<1x1x8xi1>, vector<1x1x8xf32>
    %45 = tpu.concatenate %44, %44, %44, %44 in 0 : vector<1x1x8xf32>, vector<1x1x8xf32>, vector<1x1x8xf32>, vector<1x1x8xf32> -> vector<4x1x8xf32>
    "tpu.trace_start"() <{level = 10 : i32, message = "bqd,bkd->bqk"}> : () -> ()
    %cst_14 = arith.constant dense<0.000000e+00> : vector<4x8x8xf32>
    %46 = tpu.matmul %26, %32, %cst_14 {dimension_numbers = #tpu.dot_dimension_numbers<[2], [2], [1], [1], [0, 0, 0, 1, 1, 1], [0], [0]>} : vector<4x8x8xbf16>, vector<4x8x8xbf16>, vector<4x8x8xf32> -> vector<4x8x8xf32>
    "tpu.trace_stop"() : () -> ()
    %47 = vector.broadcast %45 : vector<4x1x8xf32> to vector<4x8x8xf32>
    %48 = arith.addf %46, %47 : vector<4x8x8xf32>
    %cst_15 = arith.constant dense<0xFF800000> : vector<4x8xf32>
    %49 = vector.multi_reduction <maximumf>, %48, %cst_15 [2] : vector<4x8x8xf32> to vector<4x8xf32>
    %50 = vector.shape_cast %49 : vector<4x8xf32> to vector<4x8x1xf32>
    %51 = vector.broadcast %50 : vector<4x8x1xf32> to vector<4x8x8xf32>
    %52 = arith.subf %48, %51 : vector<4x8x8xf32>
    %53 = math.exp %52 : vector<4x8x8xf32>
    %cst_16 = arith.constant dense<0.000000e+00> : vector<4x8xf32>
    %54 = vector.multi_reduction <add>, %53, %cst_16 [2] : vector<4x8x8xf32> to vector<4x8xf32>
    %55 = vector.shape_cast %54 : vector<4x8xf32> to vector<4x8x1xf32>
    %56 = tpu.reciprocal %55 {approx = true} : vector<4x8x1xf32> -> vector<4x8x1xf32>
    %57 = vector.broadcast %56 : vector<4x8x1xf32> to vector<4x8x8xf32>
    %58 = arith.mulf %53, %57 : vector<4x8x8xf32>
    %59 = arith.truncf %58 : vector<4x8x8xf32> to vector<4x8x8xbf16>
    "tpu.trace_start"() <{level = 10 : i32, message = "bqk,bkd->bqd"}> : () -> ()
    %cst_17 = arith.constant dense<0.000000e+00> : vector<4x8x8xf32>
    %60 = tpu.matmul %59, %38, %cst_17 {dimension_numbers = #tpu.dot_dimension_numbers<[2], [1], [1], [2], [0, 0, 0, 1, 1, 2], [0], [0]>} : vector<4x8x8xbf16>, vector<4x8x8xbf16>, vector<4x8x8xf32> -> vector<4x8x8xf32>
    "tpu.trace_stop"() : () -> ()
    %61 = vector.extract_strided_slice %60 {offsets = [0, 0, 0], sizes = [1, 8, 8], strides = [1, 1, 1]} : vector<4x8x8xf32> to vector<1x8x8xf32>
    %62 = vector.extract_strided_slice %60 {offsets = [1, 0, 0], sizes = [1, 8, 8], strides = [1, 1, 1]} : vector<4x8x8xf32> to vector<1x8x8xf32>
    %63 = vector.extract_strided_slice %60 {offsets = [2, 0, 0], sizes = [1, 8, 8], strides = [1, 1, 1]} : vector<4x8x8xf32> to vector<1x8x8xf32>
    %64 = vector.extract_strided_slice %60 {offsets = [3, 0, 0], sizes = [1, 8, 8], strides = [1, 1, 1]} : vector<4x8x8xf32> to vector<1x8x8xf32>
    %65 = tpu.concatenate %61, %62, %63, %64 in 2 : vector<1x8x8xf32>, vector<1x8x8xf32>, vector<1x8x8xf32>, vector<1x8x8xf32> -> vector<1x8x32xf32>
    %66 = vector.shape_cast %65 : vector<1x8x32xf32> to vector<8x32xf32>
    %67 = arith.truncf %66 : vector<8x32xf32> to vector<8x32xbf16>
    %c0_18 = arith.constant 0 : index
    %c0_19 = arith.constant 0 : index
    %68 = vector.load %arg5[%c0_18, %c0_19] : memref<32x32xbf16, #tpu.memory_space<vmem>>, vector<32x32xbf16>
    %cst_20 = arith.constant dense<0.000000e+00> : vector<8x32xf32>
    %69 = tpu.matmul %67, %68, %cst_20 {dimension_numbers = #tpu.dot_dimension_numbers<[1], [0], [0], [1], [0, 0, 1, 1], [], []>} : vector<8x32xbf16>, vector<32x32xbf16>, vector<8x32xf32> -> vector<8x32xf32>
    %70 = vector.broadcast %3 : vector<1x32xf32> to vector<8x32xf32>
    %71 = arith.addf %69, %70 : vector<8x32xf32>
    %72 = arith.addf %1, %71 : vector<8x32xf32>
    %cst_21 = arith.constant dense<0.000000e+00> : vector<8xf32>
    %73 = vector.multi_reduction <add>, %72, %cst_21 [1] : vector<8x32xf32> to vector<8xf32>
    %74 = vector.shape_cast %73 : vector<8xf32> to vector<8x1xf32>
    %cst_22 = arith.constant 3.200000e+01 : f32
    %75 = vector.broadcast %cst_22 : f32 to vector<8x1xf32>
    %76 = arith.divf %74, %75 : vector<8x1xf32>
    %77 = vector.broadcast %76 : vector<8x1xf32> to vector<8x32xf32>
    %78 = arith.subf %72, %77 : vector<8x32xf32>
    %79 = arith.mulf %78, %78 : vector<8x32xf32>
    %cst_23 = arith.constant dense<0.000000e+00> : vector<8xf32>
    %80 = vector.multi_reduction <add>, %79, %cst_23 [1] : vector<8x32xf32> to vector<8xf32>
    %81 = vector.shape_cast %80 : vector<8xf32> to vector<8x1xf32>
    %cst_24 = arith.constant 3.200000e+01 : f32
    %82 = vector.broadcast %cst_24 : f32 to vector<8x1xf32>
    %83 = arith.divf %81, %82 : vector<8x1xf32>
    %84 = vector.broadcast %76 : vector<8x1xf32> to vector<8x32xf32>
    %85 = arith.subf %72, %84 : vector<8x32xf32>
    %cst_25 = arith.constant 9.99999974E-6 : f32
    %86 = vector.broadcast %cst_25 : f32 to vector<8x1xf32>
    %87 = arith.addf %83, %86 : vector<8x1xf32>
    %88 = math.rsqrt %87 : vector<8x1xf32>
    %89 = vector.broadcast %88 : vector<8x1xf32> to vector<8x32xf32>
    %90 = arith.mulf %85, %89 : vector<8x32xf32>
    %91 = vector.broadcast %5 : vector<1x32xf32> to vector<8x32xf32>
    %92 = arith.mulf %90, %91 : vector<8x32xf32>
    %93 = vector.broadcast %6 : vector<1x32xf32> to vector<8x32xf32>
    %94 = arith.addf %92, %93 : vector<8x32xf32>
    %95 = arith.truncf %94 : vector<8x32xf32> to vector<8x32xbf16>
    %c0_26 = arith.constant 0 : index
    %c0_27 = arith.constant 0 : index
    %96 = vector.load %arg6[%c0_26, %c0_27] : memref<32x256xbf16, #tpu.memory_space<vmem>>, vector<32x256xbf16>
    %cst_28 = arith.constant dense<0.000000e+00> : vector<8x256xf32>
    %97 = tpu.matmul %95, %96, %cst_28 {dimension_numbers = #tpu.dot_dimension_numbers<[1], [0], [0], [1], [0, 0, 1, 1], [], []>} : vector<8x32xbf16>, vector<32x256xbf16>, vector<8x256xf32> -> vector<8x256xf32>
    %c0_29 = arith.constant 0 : index
    %c0_30 = arith.constant 0 : index
    %98 = vector.load %arg8[%c0_29, %c0_30] : memref<1x256xf32, #tpu.memory_space<vmem>>, vector<1x256xf32>
    %99 = vector.broadcast %98 : vector<1x256xf32> to vector<8x256xf32>
    %100 = arith.addf %97, %99 : vector<8x256xf32>
    %101 = vector.extract_strided_slice %100 {offsets = [0, 128], sizes = [8, 1], strides = [1, 1]} : vector<8x256xf32> to vector<8x1xf32>
    %102 = arith.negf %101 : vector<8x1xf32>
    %103 = math.exp %102 : vector<8x1xf32>
    %cst_31 = arith.constant 1.000000e+00 : f32
    %104 = vector.broadcast %cst_31 : f32 to vector<8x1xf32>
    %105 = arith.addf %104, %103 : vector<8x1xf32>
    %106 = arith.divf %104, %105 : vector<8x1xf32>
    %107 = vector.broadcast %106 : vector<8x1xf32> to vector<8x256xf32>
    %108 = arith.mulf %100, %107 : vector<8x256xf32>
    %cst_32 = arith.constant 0.000000e+00 : f32
    %109 = vector.broadcast %cst_32 : f32 to vector<8x256xf32>
    %110 = arith.maximumf %108, %109 : vector<8x256xf32>
    %111 = arith.truncf %110 : vector<8x256xf32> to vector<8x256xbf16>
    %c0_33 = arith.constant 0 : index
    %c0_34 = arith.constant 0 : index
    %112 = vector.load %arg7[%c0_33, %c0_34] : memref<256x32xbf16, #tpu.memory_space<vmem>>, vector<256x32xbf16>
    %cst_35 = arith.constant dense<0.000000e+00> : vector<8x32xf32>
    %113 = tpu.matmul %111, %112, %cst_35 {dimension_numbers = #tpu.dot_dimension_numbers<[1], [0], [0], [1], [0, 0, 1, 1], [], []>} : vector<8x256xbf16>, vector<256x32xbf16>, vector<8x32xf32> -> vector<8x32xf32>
    %114 = vector.broadcast %4 : vector<1x32xf32> to vector<8x32xf32>
    %115 = arith.addf %113, %114 : vector<8x32xf32>
    %116 = arith.addf %94, %115 : vector<8x32xf32>
    %cst_36 = arith.constant dense<0.000000e+00> : vector<8xf32>
    %117 = vector.multi_reduction <add>, %116, %cst_36 [1] : vector<8x32xf32> to vector<8xf32>
    %118 = vector.shape_cast %117 : vector<8xf32> to vector<8x1xf32>
    %cst_37 = arith.constant 3.200000e+01 : f32
    %119 = vector.broadcast %cst_37 : f32 to vector<8x1xf32>
    %120 = arith.divf %118, %119 : vector<8x1xf32>
    %121 = vector.broadcast %120 : vector<8x1xf32> to vector<8x32xf32>
    %122 = arith.subf %116, %121 : vector<8x32xf32>
    %123 = arith.mulf %122, %122 : vector<8x32xf32>
    %cst_38 = arith.constant dense<0.000000e+00> : vector<8xf32>
    %124 = vector.multi_reduction <add>, %123, %cst_38 [1] : vector<8x32xf32> to vector<8xf32>
    %125 = vector.shape_cast %124 : vector<8xf32> to vector<8x1xf32>
    %cst_39 = arith.constant 3.200000e+01 : f32
    %126 = vector.broadcast %cst_39 : f32 to vector<8x1xf32>
    %127 = arith.divf %125, %126 : vector<8x1xf32>
    %128 = vector.broadcast %120 : vector<8x1xf32> to vector<8x32xf32>
    %129 = arith.subf %116, %128 : vector<8x32xf32>
    %cst_40 = arith.constant 9.99999974E-6 : f32
    %130 = vector.broadcast %cst_40 : f32 to vector<8x1xf32>
    %131 = arith.addf %127, %130 : vector<8x1xf32>
    %132 = math.rsqrt %131 : vector<8x1xf32>
    %133 = vector.broadcast %132 : vector<8x1xf32> to vector<8x32xf32>
    %134 = arith.mulf %129, %133 : vector<8x32xf32>
    %135 = vector.broadcast %7 : vector<1x32xf32> to vector<8x32xf32>
    %136 = arith.mulf %134, %135 : vector<8x32xf32>
    %137 = vector.broadcast %8 : vector<1x32xf32> to vector<8x32xf32>
    %138 = arith.addf %136, %137 : vector<8x32xf32>
    %139 = vector.shape_cast %138 : vector<8x32xf32> to vector<1x8x32xf32>
    %c0_41 = arith.constant 0 : index
    %c0_42 = arith.constant 0 : index
    %c0_43 = arith.constant 0 : index
    %140 = vector.load %arg10[%c0_41, %c0_42, %c0_43] : memref<1x8x32xf32, #tpu.memory_space<vmem>>, vector<1x8x32xf32>
    tpu.vector_store %arg10[%c0_41, %c0_42, %c0_43], %139 {strides = array<i32>} : memref<1x8x32xf32, #tpu.memory_space<vmem>>, vector<1x8x32xf32>,
    return
  }
  func.func @transform_0(%arg0: i32) -> (i32, i32, i32) {
    %c0_i32 = arith.constant 0 : i32
    %c0_i32_0 = arith.constant 0 : i32
    %c0_i32_1 = arith.constant 0 : i32
    return %arg0, %c0_i32, %c0_i32_0 : i32, i32, i32
  }
  func.func @transform_1(%arg0: i32) -> (i32, i32, i32) {
    %c0_i32 = arith.constant 0 : i32
    %c0_i32_0 = arith.constant 0 : i32
    %c0_i32_1 = arith.constant 0 : i32
    return %arg0, %c0_i32, %c0_i32_0 : i32, i32, i32
  }
  func.func @transform_2(%arg0: i32) -> (i32, i32) {
    %c0_i32 = arith.constant 0 : i32
    %c0_i32_0 = arith.constant 0 : i32
    %c0_i32_1 = arith.constant 0 : i32
    return %c0_i32, %c0_i32_0 : i32, i32
  }
  func.func @transform_3(%arg0: i32) -> (i32, i32) {
    %c0_i32 = arith.constant 0 : i32
    %c0_i32_0 = arith.constant 0 : i32
    %c0_i32_1 = arith.constant 0 : i32
    return %c0_i32, %c0_i32_0 : i32, i32
  }
  func.func @transform_4(%arg0: i32) -> (i32, i32) {
    %c0_i32 = arith.constant 0 : i32
    %c0_i32_0 = arith.constant 0 : i32
    %c0_i32_1 = arith.constant 0 : i32
    return %c0_i32, %c0_i32_0 : i32, i32
  }
  func.func @transform_5(%arg0: i32) -> (i32, i32) {
    %c0_i32 = arith.constant 0 : i32
    %c0_i32_0 = arith.constant 0 : i32
    %c0_i32_1 = arith.constant 0 : i32
    return %c0_i32, %c0_i32_0 : i32, i32
  }
  func.func @transform_6(%arg0: i32) -> (i32, i32) {
    %c0_i32 = arith.constant 0 : i32
    %c0_i32_0 = arith.constant 0 : i32
    %c0_i32_1 = arith.constant 0 : i32
    return %c0_i32, %c0_i32_0 : i32, i32
  }
  func.func @transform_7(%arg0: i32) -> (i32, i32) {
    %c0_i32 = arith.constant 0 : i32
    %c0_i32_0 = arith.constant 0 : i32
    %c0_i32_1 = arith.constant 0 : i32
    return %c0_i32, %c0_i32_0 : i32, i32
  }
  func.func @transform_8(%arg0: i32) -> (i32, i32) {
    %c0_i32 = arith.constant 0 : i32
    %c0_i32_0 = arith.constant 0 : i32
    %c0_i32_1 = arith.constant 0 : i32
    return %c0_i32, %c0_i32_0 : i32, i32
  }
  func.func @transform_9(%arg0: i32) -> (i32, i32, i32) {
    %c0_i32 = arith.constant 0 : i32
    %c0_i32_0 = arith.constant 0 : i32
    %c0_i32_1 = arith.constant 0 : i32
    return %arg0, %c0_i32, %c0_i32_0 : i32, i32, i32
  }
}

</mosaic_0001>

<llo_original>
// kernel: tpu_custom_call.1
$region0: #{tpu_custom_call.1}
  #allocation0 [shape = 'u32[]', space=smem, size = 0x4, offset = 0x4, fixed_abs, tag = 'smem constant byte address 0x4 - core index']
  #allocation1 [shape = 'u32[144,128]{1,0:T(1,128)}', space=vmem, size = 0x12000, scoped, tag = 'internal scratch']
  %s0 = inlined_call_operand.vmem [shape: f32[2,8,32], index: 0, kind: input, shape index: {}]
  %s1 = inlined_call_operand.vmem [shape: f32[2,1,8], index: 1, kind: input, shape index: {}]
  %s2 = inlined_call_operand.vmem [shape: bf16[32,96], index: 2, kind: input, shape index: {}]
  %s3 = inlined_call_operand.vmem [shape: f32[1,96], index: 3, kind: input, shape index: {}]
  %s4 = inlined_call_operand.vmem [shape: bf16[32,32], index: 4, kind: input, shape index: {}]
  %s5 = inlined_call_operand.vmem [shape: bf16[32,256], index: 5, kind: input, shape index: {}]
  %s6 = inlined_call_operand.vmem [shape: bf16[256,32], index: 6, kind: input, shape index: {}]
  %s7 = inlined_call_operand.vmem [shape: f32[1,256], index: 7, kind: input, shape index: {}]
  %s8 = inlined_call_operand.vmem [shape: f32[6,32], index: 8, kind: input, shape index: {}]
  %s9 = inlined_call_operand.hbm [shape: f32[2,8,32], index: 9, kind: output, shape index: {}]
  %s10 = sld [smem:[#allocation0]]
  $region69: #{tpu_custom_call.1} parent=0
    _
  %s12 = ssub.s32 1, %s10
  %s13 = scalar_select 0, %s12, %s10
  $region1: #{tpu_custom_call.1} parent=0
    #allocation2 [shape = 'u8[8192]{0}', space=vmem, size = 0x2000, scoped, tag = 'output window, operand 0']
    #allocation3 [shape = 's32[2]{0}', space=sflag, size = 0x8, scoped, tag = 'scoped memory for tpu_custom_call.1']
    %14 = vsyncpa [#allocation3], 0
    %s15 = scalar_lea.sflag [#allocation3], 1
    %16 = vsyncpa %s15, 0
    loop: start=0, step=1, limit=4
    $region2: #{tpu_custom_call.1} parent=1 // loop_pre_header
      _
    $region3: #{tpu_custom_call.1} parent=1 // loop_header
      %s18 = sphi 0, %s22
      %p19 = scmp.ge.s32.totalorder %s18, 4
      %s28 = sphi 0, %s30
      %s31 = sphi 0, %s28
      %s32 = sphi 0, %s31
      %s48 = sphi 0, %s32
      %s54 = sphi 0, %s56
      %s57 = sphi 0, %s54
      %s58 = sphi 0, %s57
      %s74 = sphi 0, %s58
      %s78 = sphi 0, %s78
      %s80 = sphi 0, %s78
      %s81 = sphi 0, %s80
      %s95 = sphi 0, %s81
      %s99 = sphi 0, %s99
      %s101 = sphi 0, %s99
      %s102 = sphi 0, %s101
      %s116 = sphi 0, %s102
      %s120 = sphi 0, %s120
      %s122 = sphi 0, %s120
      %s123 = sphi 0, %s122
      %s137 = sphi 0, %s123
      %s141 = sphi 0, %s141
      %s143 = sphi 0, %s141
      %s144 = sphi 0, %s143
      %s158 = sphi 0, %s144
      %s162 = sphi 0, %s162
      %s164 = sphi 0, %s162
      %s165 = sphi 0, %s164
      %s179 = sphi 0, %s165
      %s183 = sphi 0, %s183
      %s185 = sphi 0, %s183
      %s186 = sphi 0, %s185
      %s200 = sphi 0, %s186
      %s204 = sphi 0, %s204
      %s206 = sphi 0, %s204
      %s207 = sphi 0, %s206
      %s221 = sphi 0, %s207
      %s227 = sphi 0, %s229
      %s230 = sphi 0, %s227
      %s231 = sphi 0, %s230
      %s247 = sphi 0, %s231
    $region4: #{tpu_custom_call.1} parent=1 // loop_header_branch
      %21 = sbr.rel (%p19) target = $region8
    $region5: #{tpu_custom_call.1} parent=1 // loop_body
      %s23 = ssub.s32 %s18, 1
      %s24 = ssub.s32 %s18, 2
      %s25 = sadd.s32 %s18, 1
      %s26 = ssub.s32 %s18, %s25
      %p27 = scmp.eq.s32.totalorder %s26, 0
      %s29 = sadd.s32 %s28, 1
      %s30 = scalar_select %p27, %s28, %s29
      %p33 = pneg %p27
      %p34 = scmp.eq.s32.totalorder %s18, 1
      %p35 = por %p33, %p34
      %p36 = scmp.ne.s32.totalorder %s28, %s31
      %p37 = scmp.eq.s32.totalorder %s18, 0
      %p38 = por %p36, %p37
      %p39 = scmp.ne.s32.totalorder %s28, %s31
      %p40 = scmp.eq.s32.totalorder %s23, 1
      %p41 = por %p39, %p40
      %p42 = scmp.ne.s32.totalorder %s31, %s32
      %p43 = scmp.eq.s32.totalorder %s23, 0
      %p44 = por %p42, %p43
      %p45 = scmp.ne.s32.totalorder %s31, %s32
      %p46 = scmp.eq.s32.totalorder %s24, 1
      %p47 = por %p45, %p46
      %p49 = scmp.ne.s32.totalorder %s32, %s48
      %p50 = scmp.eq.s32.totalorder %s24, 0
      %p51 = por %p49, %p50
      %s52 = ssub.s32 %s18, %s25
      %p53 = scmp.eq.s32.totalorder %s52, 0
      %s55 = sadd.s32 %s54, 1
      %s56 = scalar_select %p53, %s54, %s55
      %p59 = pneg %p53
      %p60 = scmp.eq.s32.totalorder %s18, 1
      %p61 = por %p59, %p60
      %p62 = scmp.ne.s32.totalorder %s54, %s57
      %p63 = scmp.eq.s32.totalorder %s18, 0
      %p64 = por %p62, %p63
      %p65 = scmp.ne.s32.totalorder %s54, %s57
      %p66 = scmp.eq.s32.totalorder %s23, 1
      %p67 = por %p65, %p66
      %p68 = scmp.ne.s32.totalorder %s57, %s58
      %p69 = scmp.eq.s32.totalorder %s23, 0
      %p70 = por %p68, %p69
      %p71 = scmp.ne.s32.totalorder %s57, %s58
      %p72 = scmp.eq.s32.totalorder %s24, 1
      %p73 = por %p71, %p72
      %p75 = scmp.ne.s32.totalorder %s58, %s74
      %p76 = scmp.eq.s32.totalorder %s24, 0
      %p77 = por %p75, %p76
      %s79 = sadd.s32 %s78, 1
      %p82 = scmp.eq.s32.totalorder %s18, 1
      %p83 = scmp.ne.s32.totalorder %s78, %s80
      %p84 = scmp.eq.s32.totalorder %s18, 0
      %p85 = por %p83, %p84
      %p86 = scmp.ne.s32.totalorder %s78, %s80
      %p87 = scmp.eq.s32.totalorder %s23, 1
      %p88 = por %p86, %p87
      %p89 = scmp.ne.s32.totalorder %s80, %s81
      %p90 = scmp.eq.s32.totalorder %s23, 0
      %p91 = por %p89, %p90
      %p92 = scmp.ne.s32.totalorder %s80, %s81
      %p93 = scmp.eq.s32.totalorder %s24, 1
      %p94 = por %p92, %p93
      %p96 = scmp.ne.s32.totalorder %s81, %s95
      %p97 = scmp.eq.s32.totalorder %s24, 0
      %p98 = por %p96, %p97
      %s100 = sadd.s32 %s99, 1
      %p103 = scmp.eq.s32.totalorder %s18, 1
      %p104 = scmp.ne.s32.totalorder %s99, %s101
      %p105 = scmp.eq.s32.totalorder %s18, 0
      %p106 = por %p104, %p105
      %p107 = scmp.ne.s32.totalorder %s99, %s101
      %p108 = scmp.eq.s32.totalorder %s23, 1
      %p109 = por %p107, %p108
      %p110 = scmp.ne.s32.totalorder %s101, %s102
      %p111 = scmp.eq.s32.totalorder %s23, 0
      %p112 = por %p110, %p111
      %p113 = scmp.ne.s32.totalorder %s101, %s102
      %p114 = scmp.eq.s32.totalorder %s24, 1
      %p115 = por %p113, %p114
      %p117 = scmp.ne.s32.totalorder %s102, %s116
      %p118 = scmp.eq.s32.totalorder %s24, 0
      %p119 = por %p117, %p118
      %s121 = sadd.s32 %s120, 1
      %p124 = scmp.eq.s32.totalorder %s18, 1
      %p125 = scmp.ne.s32.totalorder %s120, %s122
      %p126 = scmp.eq.s32.totalorder %s18, 0
      %p127 = por %p125, %p126
      %p128 = scmp.ne.s32.totalorder %s120, %s122
      %p129 = scmp.eq.s32.totalorder %s23, 1
      %p130 = por %p128, %p129
      %p131 = scmp.ne.s32.totalorder %s122, %s123
      %p132 = scmp.eq.s32.totalorder %s23, 0
      %p133 = por %p131, %p132
      %p134 = scmp.ne.s32.totalorder %s122, %s123
      %p135 = scmp.eq.s32.totalorder %s24, 1
      %p136 = por %p134, %p135
      %p138 = scmp.ne.s32.totalorder %s123, %s137
      %p139 = scmp.eq.s32.totalorder %s24, 0
      %p140 = por %p138, %p139
      %s142 = sadd.s32 %s141, 1
      %p145 = scmp.eq.s32.totalorder %s18, 1
      %p146 = scmp.ne.s32.totalorder %s141, %s143
      %p147 = scmp.eq.s32.totalorder %s18, 0
      %p148 = por %p146, %p147
      %p149 = scmp.ne.s32.totalorder %s141, %s143
      %p150 = scmp.eq.s32.totalorder %s23, 1
      %p151 = por %p149, %p150
      %p152 = scmp.ne.s32.totalorder %s143, %s144
      %p153 = scmp.eq.s32.totalorder %s23, 0
      %p154 = por %p152, %p153
      %p155 = scmp.ne.s32.totalorder %s143, %s144
      %p156 = scmp.eq.s32.totalorder %s24, 1
      %p157 = por %p155, %p156
      %p159 = scmp.ne.s32.totalorder %s144, %s158
      %p160 = scmp.eq.s32.totalorder %s24, 0
      %p161 = por %p159, %p160
      %s163 = sadd.s32 %s162, 1
      %p166 = scmp.eq.s32.totalorder %s18, 1
      %p167 = scmp.ne.s32.totalorder %s162, %s164
      %p168 = scmp.eq.s32.totalorder %s18, 0
      %p169 = por %p167, %p168
      %p170 = scmp.ne.s32.totalorder %s162, %s164
      %p171 = scmp.eq.s32.totalorder %s23, 1
      %p172 = por %p170, %p171
      %p173 = scmp.ne.s32.totalorder %s164, %s165
      %p174 = scmp.eq.s32.totalorder %s23, 0
      %p175 = por %p173, %p174
      %p176 = scmp.ne.s32.totalorder %s164, %s165
      %p177 = scmp.eq.s32.totalorder %s24, 1
      %p178 = por %p176, %p177
      %p180 = scmp.ne.s32.totalorder %s165, %s179
      %p181 = scmp.eq.s32.totalorder %s24, 0
      %p182 = por %p180, %p181
      %s184 = sadd.s32 %s183, 1
      %p187 = scmp.eq.s32.totalorder %s18, 1
      %p188 = scmp.ne.s32.totalorder %s183, %s185
      %p189 = scmp.eq.s32.totalorder %s18, 0
      %p190 = por %p188, %p189
      %p191 = scmp.ne.s32.totalorder %s183, %s185
      %p192 = scmp.eq.s32.totalorder %s23, 1
      %p193 = por %p191, %p192
      %p194 = scmp.ne.s32.totalorder %s185, %s186
      %p195 = scmp.eq.s32.totalorder %s23, 0
      %p196 = por %p194, %p195
      %p197 = scmp.ne.s32.totalorder %s185, %s186
      %p198 = scmp.eq.s32.totalorder %s24, 1
      %p199 = por %p197, %p198
      %p201 = scmp.ne.s32.totalorder %s186, %s200
      %p202 = scmp.eq.s32.totalorder %s24, 0
      %p203 = por %p201, %p202
      %s205 = sadd.s32 %s204, 1
      %p208 = scmp.eq.s32.totalorder %s18, 1
      %p209 = scmp.ne.s32.totalorder %s204, %s206
      %p210 = scmp.eq.s32.totalorder %s18, 0
      %p211 = por %p209, %p210
      %p212 = scmp.ne.s32.totalorder %s204, %s206
      %p213 = scmp.eq.s32.totalorder %s23, 1
      %p214 = por %p212, %p213
      %p215 = scmp.ne.s32.totalorder %s206, %s207
      %p216 = scmp.eq.s32.totalorder %s23, 0
      %p217 = por %p215, %p216
      %p218 = scmp.ne.s32.totalorder %s206, %s207
      %p219 = scmp.eq.s32.totalorder %s24, 1
      %p220 = por %p218, %p219
      %p222 = scmp.ne.s32.totalorder %s207, %s221
      %p223 = scmp.eq.s32.totalorder %s24, 0
      %p224 = por %p222, %p223
      %s225 = ssub.s32 %s18, %s25
      %p226 = scmp.eq.s32.totalorder %s225, 0
      %s228 = sadd.s32 %s227, 1
      %s229 = scalar_select %p226, %s227, %s228
      %p232 = pneg %p226
      %p233 = scmp.eq.s32.totalorder %s18, 1
      %p234 = por %p232, %p233
      %p235 = scmp.ne.s32.totalorder %s227, %s230
      %p236 = scmp.eq.s32.totalorder %s18, 0
      %p237 = por %p235, %p236
      %p238 = scmp.ne.s32.totalorder %s227, %s230
      %p239 = scmp.eq.s32.totalorder %s23, 1
      %p240 = por %p238, %p239
      %p241 = scmp.ne.s32.totalorder %s230, %s231
      %p242 = scmp.eq.s32.totalorder %s23, 0
      %p243 = por %p241, %p242
      %p244 = scmp.ne.s32.totalorder %s230, %s231
      %p245 = scmp.eq.s32.totalorder %s24, 1
      %p246 = por %p244, %p245
      %p248 = scmp.ne.s32.totalorder %s231, %s247
      %p249 = scmp.eq.s32.totalorder %s24, 0
      %p250 = por %p248, %p249
      %p251 = scmp.le.s32.totalorder 1, %s18
      %p252 = scmp.lt.s32.totalorder %s18, 3
      %p253 = pnand %p251, %p252
      %p254 = pneg %p253
      // Predicated region
      $region9: #{tpu_custom_call.1} parent=5 // pred_check
        _
      $region10: #{tpu_custom_call.1} parent=5 // pred_check_branch
        %256 = sbr.rel (%p253) target = $region12
      $region11: #{tpu_custom_call.1} parent=5 // pred_region
        %s257 = ssub.s32 %s18, 1
        // Predicated region
        $region13: #{tpu_custom_call.1} parent=11 // pred_check
          %p258 = pneg %p91
        $region14: #{tpu_custom_call.1} parent=11 // pred_check_branch
          %260 = sbr.rel (%p258) target = $region16
        $region15: #{tpu_custom_call.1} parent=11 // pred_region
          _
        $region16: #{tpu_custom_call.1} parent=11 // pred_fallthru
          _
        // Predicated region
        $region17: #{tpu_custom_call.1} parent=11 // pred_check
          %p261 = pneg %p112
        $region18: #{tpu_custom_call.1} parent=11 // pred_check_branch
          %263 = sbr.rel (%p261) target = $region20
        $region19: #{tpu_custom_call.1} parent=11 // pred_region
          _
        $region20: #{tpu_custom_call.1} parent=11 // pred_fallthru
          _
        // Predicated region
        $region21: #{tpu_custom_call.1} parent=11 // pred_check
          %p264 = pneg %p133
        $region22: #{tpu_custom_call.1} parent=11 // pred_check_branch
          %266 = sbr.rel (%p264) target = $region24
        $region23: #{tpu_custom_call.1} parent=11 // pred_region
          _
        $region24: #{tpu_custom_call.1} parent=11 // pred_fallthru
          _
        // Predicated region
        $region25: #{tpu_custom_call.1} parent=11 // pred_check
          %p267 = pneg %p154
        $region26: #{tpu_custom_call.1} parent=11 // pred_check_branch
          %269 = sbr.rel (%p267) target = $region28
        $region27: #{tpu_custom_call.1} parent=11 // pred_region
          _
        $region28: #{tpu_custom_call.1} parent=11 // pred_fallthru
          _
        // Predicated region
        $region29: #{tpu_custom_call.1} parent=11 // pred_check
          %p270 = pneg %p175
        $region30: #{tpu_custom_call.1} parent=11 // pred_check_branch
          %272 = sbr.rel (%p270) target = $region32
        $region31: #{tpu_custom_call.1} parent=11 // pred_region
          _
        $region32: #{tpu_custom_call.1} parent=11 // pred_fallthru
          _
        // Predicated region
        $region33: #{tpu_custom_call.1} parent=11 // pred_check
          %p273 = pneg %p196
        $region34: #{tpu_custom_call.1} parent=11 // pred_check_branch
          %275 = sbr.rel (%p273) target = $region36
        $region35: #{tpu_custom_call.1} parent=11 // pred_region
          _
        $region36: #{tpu_custom_call.1} parent=11 // pred_fallthru
          _
        // Predicated region
        $region37: #{tpu_custom_call.1} parent=11 // pred_check
          %p276 = pneg %p217
        $region38: #{tpu_custom_call.1} parent=11 // pred_check_branch
          %278 = sbr.rel (%p276) target = $region40
        $region39: #{tpu_custom_call.1} parent=11 // pred_region
          _
        $region40: #{tpu_custom_call.1} parent=11 // pred_fallthru
          _
      $region12: #{tpu_custom_call.1} parent=5 // pred_fallthru
        _
      %p279 = scmp.lt.s32.totalorder %s18, 2
      // Predicated region
      $region41: #{tpu_custom_call.1} parent=5 // pred_check
        %p280 = pneg %p279
      $region42: #{tpu_custom_call.1} parent=5 // pred_check_branch
        %282 = sbr.rel (%p280) target = $region44
      $region43: #{tpu_custom_call.1} parent=5 // pred_region
        // Predicated region
        $region45: #{tpu_custom_call.1} parent=43 // pred_check
          %p283 = pneg %p38
        $region46: #{tpu_custom_call.1} parent=43 // pred_check_branch
          %285 = sbr.rel (%p283) target = $region48
        $region47: #{tpu_custom_call.1} parent=43 // pred_region
          %p286 = scmp.lt.s32.totalorder %s18, 1
          %s287 = scalar_select %p286, %s18, 1
          %s288 = smul.addr %s287, 8
          %s289 = scalar_lea.vmem %s0, %s288
        $region48: #{tpu_custom_call.1} parent=43 // pred_fallthru
          _
        // Predicated region
        $region49: #{tpu_custom_call.1} parent=43 // pred_check
          %p290 = pneg %p64
        $region50: #{tpu_custom_call.1} parent=43 // pred_check_branch
          %292 = sbr.rel (%p290) target = $region52
        $region51: #{tpu_custom_call.1} parent=43 // pred_region
          %p293 = scmp.lt.s32.totalorder %s18, 1
          %s294 = scalar_select %p293, %s18, 1
          %s295 = scalar_lea.vmem %s1, %s294
        $region52: #{tpu_custom_call.1} parent=43 // pred_fallthru
          _
      $region44: #{tpu_custom_call.1} parent=5 // pred_fallthru
        _
      %p296 = scmp.le.s32.totalorder 1, %s18
      %p297 = scmp.lt.s32.totalorder %s18, 3
      %p298 = pnand %p296, %p297
      %p299 = pneg %p298
      // Predicated region
      $region53: #{tpu_custom_call.1} parent=5 // pred_check
        _
      $region54: #{tpu_custom_call.1} parent=5 // pred_check_branch
        %301 = sbr.rel (%p298) target = $region56
      $region55: #{tpu_custom_call.1} parent=5 // pred_region
        %s302 = ssub.s32 %s18, 1
        %p303 = scmp.lt.s32.totalorder %s23, 1
        %s304 = scalar_select %p303, %s23, 1
        %s305 = smul.addr %s304, 8
        %s306 = scalar_lea.vmem %s0, %s305
        %p307 = pneg %p44
        %p308 = pneg %p41
        %p309 = scmp.lt.s32.totalorder %s23, 1
        %s310 = scalar_select %p309, %s23, 1
        %s311 = scalar_lea.vmem %s1, %s310
        %p312 = pneg %p70
        %p313 = pneg %p67
        %p314 = pneg %p91
        %p315 = pneg %p88
        %p316 = pneg %p112
        %p317 = pneg %p109
        %p318 = pneg %p133
        %p319 = pneg %p130
        %p320 = pneg %p154
        %p321 = pneg %p151
        %p322 = pneg %p175
        %p323 = pneg %p172
        %p324 = pneg %p196
        %p325 = pneg %p193
        %p326 = pneg %p217
        %p327 = pneg %p214
        %p328 = pneg %p243
        %p329 = pneg %p240
        %s330 = sand.u32 %s230, 1
        %s331 = scalar_lea.sflag [#allocation3], %s330
        %s332 = sand.u32 %s230, 1
        %s333 = smul.addr %s332, 8
        %s334 = scalar_lea.vmem [#allocation2], %s333
        %p335 = scmp.lt.s32.totalorder %s23, 1
        %s336 = scalar_select %p335, %s23, 1
        %s337 = smul.addr %s336, 8
        %s338 = scalar_lea.vmem %s0, %s337
        %p339 = scmp.lt.s32.totalorder %s23, 1
        %s340 = scalar_select %p339, %s23, 1
        %s341 = scalar_lea.vmem %s1, %s340
        %v343 = vld [vmem:[%s338] sm:$0xff]
        %v344 = vld [vmem:[%s8] sm:$0x3f]
        %v345 = vpack.c.bf16 %v343, %v343
        %v346 = vld [vmem:[%s2] sm:$0xf]
        %v347 = vld [vmem:[%s2 + $0x4] sm:$0xf]
        %v348 = vld [vmem:[%s2 + $0x8] sm:$0xf]
        %v349 = vld [vmem:[%s2 + $0xc] sm:$0xf]
        %v350 = vld [vmem:[%s3] sm:$0x1]
        %v352 = vlaneseq
        %v353 = vshrl.u32 %v352, 7
        %v354 = vsub.s32 0, %v353
        %v355 = vrot.slane %v350, %v354
        %v361 = vunpack.c.l.b16 %v346
        %v362 = vunpack.c.l.b16 %v347
        %v363 = vunpack.c.l.b16 %v348
        %v364 = vunpack.c.l.b16 %v349
        %v365 = vpack.c.b16 %v362, %v361
        %v366 = vpack.c.b16 %v364, %v363
        %vm369 = vcmask 261120
        %v371 = vsel %vm369, %v345, 0
        %373 = vmatprep.subr.bf16.mxu0 0
        %374 = vmatpush1.bf16.msra.mxu0 %v365
        %375 = vmatprep.subr.bf16.mxu0 0
        %376 = vmatpush1.bf16.msra.mxu0 %v366
        %377 = vmatprep.subr.bf16.mxu0 0
        %378 = vmatpush1.bf16.msra.mxu0 0
        %379 = vmatprep.subr.bf16.mxu0 0
        %380 = vmatpush1.bf16.msra.mxu0 0
        %381 = vmatprep.subr.bf16.mxu0 0
        %382 = vmatpush1.bf16.msra.mxu0 0
        %383 = vmatprep.subr.bf16.mxu0 0
        %384 = vmatpush1.bf16.msra.mxu0 0
        %385 = vmatprep.subr.bf16.mxu0 0
        %386 = vmatpush1.bf16.msra.mxu0 0
        %387 = vmatprep.subr.bf16.mxu0 0
        %388 = vmatpush1.bf16.msra.mxu0 0
        %389 = vmatprep.subr.bf16.mxu0 0
        %390 = vmatpush1.bf16.msra.mxu0 0
        %391 = vmatprep.subr.bf16.mxu0 0
        %392 = vmatpush1.bf16.msra.mxu0 0
        %393 = vmatprep.subr.bf16.mxu0 0
        %394 = vmatpush1.bf16.msra.mxu0 0
        %395 = vmatprep.subr.bf16.mxu0 0
        %396 = vmatpush1.bf16.msra.mxu0 0
        %397 = vmatprep.subr.bf16.mxu0 0
        %398 = vmatpush1.bf16.msra.mxu0 0
        %399 = vmatprep.subr.bf16.mxu0 0
        %400 = vmatpush1.bf16.msra.mxu0 0
        %401 = vmatprep.subr.bf16.mxu0 0
        %402 = vmatpush1.bf16.msra.mxu0 0
        %403 = vmatprep.subr.bf16.mxu0 0
        %404 = vmatpush1.bf16.msra.mxu0 0
        %405 = vmatprep.mubr.bf16.mxu0 0
        %406 = vmatmul.mubr.bf16.gmra.mrb[0].mxu0 %v371
        %v407 = vpop.f32.mrb[0].mxu0
        %v408 = vadd.f32 %v355, %v407
        %v409 = vpop.f32.mrb[0].mxu0
        %v410 = vpop.f32.mrb[0].mxu0
        %v411 = vpop.f32.mrb[0].mxu0
        %412 = vdwg.mxu0
        %414 = vrot.lane.b32.xlu0 %v408, 120
        %v415 = vpop.permute.xlu0 %414
        %417 = vrot.lane.b32.xlu0 %v408, 112
        %v418 = vpop.permute.xlu0 %417
        %420 = vrot.lane.b32.xlu0 %v408, 104
        %v421 = vpop.permute.xlu0 %420
        %v423 = vpack.c.bf16 %v408, %v408
        %v424 = vpack.c.bf16 %v415, %v415
        %v425 = vpack.c.bf16 %v418, %v418
        %v426 = vpack.c.bf16 %v421, %v421
        %v427 = vld [vmem:[%s341] sm:$0x1]
        %vm428 = vcmp.gt.f32.partialorder %v427, 0.5
        %v429 = vsel %vm428, 0.0, -1e+30
        %v431 = vlaneseq
        %v432 = vshrl.u32 %v431, 7
        %v433 = vsub.s32 0, %v432
        %v434 = vrot.slane %v429, %v433
        %437 = vrot.lane.b32.xlu0 %v423, 96
        %v438 = vpop.permute.xlu0 %437
        %vm439 = vcmask 64512
        %v441 = vsel %vm439, %v423, 0
        %v444 = vsel %vm439, %v438, 0
        %446 = vmatprep.subr.bf16.mxu0 0
        %447 = vmatpush1.bf16.xpose.msra.mxu0 %v444
        %448 = vmatprep.subr.bf16.mxu0 0
        %449 = vmatpush1.bf16.xpose.msra.mxu0 0
        %450 = vmatprep.subr.bf16.mxu0 0
        %451 = vmatpush1.bf16.xpose.msra.mxu0 0
        %452 = vmatprep.subr.bf16.mxu0 0
        %453 = vmatpush1.bf16.xpose.msra.mxu0 0
        %454 = vmatprep.subr.bf16.mxu0 0
        %455 = vmatpush1.bf16.xpose.msra.mxu0 0
        %456 = vmatprep.subr.bf16.mxu0 0
        %457 = vmatpush1.bf16.xpose.msra.mxu0 0
        %458 = vmatprep.subr.bf16.mxu0 0
        %459 = vmatpush1.bf16.xpose.msra.mxu0 0
        %460 = vmatprep.subr.bf16.mxu0 0
        %461 = vmatpush1.bf16.xpose.msra.mxu0 0
        %462 = vmatprep.subr.bf16.mxu0 0
        %463 = vmatpush1.bf16.xpose.msra.mxu0 0
        %464 = vmatprep.subr.bf16.mxu0 0
        %465 = vmatpush1.bf16.xpose.msra.mxu0 0
        %466 = vmatprep.subr.bf16.mxu0 0
        %467 = vmatpush1.bf16.xpose.msra.mxu0 0
        %468 = vmatprep.subr.bf16.mxu0 0
        %469 = vmatpush1.bf16.xpose.msra.mxu0 0
        %470 = vmatprep.subr.bf16.mxu0 0
        %471 = vmatpush1.bf16.xpose.msra.mxu0 0
        %472 = vmatprep.subr.bf16.mxu0 0
        %473 = vmatpush1.bf16.xpose.msra.mxu0 0
        %474 = vmatprep.subr.bf16.mxu0 0
        %475 = vmatpush1.bf16.xpose.msra.mxu0 0
        %476 = vmatprep.subr.bf16.mxu0 0
        %477 = vmatpush1.bf16.xpose.msra.mxu0 0
        %478 = vmatprep.mubr.bf16.mxu0 0
        %479 = vmatmul.mubr.bf16.gmra.mrb[0].mxu0 %v441
        %v480 = vpop.f32.mrb[0].mxu0
        %v481 = vadd.f32 %v434, %v480
        %v482 = vpop.f32.mrb[0].mxu0
        %v483 = vpop.f32.mrb[0].mxu0
        %v484 = vpop.f32.mrb[0].mxu0
        %485 = vdwg.mxu0
        %487 = vrot.lane.b32.xlu0 %v424, 96
        %v488 = vpop.permute.xlu0 %487
        %v490 = vsel %vm439, %v424, 0
        %v493 = vsel %vm439, %v488, 0
        %495 = vmatprep.subr.bf16.mxu0 0
        %496 = vmatpush1.bf16.xpose.msra.mxu0 %v493
        %497 = vmatprep.subr.bf16.mxu0 0
        %498 = vmatpush1.bf16.xpose.msra.mxu0 0
        %499 = vmatprep.subr.bf16.mxu0 0
        %500 = vmatpush1.bf16.xpose.msra.mxu0 0
        %501 = vmatprep.subr.bf16.mxu0 0
        %502 = vmatpush1.bf16.xpose.msra.mxu0 0
        %503 = vmatprep.subr.bf16.mxu0 0
        %504 = vmatpush1.bf16.xpose.msra.mxu0 0
        %505 = vmatprep.subr.bf16.mxu0 0
        %506 = vmatpush1.bf16.xpose.msra.mxu0 0
        %507 = vmatprep.subr.bf16.mxu0 0
        %508 = vmatpush1.bf16.xpose.msra.mxu0 0
        %509 = vmatprep.subr.bf16.mxu0 0
        %510 = vmatpush1.bf16.xpose.msra.mxu0 0
        %511 = vmatprep.subr.bf16.mxu0 0
        %512 = vmatpush1.bf16.xpose.msra.mxu0 0
        %513 = vmatprep.subr.bf16.mxu0 0
        %514 = vmatpush1.bf16.xpose.msra.mxu0 0
        %515 = vmatprep.subr.bf16.mxu0 0
        %516 = vmatpush1.bf16.xpose.msra.mxu0 0
        %517 = vmatprep.subr.bf16.mxu0 0
        %518 = vmatpush1.bf16.xpose.msra.mxu0 0
        %519 = vmatprep.subr.bf16.mxu0 0
        %520 = vmatpush1.bf16.xpose.msra.mxu0 0
        %521 = vmatprep.subr.bf16.mxu0 0
        %522 = vmatpush1.bf16.xpose.msra.mxu0 0
        %523 = vmatprep.subr.bf16.mxu0 0
        %524 = vmatpush1.bf16.xpose.msra.mxu0 0
        %525 = vmatprep.subr.bf16.mxu0 0
        %526 = vmatpush1.bf16.xpose.msra.mxu0 0
        %527 = vmatprep.mubr.bf16.mxu0 0
        %528 = vmatmul.mubr.bf16.gmra.mrb[0].mxu0 %v490
        %v529 = vpop.f32.mrb[0].mxu0
        %v530 = vadd.f32 %v434, %v529
        %v531 = vpop.f32.mrb[0].mxu0
        %v532 = vpop.f32.mrb[0].mxu0
        %v533 = vpop.f32.mrb[0].mxu0
        %534 = vdwg.mxu0
        %536 = vrot.lane.b32.xlu0 %v425, 96
        %v537 = vpop.permute.xlu0 %536
        %v539 = vsel %vm439, %v425, 0
        %v542 = vsel %vm439, %v537, 0
        %544 = vmatprep.subr.bf16.mxu0 0
        %545 = vmatpush1.bf16.xpose.msra.mxu0 %v542
        %546 = vmatprep.subr.bf16.mxu0 0
        %547 = vmatpush1.bf16.xpose.msra.mxu0 0
        %548 = vmatprep.subr.bf16.mxu0 0
        %549 = vmatpush1.bf16.xpose.msra.mxu0 0
        %550 = vmatprep.subr.bf16.mxu0 0
        %551 = vmatpush1.bf16.xpose.msra.mxu0 0
        %552 = vmatprep.subr.bf16.mxu0 0
        %553 = vmatpush1.bf16.xpose.msra.mxu0 0
        %554 = vmatprep.subr.bf16.mxu0 0
        %555 = vmatpush1.bf16.xpose.msra.mxu0 0
        %556 = vmatprep.subr.bf16.mxu0 0
        %557 = vmatpush1.bf16.xpose.msra.mxu0 0
        %558 = vmatprep.subr.bf16.mxu0 0
        %559 = vmatpush1.bf16.xpose.msra.mxu0 0
        %560 = vmatprep.subr.bf16.mxu0 0
        %561 = vmatpush1.bf16.xpose.msra.mxu0 0
        %562 = vmatprep.subr.bf16.mxu0 0
        %563 = vmatpush1.bf16.xpose.msra.mxu0 0
        %564 = vmatprep.subr.bf16.mxu0 0
        %565 = vmatpush1.bf16.xpose.msra.mxu0 0
        %566 = vmatprep.subr.bf16.mxu0 0
        %567 = vmatpush1.bf16.xpose.msra.mxu0 0
        %568 = vmatprep.subr.bf16.mxu0 0
        %569 = vmatpush1.bf16.xpose.msra.mxu0 0
        %570 = vmatprep.subr.bf16.mxu0 0
        %571 = vmatpush1.bf16.xpose.msra.mxu0 0
        %572 = vmatprep.subr.bf16.mxu0 0
        %573 = vmatpush1.bf16.xpose.msra.mxu0 0
        %574 = vmatprep.subr.bf16.mxu0 0
        %575 = vmatpush1.bf16.xpose.msra.mxu0 0
        %576 = vmatprep.mubr.bf16.mxu0 0
        %577 = vmatmul.mubr.bf16.gmra.mrb[0].mxu0 %v539
        %v578 = vpop.f32.mrb[0].mxu0
        %v579 = vadd.f32 %v434, %v578
        %v580 = vpop.f32.mrb[0].mxu0
        %v581 = vpop.f32.mrb[0].mxu0
        %v582 = vpop.f32.mrb[0].mxu0
        %583 = vdwg.mxu0
        %585 = vrot.lane.b32.xlu0 %v426, 96
        %v586 = vpop.permute.xlu0 %585
        %v588 = vsel %vm439, %v426, 0
        %v591 = vsel %vm439, %v586, 0
        %593 = vmatprep.subr.bf16.mxu0 0
        %594 = vmatpush1.bf16.xpose.msra.mxu0 %v591
        %595 = vmatprep.subr.bf16.mxu0 0
        %596 = vmatpush1.bf16.xpose.msra.mxu0 0
        %597 = vmatprep.subr.bf16.mxu0 0
        %598 = vmatpush1.bf16.xpose.msra.mxu0 0
        %599 = vmatprep.subr.bf16.mxu0 0
        %600 = vmatpush1.bf16.xpose.msra.mxu0 0
        %601 = vmatprep.subr.bf16.mxu0 0
        %602 = vmatpush1.bf16.xpose.msra.mxu0 0
        %603 = vmatprep.subr.bf16.mxu0 0
        %604 = vmatpush1.bf16.xpose.msra.mxu0 0
        %605 = vmatprep.subr.bf16.mxu0 0
        %606 = vmatpush1.bf16.xpose.msra.mxu0 0
        %607 = vmatprep.subr.bf16.mxu0 0
        %608 = vmatpush1.bf16.xpose.msra.mxu0 0
        %609 = vmatprep.subr.bf16.mxu0 0
        %610 = vmatpush1.bf16.xpose.msra.mxu0 0
        %611 = vmatprep.subr.bf16.mxu0 0
        %612 = vmatpush1.bf16.xpose.msra.mxu0 0
        %613 = vmatprep.subr.bf16.mxu0 0
        %614 = vmatpush1.bf16.xpose.msra.mxu0 0
        %615 = vmatprep.subr.bf16.mxu0 0
        %616 = vmatpush1.bf16.xpose.msra.mxu0 0
        %617 = vmatprep.subr.bf16.mxu0 0
        %618 = vmatpush1.bf16.xpose.msra.mxu0 0
        %619 = vmatprep.subr.bf16.mxu0 0
        %620 = vmatpush1.bf16.xpose.msra.mxu0 0
        %621 = vmatprep.subr.bf16.mxu0 0
        %622 = vmatpush1.bf16.xpose.msra.mxu0 0
        %623 = vmatprep.subr.bf16.mxu0 0
        %624 = vmatpush1.bf16.xpose.msra.mxu0 0
        %625 = vmatprep.mubr.bf16.mxu0 0
        %626 = vmatmul.mubr.bf16.gmra.mrb[0].mxu0 %v588
        %v627 = vpop.f32.mrb[0].mxu0
        %v628 = vadd.f32 %v434, %v627
        %v629 = vpop.f32.mrb[0].mxu0
        %v630 = vpop.f32.mrb[0].mxu0
        %v631 = vpop.f32.mrb[0].mxu0
        %632 = vdwg.mxu0
        %v633 = vsel %vm439, %v481, -inf
        %634 = vmax.xlane.f32.xlu0 %v633
        %v635 = vpop.xlane.xlu0 %634
        %v636 = vsel %vm439, %v530, -inf
        %637 = vmax.xlane.f32.xlu0 %v636
        %v638 = vpop.xlane.xlu0 %637
        %v639 = vsel %vm439, %v579, -inf
        %640 = vmax.xlane.f32.xlu0 %v639
        %v641 = vpop.xlane.xlu0 %640
        %v642 = vsel %vm439, %v628, -inf
        %643 = vmax.xlane.f32.xlu0 %v642
        %v644 = vpop.xlane.xlu0 %643
        %v645 = vsub.f32 %v481, %v635
        %v646 = vsub.f32 %v530, %v638
        %v647 = vsub.f32 %v579, %v641
        %v648 = vsub.f32 %v628, %v644
        %v649 = vmul.f32 %v645, 1.442695
        %v650 = vpow.pop %v649
        %v651 = vmul.f32 %v646, 1.442695
        %v652 = vpow.pop %v651
        %v653 = vmul.f32 %v647, 1.442695
        %v654 = vpow.pop %v653
        %v655 = vmul.f32 %v648, 1.442695
        %v656 = vpow.pop %v655
        %v657 = vsel %vm439, %v650, 0.0
        %658 = vadd.xlane.f32.xlu0 %v657
        %v659 = vpop.xlane.xlu0 %658
        %v660 = vsel %vm439, %v652, 0.0
        %661 = vadd.xlane.f32.xlu0 %v660
        %v662 = vpop.xlane.xlu0 %661
        %v663 = vsel %vm439, %v654, 0.0
        %664 = vadd.xlane.f32.xlu0 %v663
        %v665 = vpop.xlane.xlu0 %664
        %v666 = vsel %vm439, %v656, 0.0
        %667 = vadd.xlane.f32.xlu0 %v666
        %v668 = vpop.xlane.xlu0 %667
        %v669 = vrcp.pop %v659
        %v670 = vrcp.pop %v662
        %v671 = vrcp.pop %v665
        %v672 = vrcp.pop %v668
        %v673 = vmul.f32 %v650, %v669
        %v674 = vmul.f32 %v652, %v670
        %v675 = vmul.f32 %v654, %v671
        %v676 = vmul.f32 %v656, %v672
        %v677 = vpack.c.bf16 %v673, %v673
        %v678 = vpack.c.bf16 %v674, %v674
        %v679 = vpack.c.bf16 %v675, %v675
        %v680 = vpack.c.bf16 %v676, %v676
        %681 = vrot.lane.b32.xlu0 %v423, 64
        %v682 = vpop.permute.xlu0 %681
        %v684 = vsel %vm439, %v677, 0
        %vm686 = vcmask 1043456
        %v688 = vsel %vm686, %v682, 0
        %690 = vmatprep.subr.bf16.mxu0 0
        %691 = vmatpush1.bf16.msra.mxu0 %v688
        %692 = vmatprep.subr.bf16.mxu0 0
        %693 = vmatpush1.bf16.msra.mxu0 0
        %694 = vmatprep.subr.bf16.mxu0 0
        %695 = vmatpush1.bf16.msra.mxu0 0
        %696 = vmatprep.subr.bf16.mxu0 0
        %697 = vmatpush1.bf16.msra.mxu0 0
        %698 = vmatprep.subr.bf16.mxu0 0
        %699 = vmatpush1.bf16.msra.mxu0 0
        %700 = vmatprep.subr.bf16.mxu0 0
        %701 = vmatpush1.bf16.msra.mxu0 0
        %702 = vmatprep.subr.bf16.mxu0 0
        %703 = vmatpush1.bf16.msra.mxu0 0
        %704 = vmatprep.subr.bf16.mxu0 0
        %705 = vmatpush1.bf16.msra.mxu0 0
        %706 = vmatprep.subr.bf16.mxu0 0
        %707 = vmatpush1.bf16.msra.mxu0 0
        %708 = vmatprep.subr.bf16.mxu0 0
        %709 = vmatpush1.bf16.msra.mxu0 0
        %710 = vmatprep.subr.bf16.mxu0 0
        %711 = vmatpush1.bf16.msra.mxu0 0
        %712 = vmatprep.subr.bf16.mxu0 0
        %713 = vmatpush1.bf16.msra.mxu0 0
        %714 = vmatprep.subr.bf16.mxu0 0
        %715 = vmatpush1.bf16.msra.mxu0 0
        %716 = vmatprep.subr.bf16.mxu0 0
        %717 = vmatpush1.bf16.msra.mxu0 0
        %718 = vmatprep.subr.bf16.mxu0 0
        %719 = vmatpush1.bf16.msra.mxu0 0
        %720 = vmatprep.subr.bf16.mxu0 0
        %721 = vmatpush1.bf16.msra.mxu0 0
        %722 = vmatprep.mubr.bf16.mxu0 0
        %723 = vmatmul.mubr.bf16.gmra.mrb[0].mxu0 %v684
        %v724 = vpop.f32.mrb[0].mxu0
        %v725 = vadd.f32 0.0, %v724
        %v726 = vpop.f32.mrb[0].mxu0
        %v727 = vpop.f32.mrb[0].mxu0
        %v728 = vpop.f32.mrb[0].mxu0
        %729 = vdwg.mxu0
        %730 = vrot.lane.b32.xlu0 %v424, 64
        %v731 = vpop.permute.xlu0 %730
        %v733 = vsel %vm439, %v678, 0
        %v736 = vsel %vm686, %v731, 0
        %738 = vmatprep.subr.bf16.mxu0 0
        %739 = vmatpush1.bf16.msra.mxu0 %v736
        %740 = vmatprep.subr.bf16.mxu0 0
        %741 = vmatpush1.bf16.msra.mxu0 0
        %742 = vmatprep.subr.bf16.mxu0 0
        %743 = vmatpush1.bf16.msra.mxu0 0
        %744 = vmatprep.subr.bf16.mxu0 0
        %745 = vmatpush1.bf16.msra.mxu0 0
        %746 = vmatprep.subr.bf16.mxu0 0
        %747 = vmatpush1.bf16.msra.mxu0 0
        %748 = vmatprep.subr.bf16.mxu0 0
        %749 = vmatpush1.bf16.msra.mxu0 0
        %750 = vmatprep.subr.bf16.mxu0 0
        %751 = vmatpush1.bf16.msra.mxu0 0
        %752 = vmatprep.subr.bf16.mxu0 0
        %753 = vmatpush1.bf16.msra.mxu0 0
        %754 = vmatprep.subr.bf16.mxu0 0
        %755 = vmatpush1.bf16.msra.mxu0 0
        %756 = vmatprep.subr.bf16.mxu0 0
        %757 = vmatpush1.bf16.msra.mxu0 0
        %758 = vmatprep.subr.bf16.mxu0 0
        %759 = vmatpush1.bf16.msra.mxu0 0
        %760 = vmatprep.subr.bf16.mxu0 0
        %761 = vmatpush1.bf16.msra.mxu0 0
        %762 = vmatprep.subr.bf16.mxu0 0
        %763 = vmatpush1.bf16.msra.mxu0 0
        %764 = vmatprep.subr.bf16.mxu0 0
        %765 = vmatpush1.bf16.msra.mxu0 0
        %766 = vmatprep.subr.bf16.mxu0 0
        %767 = vmatpush1.bf16.msra.mxu0 0
        %768 = vmatprep.subr.bf16.mxu0 0
        %769 = vmatpush1.bf16.msra.mxu0 0
        %770 = vmatprep.mubr.bf16.mxu0 0
        %771 = vmatmul.mubr.bf16.gmra.mrb[0].mxu0 %v733
        %v772 = vpop.f32.mrb[0].mxu0
        %v773 = vadd.f32 0.0, %v772
        %v774 = vpop.f32.mrb[0].mxu0
        %v775 = vpop.f32.mrb[0].mxu0
        %v776 = vpop.f32.mrb[0].mxu0
        %777 = vdwg.mxu0
        %778 = vrot.lane.b32.xlu0 %v425, 64
        %v779 = vpop.permute.xlu0 %778
        %v781 = vsel %vm439, %v679, 0
        %v784 = vsel %vm686, %v779, 0
        %786 = vmatprep.subr.bf16.mxu0 0
        %787 = vmatpush1.bf16.msra.mxu0 %v784
        %788 = vmatprep.subr.bf16.mxu0 0
        %789 = vmatpush1.bf16.msra.mxu0 0
        %790 = vmatprep.subr.bf16.mxu0 0
        %791 = vmatpush1.bf16.msra.mxu0 0
        %792 = vmatprep.subr.bf16.mxu0 0
        %793 = vmatpush1.bf16.msra.mxu0 0
        %794 = vmatprep.subr.bf16.mxu0 0
        %795 = vmatpush1.bf16.msra.mxu0 0
        %796 = vmatprep.subr.bf16.mxu0 0
        %797 = vmatpush1.bf16.msra.mxu0 0
        %798 = vmatprep.subr.bf16.mxu0 0
        %799 = vmatpush1.bf16.msra.mxu0 0
        %800 = vmatprep.subr.bf16.mxu0 0
        %801 = vmatpush1.bf16.msra.mxu0 0
        %802 = vmatprep.subr.bf16.mxu0 0
        %803 = vmatpush1.bf16.msra.mxu0 0
        %804 = vmatprep.subr.bf16.mxu0 0
        %805 = vmatpush1.bf16.msra.mxu0 0
        %806 = vmatprep.subr.bf16.mxu0 0
        %807 = vmatpush1.bf16.msra.mxu0 0
        %808 = vmatprep.subr.bf16.mxu0 0
        %809 = vmatpush1.bf16.msra.mxu0 0
        %810 = vmatprep.subr.bf16.mxu0 0
        %811 = vmatpush1.bf16.msra.mxu0 0
        %812 = vmatprep.subr.bf16.mxu0 0
        %813 = vmatpush1.bf16.msra.mxu0 0
        %814 = vmatprep.subr.bf16.mxu0 0
        %815 = vmatpush1.bf16.msra.mxu0 0
        %816 = vmatprep.subr.bf16.mxu0 0
        %817 = vmatpush1.bf16.msra.mxu0 0
        %818 = vmatprep.mubr.bf16.mxu0 0
        %819 = vmatmul.mubr.bf16.gmra.mrb[0].mxu0 %v781
        %v820 = vpop.f32.mrb[0].mxu0
        %v821 = vadd.f32 0.0, %v820
        %v822 = vpop.f32.mrb[0].mxu0
        %v823 = vpop.f32.mrb[0].mxu0
        %v824 = vpop.f32.mrb[0].mxu0
        %825 = vdwg.mxu0
        %826 = vrot.lane.b32.xlu0 %v426, 64
        %v827 = vpop.permute.xlu0 %826
        %v829 = vsel %vm439, %v680, 0
        %v832 = vsel %vm686, %v827, 0
        %834 = vmatprep.subr.bf16.mxu0 0
        %835 = vmatpush1.bf16.msra.mxu0 %v832
        %836 = vmatprep.subr.bf16.mxu0 0
        %837 = vmatpush1.bf16.msra.mxu0 0
        %838 = vmatprep.subr.bf16.mxu0 0
        %839 = vmatpush1.bf16.msra.mxu0 0
        %840 = vmatprep.subr.bf16.mxu0 0
        %841 = vmatpush1.bf16.msra.mxu0 0
        %842 = vmatprep.subr.bf16.mxu0 0
        %843 = vmatpush1.bf16.msra.mxu0 0
        %844 = vmatprep.subr.bf16.mxu0 0
        %845 = vmatpush1.bf16.msra.mxu0 0
        %846 = vmatprep.subr.bf16.mxu0 0
        %847 = vmatpush1.bf16.msra.mxu0 0
        %848 = vmatprep.subr.bf16.mxu0 0
        %849 = vmatpush1.bf16.msra.mxu0 0
        %850 = vmatprep.subr.bf16.mxu0 0
        %851 = vmatpush1.bf16.msra.mxu0 0
        %852 = vmatprep.subr.bf16.mxu0 0
        %853 = vmatpush1.bf16.msra.mxu0 0
        %854 = vmatprep.subr.bf16.mxu0 0
        %855 = vmatpush1.bf16.msra.mxu0 0
        %856 = vmatprep.subr.bf16.mxu0 0
        %857 = vmatpush1.bf16.msra.mxu0 0
        %858 = vmatprep.subr.bf16.mxu0 0
        %859 = vmatpush1.bf16.msra.mxu0 0
        %860 = vmatprep.subr.bf16.mxu0 0
        %861 = vmatpush1.bf16.msra.mxu0 0
        %862 = vmatprep.subr.bf16.mxu0 0
        %863 = vmatpush1.bf16.msra.mxu0 0
        %864 = vmatprep.subr.bf16.mxu0 0
        %865 = vmatpush1.bf16.msra.mxu0 0
        %866 = vmatprep.mubr.bf16.mxu0 0
        %867 = vmatmul.mubr.bf16.gmra.mrb[0].mxu0 %v829
        %v868 = vpop.f32.mrb[0].mxu0
        %v869 = vadd.f32 0.0, %v868
        %v870 = vpop.f32.mrb[0].mxu0
        %v871 = vpop.f32.mrb[0].mxu0
        %v872 = vpop.f32.mrb[0].mxu0
        %873 = vdwg.mxu0
        %875 = vrot.lane.b32.xlu0 %v773, 8
        %v876 = vpop.permute.xlu0 %875
        %879 = vrot.lane.b32.xlu0 %v821, 16
        %v880 = vpop.permute.xlu0 %879
        %883 = vrot.lane.b32.xlu0 %v869, 24
        %v884 = vpop.permute.xlu0 %883
        %v886 = vsel %vm439, %v725, %v876
        %vm887 = vcmask 130048
        %v888 = vsel %vm887, %v886, %v880
        %vm889 = vcmask 195584
        %v890 = vsel %vm889, %v888, %v884
        %v891 = vpack.c.bf16 %v890, %v890
        %v892 = vld [vmem:[%s4] sm:$0xf]
        %v893 = vld [vmem:[%s4 + $0x4] sm:$0xf]
        %v894 = vld [vmem:[%s4 + $0x8] sm:$0xf]
        %v895 = vld [vmem:[%s4 + $0xc] sm:$0xf]
        %v896 = vlaneseq
        %v897 = vshrl.u32 %v896, 7
        %v898 = vsub.s32 0, %v897
        %v899 = vrot.slane %v344, %v898
        %v904 = vunpack.c.l.b16 %v892
        %v905 = vunpack.c.l.b16 %v893
        %v906 = vunpack.c.l.b16 %v894
        %v907 = vunpack.c.l.b16 %v895
        %v908 = vpack.c.b16 %v905, %v904
        %v909 = vpack.c.b16 %v907, %v906
        %v913 = vsel %vm369, %v891, 0
        %915 = vmatprep.subr.bf16.mxu0 0
        %916 = vmatpush1.bf16.msra.mxu0 %v908
        %917 = vmatprep.subr.bf16.mxu0 0
        %918 = vmatpush1.bf16.msra.mxu0 %v909
        %919 = vmatprep.subr.bf16.mxu0 0
        %920 = vmatpush1.bf16.msra.mxu0 0
        %921 = vmatprep.subr.bf16.mxu0 0
        %922 = vmatpush1.bf16.msra.mxu0 0
        %923 = vmatprep.subr.bf16.mxu0 0
        %924 = vmatpush1.bf16.msra.mxu0 0
        %925 = vmatprep.subr.bf16.mxu0 0
        %926 = vmatpush1.bf16.msra.mxu0 0
        %927 = vmatprep.subr.bf16.mxu0 0
        %928 = vmatpush1.bf16.msra.mxu0 0
        %929 = vmatprep.subr.bf16.mxu0 0
        %930 = vmatpush1.bf16.msra.mxu0 0
        %931 = vmatprep.subr.bf16.mxu0 0
        %932 = vmatpush1.bf16.msra.mxu0 0
        %933 = vmatprep.subr.bf16.mxu0 0
        %934 = vmatpush1.bf16.msra.mxu0 0
        %935 = vmatprep.subr.bf16.mxu0 0
        %936 = vmatpush1.bf16.msra.mxu0 0
        %937 = vmatprep.subr.bf16.mxu0 0
        %938 = vmatpush1.bf16.msra.mxu0 0
        %939 = vmatprep.subr.bf16.mxu0 0
        %940 = vmatpush1.bf16.msra.mxu0 0
        %941 = vmatprep.subr.bf16.mxu0 0
        %942 = vmatpush1.bf16.msra.mxu0 0
        %943 = vmatprep.subr.bf16.mxu0 0
        %944 = vmatpush1.bf16.msra.mxu0 0
        %945 = vmatprep.subr.bf16.mxu0 0
        %946 = vmatpush1.bf16.msra.mxu0 0
        %947 = vmatprep.mubr.bf16.mxu0 0
        %948 = vmatmul.mubr.bf16.gmra.mrb[0].mxu0 %v913
        %v949 = vpop.f32.mrb[0].mxu0
        %v950 = vadd.f32 %v899, %v949
        %v951 = vpop.f32.mrb[0].mxu0
        %v952 = vpop.f32.mrb[0].mxu0
        %v953 = vpop.f32.mrb[0].mxu0
        %954 = vdwg.mxu0
        %v955 = vadd.f32 %v343, %v950
        %v956 = vsel %vm369, %v955, 0.0
        %957 = vadd.xlane.f32.xlu0 %v956
        %v958 = vpop.xlane.xlu0 %957
        %v959 = vrcp.pop 32.0
        %v960 = vmul.f32 %v958, %v959
        %v961 = vsub.f32 %v955, %v960
        %v962 = vmul.f32 %v961, %v961
        %v963 = vsel %vm369, %v962, 0.0
        %964 = vadd.xlane.f32.xlu0 %v963
        %v965 = vpop.xlane.xlu0 %964
        %v966 = vmul.f32 %v965, %v959
        %v967 = vadd.f32 %v966, 1e-05
        %v968 = vrsqrt.pop %v967
        %v969 = vmul.f32 %v961, %v968
        %v970 = vlaneseq
        %v971 = vshrl.u32 %v970, 7
        %v972 = vsub.s32 2, %v971
        %v973 = vrot.slane %v344, %v972
        %v974 = vmul.f32 %v969, %v973
        %v975 = vlaneseq
        %v976 = vshrl.u32 %v975, 7
        %v977 = vsub.s32 3, %v976
        %v978 = vrot.slane %v344, %v977
        %v979 = vadd.f32 %v974, %v978
        %v980 = vpack.c.bf16 %v979, %v979
        %v981 = vld [vmem:[%s5] sm:$0xff]
        %v982 = vld [vmem:[%s5 + $0x8] sm:$0xff]
        %v983 = vld [vmem:[%s5 + $0x10] sm:$0xff]
        %v984 = vld [vmem:[%s5 + $0x18] sm:$0xff]
        %v985 = vld [vmem:[%s7] sm:$0x3]
        %v987 = vlaneseq
        %v988 = vshrl.u32 %v987, 7
        %v989 = vsub.s32 0, %v988
        %v990 = vrot.slane %v985, %v989
        %v991 = vlaneseq
        %v992 = vshrl.u32 %v991, 7
        %v993 = vsub.s32 1, %v992
        %v994 = vrot.slane %v985, %v993
        %v1001 = vunpack.c.l.b16 %v981
        %v1002 = vunpack.c.h.b16 %v981
        %v1003 = vunpack.c.l.b16 %v982
        %v1004 = vunpack.c.h.b16 %v982
        %v1005 = vunpack.c.l.b16 %v983
        %v1006 = vunpack.c.h.b16 %v983
        %v1007 = vunpack.c.l.b16 %v984
        %v1008 = vunpack.c.h.b16 %v984
        %v1009 = vpack.c.b16 %v1003, %v1001
        %v1010 = vpack.c.b16 %v1004, %v1002
        %v1011 = vpack.c.b16 %v1007, %v1005
        %v1012 = vpack.c.b16 %v1008, %v1006
        %v1018 = vsel %vm369, %v980, 0
        %1020 = vmatprep.subr.bf16.mxu0 %v1010
        %1021 = vmatpush1.bf16.msra.mxu0 %v1009
        %1022 = vmatprep.subr.bf16.mxu0 %v1012
        %1023 = vmatpush1.bf16.msra.mxu0 %v1011
        %1024 = vmatprep.subr.bf16.mxu0 0
        %1025 = vmatpush1.bf16.msra.mxu0 0
        %1026 = vmatprep.subr.bf16.mxu0 0
        %1027 = vmatpush1.bf16.msra.mxu0 0
        %1028 = vmatprep.subr.bf16.mxu0 0
        %1029 = vmatpush1.bf16.msra.mxu0 0
        %1030 = vmatprep.subr.bf16.mxu0 0
        %1031 = vmatpush1.bf16.msra.mxu0 0
        %1032 = vmatprep.subr.bf16.mxu0 0
        %1033 = vmatpush1.bf16.msra.mxu0 0
        %1034 = vmatprep.subr.bf16.mxu0 0
        %1035 = vmatpush1.bf16.msra.mxu0 0
        %1036 = vmatprep.subr.bf16.mxu0 0
        %1037 = vmatpush1.bf16.msra.mxu0 0
        %1038 = vmatprep.subr.bf16.mxu0 0
        %1039 = vmatpush1.bf16.msra.mxu0 0
        %1040 = vmatprep.subr.bf16.mxu0 0
        %1041 = vmatpush1.bf16.msra.mxu0 0
        %1042 = vmatprep.subr.bf16.mxu0 0
        %1043 = vmatpush1.bf16.msra.mxu0 0
        %1044 = vmatprep.subr.bf16.mxu0 0
        %1045 = vmatpush1.bf16.msra.mxu0 0
        %1046 = vmatprep.subr.bf16.mxu0 0
        %1047 = vmatpush1.bf16.msra.mxu0 0
        %1048 = vmatprep.subr.bf16.mxu0 0
        %1049 = vmatpush1.bf16.msra.mxu0 0
        %1050 = vmatprep.subr.bf16.mxu0 0
        %1051 = vmatpush1.bf16.msra.mxu0 0
        %1052 = vmatprep.mubr.bf16.mxu0 0
        %1053 = vmatmul.mubr.bf16.gmra.mrb[0].mxu0 %v1018
        %v1054 = vpop.f32.mrb[0].mxu0
        %v1055 = vadd.f32 %v990, %v1054
        %v1056 = vpop.f32.mrb[0].mxu0
        %v1057 = vadd.f32 %v994, %v1056
        %v1058 = vpop.f32.mrb[0].mxu0
        %v1059 = vpop.f32.mrb[0].mxu0
        %1060 = vdwg.mxu0
        %v1061 = vxor.u32 %v1057, 2147483648
        %v1062 = vmul.f32 %v1061, 1.442695
        %v1063 = vpow.pop %v1062
        %v1064 = vadd.f32 %v1063, 1.0
        %v1065 = vrcp.pop %v1064
        %v1066 = vmul.f32 1.0, %v1065
        %1068 = vset.pattern.permute.xlu0 0
        %1069 = vperm.xlu0 %1068, %v1066
        %v1070 = vpop.permute.xlu0 %1069
        %v1072 = vmul.f32 %v1055, %v1070
        %v1073 = vmul.f32 %v1057, %v1070
        %v1074 = vmax.f32 %v1072, 0.0
        %v1075 = vmax.f32 %v1073, 0.0
        %v1076 = vpack.c.bf16 %v1074, %v1074
        %v1077 = vpack.c.bf16 %v1075, %v1075
        %v1078 = vld [vmem:[%s6] sm:$0xf]
        %v1079 = vld [vmem:[%s6 + $0x4] sm:$0xf]
        %v1080 = vld [vmem:[%s6 + $0x8] sm:$0xf]
        %v1081 = vld [vmem:[%s6 + $0xc] sm:$0xf]
        %v1082 = vld [vmem:[%s6 + $0x10] sm:$0xf]
        %v1083 = vld [vmem:[%s6 + $0x14] sm:$0xf]
        %v1084 = vld [vmem:[%s6 + $0x18] sm:$0xf]
        %v1085 = vld [vmem:[%s6 + $0x1c] sm:$0xf]
        %v1086 = vld [vmem:[%s6 + $0x20] sm:$0xf]
        %v1087 = vld [vmem:[%s6 + $0x24] sm:$0xf]
        %v1088 = vld [vmem:[%s6 + $0x28] sm:$0xf]
        %v1089 = vld [vmem:[%s6 + $0x2c] sm:$0xf]
        %v1090 = vld [vmem:[%s6 + $0x30] sm:$0xf]
        %v1091 = vld [vmem:[%s6 + $0x34] sm:$0xf]
        %v1092 = vld [vmem:[%s6 + $0x38] sm:$0xf]
        %v1093 = vld [vmem:[%s6 + $0x3c] sm:$0xf]
        %v1094 = vld [vmem:[%s6 + $0x40] sm:$0xf]
        %v1095 = vld [vmem:[%s6 + $0x44] sm:$0xf]
        %v1096 = vld [vmem:[%s6 + $0x48] sm:$0xf]
        %v1097 = vld [vmem:[%s6 + $0x4c] sm:$0xf]
        %v1098 = vld [vmem:[%s6 + $0x50] sm:$0xf]
        %v1099 = vld [vmem:[%s6 + $0x54] sm:$0xf]
        %v1100 = vld [vmem:[%s6 + $0x58] sm:$0xf]
        %v1101 = vld [vmem:[%s6 + $0x5c] sm:$0xf]
        %v1102 = vld [vmem:[%s6 + $0x60] sm:$0xf]
        %v1103 = vld [vmem:[%s6 + $0x64] sm:$0xf]
        %v1104 = vld [vmem:[%s6 + $0x68] sm:$0xf]
        %v1105 = vld [vmem:[%s6 + $0x6c] sm:$0xf]
        %v1106 = vld [vmem:[%s6 + $0x70] sm:$0xf]
        %v1107 = vld [vmem:[%s6 + $0x74] sm:$0xf]
        %v1108 = vld [vmem:[%s6 + $0x78] sm:$0xf]
        %v1109 = vld [vmem:[%s6 + $0x7c] sm:$0xf]
        %v1110 = vlaneseq
        %v1111 = vshrl.u32 %v1110, 7
        %v1112 = vsub.s32 1, %v1111
        %v1113 = vrot.slane %v344, %v1112
        %v1146 = vunpack.c.l.b16 %v1078
        %v1147 = vunpack.c.l.b16 %v1079
        %v1148 = vunpack.c.l.b16 %v1080
        %v1149 = vunpack.c.l.b16 %v1081
        %v1150 = vunpack.c.l.b16 %v1082
        %v1151 = vunpack.c.l.b16 %v1083
        %v1152 = vunpack.c.l.b16 %v1084
        %v1153 = vunpack.c.l.b16 %v1085
        %v1154 = vunpack.c.l.b16 %v1086
        %v1155 = vunpack.c.l.b16 %v1087
        %v1156 = vunpack.c.l.b16 %v1088
        %v1157 = vunpack.c.l.b16 %v1089
        %v1158 = vunpack.c.l.b16 %v1090
        %v1159 = vunpack.c.l.b16 %v1091
        %v1160 = vunpack.c.l.b16 %v1092
        %v1161 = vunpack.c.l.b16 %v1093
        %v1162 = vunpack.c.l.b16 %v1094
        %v1163 = vunpack.c.l.b16 %v1095
        %v1164 = vunpack.c.l.b16 %v1096
        %v1165 = vunpack.c.l.b16 %v1097
        %v1166 = vunpack.c.l.b16 %v1098
        %v1167 = vunpack.c.l.b16 %v1099
        %v1168 = vunpack.c.l.b16 %v1100
        %v1169 = vunpack.c.l.b16 %v1101
        %v1170 = vunpack.c.l.b16 %v1102
        %v1171 = vunpack.c.l.b16 %v1103
        %v1172 = vunpack.c.l.b16 %v1104
        %v1173 = vunpack.c.l.b16 %v1105
        %v1174 = vunpack.c.l.b16 %v1106
        %v1175 = vunpack.c.l.b16 %v1107
        %v1176 = vunpack.c.l.b16 %v1108
        %v1177 = vunpack.c.l.b16 %v1109
        %v1178 = vpack.c.b16 %v1147, %v1146
        %v1179 = vpack.c.b16 %v1149, %v1148
        %v1180 = vpack.c.b16 %v1151, %v1150
        %v1181 = vpack.c.b16 %v1153, %v1152
        %v1182 = vpack.c.b16 %v1155, %v1154
        %v1183 = vpack.c.b16 %v1157, %v1156
        %v1184 = vpack.c.b16 %v1159, %v1158
        %v1185 = vpack.c.b16 %v1161, %v1160
        %v1186 = vpack.c.b16 %v1163, %v1162
        %v1187 = vpack.c.b16 %v1165, %v1164
        %v1188 = vpack.c.b16 %v1167, %v1166
        %v1189 = vpack.c.b16 %v1169, %v1168
        %v1190 = vpack.c.b16 %v1171, %v1170
        %v1191 = vpack.c.b16 %v1173, %v1172
        %v1192 = vpack.c.b16 %v1175, %v1174
        %v1193 = vpack.c.b16 %v1177, %v1176
        %1210 = vmatprep.subr.bf16.mxu0 0
        %1211 = vmatpush1.bf16.msra.mxu0 %v1178
        %1212 = vmatprep.subr.bf16.mxu0 0
        %1213 = vmatpush1.bf16.msra.mxu0 %v1179
        %1214 = vmatprep.subr.bf16.mxu0 0
        %1215 = vmatpush1.bf16.msra.mxu0 %v1180
        %1216 = vmatprep.subr.bf16.mxu0 0
        %1217 = vmatpush1.bf16.msra.mxu0 %v1181
        %1218 = vmatprep.subr.bf16.mxu0 0
        %1219 = vmatpush1.bf16.msra.mxu0 %v1182
        %1220 = vmatprep.subr.bf16.mxu0 0
        %1221 = vmatpush1.bf16.msra.mxu0 %v1183
        %1222 = vmatprep.subr.bf16.mxu0 0
        %1223 = vmatpush1.bf16.msra.mxu0 %v1184
        %1224 = vmatprep.subr.bf16.mxu0 0
        %1225 = vmatpush1.bf16.msra.mxu0 %v1185
        %1226 = vmatprep.subr.bf16.mxu0 0
        %1227 = vmatpush1.bf16.msra.mxu0 %v1186
        %1228 = vmatprep.subr.bf16.mxu0 0
        %1229 = vmatpush1.bf16.msra.mxu0 %v1187
        %1230 = vmatprep.subr.bf16.mxu0 0
        %1231 = vmatpush1.bf16.msra.mxu0 %v1188
        %1232 = vmatprep.subr.bf16.mxu0 0
        %1233 = vmatpush1.bf16.msra.mxu0 %v1189
        %1234 = vmatprep.subr.bf16.mxu0 0
        %1235 = vmatpush1.bf16.msra.mxu0 %v1190
        %1236 = vmatprep.subr.bf16.mxu0 0
        %1237 = vmatpush1.bf16.msra.mxu0 %v1191
        %1238 = vmatprep.subr.bf16.mxu0 0
        %1239 = vmatpush1.bf16.msra.mxu0 %v1192
        %1240 = vmatprep.subr.bf16.mxu0 0
        %1241 = vmatpush1.bf16.msra.mxu0 %v1193
        %1242 = vmatprep.mubr.bf16.mxu0 %v1077
        %1243 = vmatmul.mubr.bf16.gmra.mrb[0].mxu0 %v1076
        %v1244 = vpop.f32.mrb[0].mxu0
        %v1245 = vadd.f32 %v1113, %v1244
        %v1246 = vpop.f32.mrb[0].mxu0
        %v1247 = vpop.f32.mrb[0].mxu0
        %v1248 = vpop.f32.mrb[0].mxu0
        %1249 = vdwg.mxu0
        %v1250 = vadd.f32 %v979, %v1245
        %v1251 = vsel %vm369, %v1250, 0.0
        %1252 = vadd.xlane.f32.xlu0 %v1251
        %v1253 = vpop.xlane.xlu0 %1252
        %v1254 = vmul.f32 %v1253, %v959
        %v1255 = vsub.f32 %v1250, %v1254
        %v1256 = vmul.f32 %v1255, %v1255
        %v1257 = vsel %vm369, %v1256, 0.0
        %1258 = vadd.xlane.f32.xlu0 %v1257
        %v1259 = vpop.xlane.xlu0 %1258
        %v1260 = vmul.f32 %v1259, %v959
        %v1261 = vadd.f32 %v1260, 1e-05
        %v1262 = vrsqrt.pop %v1261
        %v1263 = vmul.f32 %v1255, %v1262
        %v1264 = vlaneseq
        %v1265 = vshrl.u32 %v1264, 7
        %v1266 = vsub.s32 4, %v1265
        %v1267 = vrot.slane %v344, %v1266
        %v1268 = vmul.f32 %v1263, %v1267
        %v1269 = vlaneseq
        %v1270 = vshrl.u32 %v1269, 7
        %v1271 = vsub.s32 5, %v1270
        %v1272 = vrot.slane %v344, %v1271
        %v1273 = vadd.f32 %v1268, %v1272
        %1274 = vst.msk [vmem:[%s334] sm:$0xff] %vm369, %v1273
        %s1275 = sand.u32 %s230, 1
        %s1276 = scalar_lea.sflag [#allocation3], %s1275
        %s1277 = sand.u32 %s230, 1
        %s1278 = smul.addr %s1277, 8
        %s1279 = scalar_lea.vmem [#allocation2], %s1278
        // Predicated region
        $region57: #{tpu_custom_call.1} parent=55 // pred_check
          %p1280 = pneg %p240
        $region58: #{tpu_custom_call.1} parent=55 // pred_check_branch
          %1282 = sbr.rel (%p1280) target = $region60
        $region59: #{tpu_custom_call.1} parent=55 // pred_region
          %s1284 = ssub.s32 128, 128
          %1285 = vsyncadd %s1276, %s1284
          %s1286 = smul.addr %s23, 128
          %s1287 = scalar_lea.hbm %s9, %s1286
          %s1289 = sshll.u32 %s1279, 4
          %s1290 = int_to_ptr.vmem [resolvable:$true] %s1289
          %1292 = dma.vmem_to_hbm [thread:$0]  %s1290, 128, %s1287, %s1276
        $region60: #{tpu_custom_call.1} parent=55 // pred_fallthru
          _
      $region56: #{tpu_custom_call.1} parent=5 // pred_fallthru
        _
      %p1293 = scmp.le.s32.totalorder 2, %s18
      // Predicated region
      $region61: #{tpu_custom_call.1} parent=5 // pred_check
        %p1294 = pneg %p1293
      $region62: #{tpu_custom_call.1} parent=5 // pred_check_branch
        %1296 = sbr.rel (%p1294) target = $region64
      $region63: #{tpu_custom_call.1} parent=5 // pred_region
        %s1297 = ssub.s32 %s18, 2
        // Predicated region
        $region65: #{tpu_custom_call.1} parent=63 // pred_check
          %p1298 = pneg %p246
        $region66: #{tpu_custom_call.1} parent=63 // pred_check_branch
          %1300 = sbr.rel (%p1298) target = $region68
        $region67: #{tpu_custom_call.1} parent=63 // pred_region
          %s1301 = sand.u32 %s231, 1
          %s1302 = scalar_lea.sflag [#allocation3], %s1301
          %s1303 = sand.u32 %s231, 1
          %s1304 = smul.addr %s1303, 8
          %s1305 = scalar_lea.vmem [#allocation2], %s1304
          %1306 = dma.done %s1302, 128
        $region68: #{tpu_custom_call.1} parent=63 // pred_fallthru
          _
      $region64: #{tpu_custom_call.1} parent=5 // pred_fallthru
        _
    $region6: #{tpu_custom_call.1} parent=1 // loop_footer
      %s22 = sadd.s32 1, %s18
    $region7: #{tpu_custom_call.1} parent=1 // loop_footer_branch
      %17 = sbr.rel target = $region3
    $region8: #{tpu_custom_call.1} parent=1 // loop_exit
      _
    %1307 = vsyncpa [#allocation3], 1
    %s1308 = scalar_lea.sflag [#allocation3], 1
    %1309 = vsyncpa %s1308, 1

// kernel: tpu_custom_call.1
$region0: #{tpu_custom_call.1}
  #allocation0 [shape = 'u32[]', space=smem, size = 0x4, offset = 0x4, fixed_abs, tag = 'smem constant byte address 0x4 - core index']
  #allocation1 [shape = 'u32[144,128]{1,0:T(1,128)}', space=vmem, size = 0x12000, scoped, tag = 'internal scratch']
  %s0 = inlined_call_operand.vmem [shape: f32[2,8,32], index: 0, kind: input, shape index: {}]
  %s1 = inlined_call_operand.vmem [shape: f32[2,1,8], index: 1, kind: input, shape index: {}]
  %s2 = inlined_call_operand.vmem [shape: bf16[32,96], index: 2, kind: input, shape index: {}]
  %s3 = inlined_call_operand.vmem [shape: f32[1,96], index: 3, kind: input, shape index: {}]
  %s4 = inlined_call_operand.vmem [shape: bf16[32,32], index: 4, kind: input, shape index: {}]
  %s5 = inlined_call_operand.vmem [shape: bf16[32,256], index: 5, kind: input, shape index: {}]
  %s6 = inlined_call_operand.vmem [shape: bf16[256,32], index: 6, kind: input, shape index: {}]
  %s7 = inlined_call_operand.vmem [shape: f32[1,256], index: 7, kind: input, shape index: {}]
  %s8 = inlined_call_operand.vmem [shape: f32[6,32], index: 8, kind: input, shape index: {}]
  %s9 = inlined_call_operand.hbm [shape: f32[2,8,32], index: 9, kind: output, shape index: {}]
  %s10 = sld [smem:[#allocation0]]
  $region69: #{tpu_custom_call.1} parent=0
    _
  %s12 = ssub.s32 1, %s10
  %s13 = scalar_select 0, %s12, %s10
  $region1: #{tpu_custom_call.1} parent=0
    #allocation2 [shape = 'u8[8192]{0}', space=vmem, size = 0x2000, scoped, tag = 'output window, operand 0']
    #allocation3 [shape = 's32[2]{0}', space=sflag, size = 0x8, scoped, tag = 'scoped memory for tpu_custom_call.1']
    %14 = vsyncpa [#allocation3], 0
    %s15 = scalar_lea.sflag [#allocation3], 1
    %16 = vsyncpa %s15, 0
    loop: start=0, step=1, limit=4
    $region2: #{tpu_custom_call.1} parent=1 // loop_pre_header
      _
    $region3: #{tpu_custom_call.1} parent=1 // loop_header
      %s18 = sphi 0, %s22
      %p19 = scmp.ge.s32.totalorder %s18, 4
      %s28 = sphi 0, %s30
      %s31 = sphi 0, %s28
      %s32 = sphi 0, %s31
      %s48 = sphi 0, %s32
      %s54 = sphi 0, %s56
      %s57 = sphi 0, %s54
      %s58 = sphi 0, %s57
      %s74 = sphi 0, %s58
      %s78 = sphi 0, %s78
      %s80 = sphi 0, %s78
      %s81 = sphi 0, %s80
      %s95 = sphi 0, %s81
      %s99 = sphi 0, %s99
      %s101 = sphi 0, %s99
      %s102 = sphi 0, %s101
      %s116 = sphi 0, %s102
      %s120 = sphi 0, %s120
      %s122 = sphi 0, %s120
      %s123 = sphi 0, %s122
      %s137 = sphi 0, %s123
      %s141 = sphi 0, %s141
      %s143 = sphi 0, %s141
      %s144 = sphi 0, %s143
      %s158 = sphi 0, %s144
      %s162 = sphi 0, %s162
      %s164 = sphi 0, %s162
      %s165 = sphi 0, %s164
      %s179 = sphi 0, %s165
      %s183 = sphi 0, %s183
      %s185 = sphi 0, %s183
      %s186 = sphi 0, %s185
      %s200 = sphi 0, %s186
      %s204 = sphi 0, %s204
      %s206 = sphi 0, %s204
      %s207 = sphi 0, %s206
      %s221 = sphi 0, %s207
      %s227 = sphi 0, %s229
      %s230 = sphi 0, %s227
      %s231 = sphi 0, %s230
      %s247 = sphi 0, %s231
    $region4: #{tpu_custom_call.1} parent=1 // loop_header_branch
      %21 = sbr.rel (%p19) target = $region8
    $region5: #{tpu_custom_call.1} parent=1 // loop_body
      %s23 = ssub.s32 %s18, 1
      %s24 = ssub.s32 %s18, 2
      %s25 = sadd.s32 %s18, 1
      %s26 = ssub.s32 %s18, %s25
      %p27 = scmp.eq.s32.totalorder %s26, 0
      %s29 = sadd.s32 %s28, 1
      %s30 = scalar_select %p27, %s28, %s29
      %p33 = pneg %p27
      %p34 = scmp.eq.s32.totalorder %s18, 1
      %p35 = por %p33, %p34
      %p36 = scmp.ne.s32.totalorder %s28, %s31
      %p37 = scmp.eq.s32.totalorder %s18, 0
      %p38 = por %p36, %p37
      %p39 = scmp.ne.s32.totalorder %s28, %s31
      %p40 = scmp.eq.s32.totalorder %s23, 1
      %p41 = por %p39, %p40
      %p42 = scmp.ne.s32.totalorder %s31, %s32
      %p43 = scmp.eq.s32.totalorder %s23, 0
      %p44 = por %p42, %p43
      %p45 = scmp.ne.s32.totalorder %s31, %s32
      %p46 = scmp.eq.s32.totalorder %s24, 1
      %p47 = por %p45, %p46
      %p49 = scmp.ne.s32.totalorder %s32, %s48
      %p50 = scmp.eq.s32.totalorder %s24, 0
      %p51 = por %p49, %p50
      %s52 = ssub.s32 %s18, %s25
      %p53 = scmp.eq.s32.totalorder %s52, 0
      %s55 = sadd.s32 %s54, 1
      %s56 = scalar_select %p53, %s54, %s55
      %p59 = pneg %p53
      %p60 = scmp.eq.s32.totalorder %s18, 1
      %p61 = por %p59, %p60
      %p62 = scmp.ne.s32.totalorder %s54, %s57
      %p63 = scmp.eq.s32.totalorder %s18, 0
      %p64 = por %p62, %p63
      %p65 = scmp.ne.s32.totalorder %s54, %s57
      %p66 = scmp.eq.s32.totalorder %s23, 1
      %p67 = por %p65, %p66
      %p68 = scmp.ne.s32.totalorder %s57, %s58
      %p69 = scmp.eq.s32.totalorder %s23, 0
      %p70 = por %p68, %p69
      %p71 = scmp.ne.s32.totalorder %s57, %s58
      %p72 = scmp.eq.s32.totalorder %s24, 1
      %p73 = por %p71, %p72
      %p75 = scmp.ne.s32.totalorder %s58, %s74
      %p76 = scmp.eq.s32.totalorder %s24, 0
      %p77 = por %p75, %p76
      %s79 = sadd.s32 %s78, 1
      %p82 = scmp.eq.s32.totalorder %s18, 1
      %p83 = scmp.ne.s32.totalorder %s78, %s80
      %p84 = scmp.eq.s32.totalorder %s18, 0
      %p85 = por %p83, %p84
      %p86 = scmp.ne.s32.totalorder %s78, %s80
      %p87 = scmp.eq.s32.totalorder %s23, 1
      %p88 = por %p86, %p87
      %p89 = scmp.ne.s32.totalorder %s80, %s81
      %p90 = scmp.eq.s32.totalorder %s23, 0
      %p91 = por %p89, %p90
      %p92 = scmp.ne.s32.totalorder %s80, %s81
      %p93 = scmp.eq.s32.totalorder %s24, 1
      %p94 = por %p92, %p93
      %p96 = scmp.ne.s32.totalorder %s81, %s95
      %p97 = scmp.eq.s32.totalorder %s24, 0
      %p98 = por %p96, %p97
      %s100 = sadd.s32 %s99, 1
      %p103 = scmp.eq.s32.totalorder %s18, 1
      %p104 = scmp.ne.s32.totalorder %s99, %s101
      %p105 = scmp.eq.s32.totalorder %s18, 0
      %p106 = por %p104, %p105
      %p107 = scmp.ne.s32.totalorder %s99, %s101
      %p108 = scmp.eq.s32.totalorder %s23, 1
      %p109 = por %p107, %p108
      %p110 = scmp.ne.s32.totalorder %s101, %s102
      %p111 = scmp.eq.s32.totalorder %s23, 0
      %p112 = por %p110, %p111
      %p113 = scmp.ne.s32.totalorder %s101, %s102
      %p114 = scmp.eq.s32.totalorder %s24, 1
      %p115 = por %p113, %p114
      %p117 = scmp.ne.s32.totalorder %s102, %s116
      %p118 = scmp.eq.s32.totalorder %s24, 0
      %p119 = por %p117, %p118
      %s121 = sadd.s32 %s120, 1
      %p124 = scmp.eq.s32.totalorder %s18, 1
      %p125 = scmp.ne.s32.totalorder %s120, %s122
      %p126 = scmp.eq.s32.totalorder %s18, 0
      %p127 = por %p125, %p126
      %p128 = scmp.ne.s32.totalorder %s120, %s122
      %p129 = scmp.eq.s32.totalorder %s23, 1
      %p130 = por %p128, %p129
      %p131 = scmp.ne.s32.totalorder %s122, %s123
      %p132 = scmp.eq.s32.totalorder %s23, 0
      %p133 = por %p131, %p132
      %p134 = scmp.ne.s32.totalorder %s122, %s123
      %p135 = scmp.eq.s32.totalorder %s24, 1
      %p136 = por %p134, %p135
      %p138 = scmp.ne.s32.totalorder %s123, %s137
      %p139 = scmp.eq.s32.totalorder %s24, 0
      %p140 = por %p138, %p139
      %s142 = sadd.s32 %s141, 1
      %p145 = scmp.eq.s32.totalorder %s18, 1
      %p146 = scmp.ne.s32.totalorder %s141, %s143
      %p147 = scmp.eq.s32.totalorder %s18, 0
      %p148 = por %p146, %p147
      %p149 = scmp.ne.s32.totalorder %s141, %s143
      %p150 = scmp.eq.s32.totalorder %s23, 1
      %p151 = por %p149, %p150
      %p152 = scmp.ne.s32.totalorder %s143, %s144
      %p153 = scmp.eq.s32.totalorder %s23, 0
      %p154 = por %p152, %p153
      %p155 = scmp.ne.s32.totalorder %s143, %s144
      %p156 = scmp.eq.s32.totalorder %s24, 1
      %p157 = por %p155, %p156
      %p159 = scmp.ne.s32.totalorder %s144, %s158
      %p160 = scmp.eq.s32.totalorder %s24, 0
      %p161 = por %p159, %p160
      %s163 = sadd.s32 %s162, 1
      %p166 = scmp.eq.s32.totalorder %s18, 1
      %p167 = scmp.ne.s32.totalorder %s162, %s164
      %p168 = scmp.eq.s32.totalorder %s18, 0
      %p169 = por %p167, %p168
      %p170 = scmp.ne.s32.totalorder %s162, %s164
      %p171 = scmp.eq.s32.totalorder %s23, 1
      %p172 = por %p170, %p171
      %p173 = scmp.ne.s32.totalorder %s164, %s165
      %p174 = scmp.eq.s32.totalorder %s23, 0
      %p175 = por %p173, %p174
      %p176 = scmp.ne.s32.totalorder %s164, %s165
      %p177 = scmp.eq.s32.totalorder %s24, 1
      %p178 = por %p176, %p177
      %p180 = scmp.ne.s32.totalorder %s165, %s179
      %p181 = scmp.eq.s32.totalorder %s24, 0
      %p182 = por %p180, %p181
      %s184 = sadd.s32 %s183, 1
      %p187 = scmp.eq.s32.totalorder %s18, 1
      %p188 = scmp.ne.s32.totalorder %s183, %s185
      %p189 = scmp.eq.s32.totalorder %s18, 0
      %p190 = por %p188, %p189
      %p191 = scmp.ne.s32.totalorder %s183, %s185
      %p192 = scmp.eq.s32.totalorder %s23, 1
      %p193 = por %p191, %p192
      %p194 = scmp.ne.s32.totalorder %s185, %s186
      %p195 = scmp.eq.s32.totalorder %s23, 0
      %p196 = por %p194, %p195
      %p197 = scmp.ne.s32.totalorder %s185, %s186
      %p198 = scmp.eq.s32.totalorder %s24, 1
      %p199 = por %p197, %p198
      %p201 = scmp.ne.s32.totalorder %s186, %s200
      %p202 = scmp.eq.s32.totalorder %s24, 0
      %p203 = por %p201, %p202
      %s205 = sadd.s32 %s204, 1
      %p208 = scmp.eq.s32.totalorder %s18, 1
      %p209 = scmp.ne.s32.totalorder %s204, %s206
      %p210 = scmp.eq.s32.totalorder %s18, 0
      %p211 = por %p209, %p210
      %p212 = scmp.ne.s32.totalorder %s204, %s206
      %p213 = scmp.eq.s32.totalorder %s23, 1
      %p214 = por %p212, %p213
      %p215 = scmp.ne.s32.totalorder %s206, %s207
      %p216 = scmp.eq.s32.totalorder %s23, 0
      %p217 = por %p215, %p216
      %p218 = scmp.ne.s32.totalorder %s206, %s207
      %p219 = scmp.eq.s32.totalorder %s24, 1
      %p220 = por %p218, %p219
      %p222 = scmp.ne.s32.totalorder %s207, %s221
      %p223 = scmp.eq.s32.totalorder %s24, 0
      %p224 = por %p222, %p223
      %s225 = ssub.s32 %s18, %s25
      %p226 = scmp.eq.s32.totalorder %s225, 0
      %s228 = sadd.s32 %s227, 1
      %s229 = scalar_select %p226, %s227, %s228
      %p232 = pneg %p226
      %p233 = scmp.eq.s32.totalorder %s18, 1
      %p234 = por %p232, %p233
      %p235 = scmp.ne.s32.totalorder %s227, %s230
      %p236 = scmp.eq.s32.totalorder %s18, 0
      %p237 = por %p235, %p236
      %p238 = scmp.ne.s32.totalorder %s227, %s230
      %p239 = scmp.eq.s32.totalorder %s23, 1
      %p240 = por %p238, %p239
      %p241 = scmp.ne.s32.totalorder %s230, %s231
      %p242 = scmp.eq.s32.totalorder %s23, 0
      %p243 = por %p241, %p242
      %p244 = scmp.ne.s32.totalorder %s230, %s231
      %p245 = scmp.eq.s32.totalorder %s24, 1
      %p246 = por %p244, %p245
      %p248 = scmp.ne.s32.totalorder %s231, %s247
      %p249 = scmp.eq.s32.totalorder %s24, 0
      %p250 = por %p248, %p249
      %p251 = scmp.le.s32.totalorder 1, %s18
      %p252 = scmp.lt.s32.totalorder %s18, 3
      %p253 = pnand %p251, %p252
      %p254 = pneg %p253
      // Predicated region
      $region9: #{tpu_custom_call.1} parent=5 // pred_check
        _
      $region10: #{tpu_custom_call.1} parent=5 // pred_check_branch
        %256 = sbr.rel (%p253) target = $region12
      $region11: #{tpu_custom_call.1} parent=5 // pred_region
        %s257 = ssub.s32 %s18, 1
        // Predicated region
        $region13: #{tpu_custom_call.1} parent=11 // pred_check
          %p258 = pneg %p91
        $region14: #{tpu_custom_call.1} parent=11 // pred_check_branch
          %260 = sbr.rel (%p258) target = $region16
        $region15: #{tpu_custom_call.1} parent=11 // pred_region
          _
        $region16: #{tpu_custom_call.1} parent=11 // pred_fallthru
          _
        // Predicated region
        $region17: #{tpu_custom_call.1} parent=11 // pred_check
          %p261 = pneg %p112
        $region18: #{tpu_custom_call.1} parent=11 // pred_check_branch
          %263 = sbr.rel (%p261) target = $region20
        $region19: #{tpu_custom_call.1} parent=11 // pred_region
          _
        $region20: #{tpu_custom_call.1} parent=11 // pred_fallthru
          _
        // Predicated region
        $region21: #{tpu_custom_call.1} parent=11 // pred_check
          %p264 = pneg %p133
        $region22: #{tpu_custom_call.1} parent=11 // pred_check_branch
          %266 = sbr.rel (%p264) target = $region24
        $region23: #{tpu_custom_call.1} parent=11 // pred_region
          _
        $region24: #{tpu_custom_call.1} parent=11 // pred_fallthru
          _
        // Predicated region
        $region25: #{tpu_custom_call.1} parent=11 // pred_check
          %p267 = pneg %p154
        $region26: #{tpu_custom_call.1} parent=11 // pred_check_branch
          %269 = sbr.rel (%p267) target = $region28
        $region27: #{tpu_custom_call.1} parent=11 // pred_region
          _
        $region28: #{tpu_custom_call.1} parent=11 // pred_fallthru
          _
        // Predicated region
        $region29: #{tpu_custom_call.1} parent=11 // pred_check
          %p270 = pneg %p175
        $region30: #{tpu_custom_call.1} parent=11 // pred_check_branch
          %272 = sbr.rel (%p270) target = $region32
        $region31: #{tpu_custom_call.1} parent=11 // pred_region
          _
        $region32: #{tpu_custom_call.1} parent=11 // pred_fallthru
          _
        // Predicated region
        $region33: #{tpu_custom_call.1} parent=11 // pred_check
          %p273 = pneg %p196
        $region34: #{tpu_custom_call.1} parent=11 // pred_check_branch
          %275 = sbr.rel (%p273) target = $region36
        $region35: #{tpu_custom_call.1} parent=11 // pred_region
          _
        $region36: #{tpu_custom_call.1} parent=11 // pred_fallthru
          _
        // Predicated region
        $region37: #{tpu_custom_call.1} parent=11 // pred_check
          %p276 = pneg %p217
        $region38: #{tpu_custom_call.1} parent=11 // pred_check_branch
          %278 = sbr.rel (%p276) target = $region40
        $region39: #{tpu_custom_call.1} parent=11 // pred_region
          _
        $region40: #{tpu_custom_call.1} parent=11 // pred_fallthru
          _
      $region12: #{tpu_custom_call.1} parent=5 // pred_fallthru
        _
      %p279 = scmp.lt.s32.totalorder %s18, 2
      // Predicated region
      $region41: #{tpu_custom_call.1} parent=5 // pred_check
        %p280 = pneg %p279
      $region42: #{tpu_custom_call.1} parent=5 // pred_check_branch
        %282 = sbr.rel (%p280) target = $region44
      $region43: #{tpu_custom_call.1} parent=5 // pred_region
        // Predicated region
        $region45: #{tpu_custom_call.1} parent=43 // pred_check
          %p283 = pneg %p38
        $region46: #{tpu_custom_call.1} parent=43 // pred_check_branch
          %285 = sbr.rel (%p283) target = $region48
        $region47: #{tpu_custom_call.1} parent=43 // pred_region
          %p286 = scmp.lt.s32.totalorder %s18, 1
          %s287 = scalar_select %p286, %s18, 1
          %s288 = smul.addr %s287, 8
          %s289 = scalar_lea.vmem %s0, %s288
        $region48: #{tpu_custom_call.1} parent=43 // pred_fallthru
          _
        // Predicated region
        $region49: #{tpu_custom_call.1} parent=43 // pred_check
          %p290 = pneg %p64
        $region50: #{tpu_custom_call.1} parent=43 // pred_check_branch
          %292 = sbr.rel (%p290) target = $region52
        $region51: #{tpu_custom_call.1} parent=43 // pred_region
          %p293 = scmp.lt.s32.totalorder %s18, 1
          %s294 = scalar_select %p293, %s18, 1
          %s295 = scalar_lea.vmem %s1, %s294
        $region52: #{tpu_custom_call.1} parent=43 // pred_fallthru
          _
      $region44: #{tpu_custom_call.1} parent=5 // pred_fallthru
        _
      %p296 = scmp.le.s32.totalorder 1, %s18
      %p297 = scmp.lt.s32.totalorder %s18, 3
      %p298 = pnand %p296, %p297
      %p299 = pneg %p298
      // Predicated region
      $region53: #{tpu_custom_call.1} parent=5 // pred_check
        _
      $region54: #{tpu_custom_call.1} parent=5 // pred_check_branch
        %301 = sbr.rel (%p298) target = $region56
      $region55: #{tpu_custom_call.1} parent=5 // pred_region
        %s302 = ssub.s32 %s18, 1
        %p303 = scmp.lt.s32.totalorder %s23, 1
        %s304 = scalar_select %p303, %s23, 1
        %s305 = smul.addr %s304, 8
        %s306 = scalar_lea.vmem %s0, %s305
        %p307 = pneg %p44
        %p308 = pneg %p41
        %p309 = scmp.lt.s32.totalorder %s23, 1
        %s310 = scalar_select %p309, %s23, 1
        %s311 = scalar_lea.vmem %s1, %s310
        %p312 = pneg %p70
        %p313 = pneg %p67
        %p314 = pneg %p91
        %p315 = pneg %p88
        %p316 = pneg %p112
        %p317 = pneg %p109
        %p318 = pneg %p133
        %p319 = pneg %p130
        %p320 = pneg %p154
        %p321 = pneg %p151
        %p322 = pneg %p175
        %p323 = pneg %p172
        %p324 = pneg %p196
        %p325 = pneg %p193
        %p326 = pneg %p217
        %p327 = pneg %p214
        %p328 = pneg %p243
        %p329 = pneg %p240
        %s330 = sand.u32 %s230, 1
        %s331 = scalar_lea.sflag [#allocation3], %s330
        %s332 = sand.u32 %s230, 1
        %s333 = smul.addr %s332, 8
        %s334 = scalar_lea.vmem [#allocation2], %s333
        %p335 = scmp.lt.s32.totalorder %s23, 1
        %s336 = scalar_select %p335, %s23, 1
        %s337 = smul.addr %s336, 8
        %s338 = scalar_lea.vmem %s0, %s337
        %p339 = scmp.lt.s32.totalorder %s23, 1
        %s340 = scalar_select %p339, %s23, 1
        %s341 = scalar_lea.vmem %s1, %s340
        %v343 = vld [vmem:[%s338] sm:$0xff]
        %v344 = vld [vmem:[%s8] sm:$0x3f]
        %v345 = vpack.c.bf16 %v343, %v343
        %v346 = vld [vmem:[%s2] sm:$0xf]
        %v347 = vld [vmem:[%s2 + $0x4] sm:$0xf]
        %v348 = vld [vmem:[%s2 + $0x8] sm:$0xf]
        %v349 = vld [vmem:[%s2 + $0xc] sm:$0xf]
        %v350 = vld [vmem:[%s3] sm:$0x1]
        %v352 = vlaneseq
        %v353 = vshrl.u32 %v352, 7
        %v354 = vsub.s32 0, %v353
        %v355 = vrot.slane %v350, %v354
        %v361 = vunpack.c.l.b16 %v346
        %v362 = vunpack.c.l.b16 %v347
        %v363 = vunpack.c.l.b16 %v348
        %v364 = vunpack.c.l.b16 %v349
        %v365 = vpack.c.b16 %v362, %v361
        %v366 = vpack.c.b16 %v364, %v363
        %vm369 = vcmask 261120
        %v371 = vsel %vm369, %v345, 0
        %373 = vmatprep.subr.bf16.mxu0 0
        %374 = vmatpush1.bf16.msra.mxu0 %v365
        %375 = vmatprep.subr.bf16.mxu0 0
        %376 = vmatpush1.bf16.msra.mxu0 %v366
        %377 = vmatprep.subr.bf16.mxu0 0
        %378 = vmatpush1.bf16.msra.mxu0 0
        %379 = vmatprep.subr.bf16.mxu0 0
        %380 = vmatpush1.bf16.msra.mxu0 0
        %381 = vmatprep.subr.bf16.mxu0 0
        %382 = vmatpush1.bf16.msra.mxu0 0
        %383 = vmatprep.subr.bf16.mxu0 0
        %384 = vmatpush1.bf16.msra.mxu0 0
        %385 = vmatprep.subr.bf16.mxu0 0
        %386 = vmatpush1.bf16.msra.mxu0 0
        %387 = vmatprep.subr.bf16.mxu0 0
        %388 = vmatpush1.bf16.msra.mxu0 0
        %389 = vmatprep.subr.bf16.mxu0 0
        %390 = vmatpush1.bf16.msra.mxu0 0
        %391 = vmatprep.subr.bf16.mxu0 0
        %392 = vmatpush1.bf16.msra.mxu0 0
        %393 = vmatprep.subr.bf16.mxu0 0
        %394 = vmatpush1.bf16.msra.mxu0 0
        %395 = vmatprep.subr.bf16.mxu0 0
        %396 = vmatpush1.bf16.msra.mxu0 0
        %397 = vmatprep.subr.bf16.mxu0 0
        %398 = vmatpush1.bf16.msra.mxu0 0
        %399 = vmatprep.subr.bf16.mxu0 0
        %400 = vmatpush1.bf16.msra.mxu0 0
        %401 = vmatprep.subr.bf16.mxu0 0
        %402 = vmatpush1.bf16.msra.mxu0 0
        %403 = vmatprep.subr.bf16.mxu0 0
        %404 = vmatpush1.bf16.msra.mxu0 0
        %405 = vmatprep.mubr.bf16.mxu0 0
        %406 = vmatmul.mubr.bf16.gmra.mrb[0].mxu0 %v371
        %v407 = vpop.f32.mrb[0].mxu0
        %v408 = vadd.f32 %v355, %v407
        %v409 = vpop.f32.mrb[0].mxu0
        %v410 = vpop.f32.mrb[0].mxu0
        %v411 = vpop.f32.mrb[0].mxu0
        %412 = vdwg.mxu0
        %414 = vrot.lane.b32.xlu0 %v408, 120
        %v415 = vpop.permute.xlu0 %414
        %417 = vrot.lane.b32.xlu0 %v408, 112
        %v418 = vpop.permute.xlu0 %417
        %420 = vrot.lane.b32.xlu0 %v408, 104
        %v421 = vpop.permute.xlu0 %420
        %v423 = vpack.c.bf16 %v408, %v408
        %v424 = vpack.c.bf16 %v415, %v415
        %v425 = vpack.c.bf16 %v418, %v418
        %v426 = vpack.c.bf16 %v421, %v421
        %v427 = vld [vmem:[%s341] sm:$0x1]
        %vm428 = vcmp.gt.f32.partialorder %v427, 0.5
        %v429 = vsel %vm428, 0.0, -1e+30
        %v431 = vlaneseq
        %v432 = vshrl.u32 %v431, 7
        %v433 = vsub.s32 0, %v432
        %v434 = vrot.slane %v429, %v433
        %437 = vrot.lane.b32.xlu0 %v423, 96
        %v438 = vpop.permute.xlu0 %437
        %vm439 = vcmask 64512
        %v441 = vsel %vm439, %v423, 0
        %v444 = vsel %vm439, %v438, 0
        %446 = vmatprep.subr.bf16.mxu0 0
        %447 = vmatpush1.bf16.xpose.msra.mxu0 %v444
        %448 = vmatprep.subr.bf16.mxu0 0
        %449 = vmatpush1.bf16.xpose.msra.mxu0 0
        %450 = vmatprep.subr.bf16.mxu0 0
        %451 = vmatpush1.bf16.xpose.msra.mxu0 0
        %452 = vmatprep.subr.bf16.mxu0 0
        %453 = vmatpush1.bf16.xpose.msra.mxu0 0
        %454 = vmatprep.subr.bf16.mxu0 0
        %455 = vmatpush1.bf16.xpose.msra.mxu0 0
        %456 = vmatprep.subr.bf16.mxu0 0
        %457 = vmatpush1.bf16.xpose.msra.mxu0 0
        %458 = vmatprep.subr.bf16.mxu0 0
        %459 = vmatpush1.bf16.xpose.msra.mxu0 0
        %460 = vmatprep.subr.bf16.mxu0 0
        %461 = vmatpush1.bf16.xpose.msra.mxu0 0
        %462 = vmatprep.subr.bf16.mxu0 0
        %463 = vmatpush1.bf16.xpose.msra.mxu0 0
        %464 = vmatprep.subr.bf16.mxu0 0
        %465 = vmatpush1.bf16.xpose.msra.mxu0 0
        %466 = vmatprep.subr.bf16.mxu0 0
        %467 = vmatpush1.bf16.xpose.msra.mxu0 0
        %468 = vmatprep.subr.bf16.mxu0 0
        %469 = vmatpush1.bf16.xpose.msra.mxu0 0
        %470 = vmatprep.subr.bf16.mxu0 0
        %471 = vmatpush1.bf16.xpose.msra.mxu0 0
        %472 = vmatprep.subr.bf16.mxu0 0
        %473 = vmatpush1.bf16.xpose.msra.mxu0 0
        %474 = vmatprep.subr.bf16.mxu0 0
        %475 = vmatpush1.bf16.xpose.msra.mxu0 0
        %476 = vmatprep.subr.bf16.mxu0 0
        %477 = vmatpush1.bf16.xpose.msra.mxu0 0
        %478 = vmatprep.mubr.bf16.mxu0 0
        %479 = vmatmul.mubr.bf16.gmra.mrb[0].mxu0 %v441
        %v480 = vpop.f32.mrb[0].mxu0
        %v481 = vadd.f32 %v434, %v480
        %v482 = vpop.f32.mrb[0].mxu0
        %v483 = vpop.f32.mrb[0].mxu0
        %v484 = vpop.f32.mrb[0].mxu0
        %485 = vdwg.mxu0
        %487 = vrot.lane.b32.xlu0 %v424, 96
        %v488 = vpop.permute.xlu0 %487
        %v490 = vsel %vm439, %v424, 0
        %v493 = vsel %vm439, %v488, 0
        %495 = vmatprep.subr.bf16.mxu0 0
        %496 = vmatpush1.bf16.xpose.msra.mxu0 %v493
        %497 = vmatprep.subr.bf16.mxu0 0
        %498 = vmatpush1.bf16.xpose.msra.mxu0 0
        %499 = vmatprep.subr.bf16.mxu0 0
        %500 = vmatpush1.bf16.xpose.msra.mxu0 0
        %501 = vmatprep.subr.bf16.mxu0 0
        %502 = vmatpush1.bf16.xpose.msra.mxu0 0
        %503 = vmatprep.subr.bf16.mxu0 0
        %504 = vmatpush1.bf16.xpose.msra.mxu0 0
        %505 = vmatprep.subr.bf16.mxu0 0
        %506 = vmatpush1.bf16.xpose.msra.mxu0 0
        %507 = vmatprep.subr.bf16.mxu0 0
        %508 = vmatpush1.bf16.xpose.msra.mxu0 0
        %509 = vmatprep.subr.bf16.mxu0 0
        %510 = vmatpush1.bf16.xpose.msra.mxu0 0
        %511 = vmatprep.subr.bf16.mxu0 0
        %512 = vmatpush1.bf16.xpose.msra.mxu0 0
        %513 = vmatprep.subr.bf16.mxu0 0
        %514 = vmatpush1.bf16.xpose.msra.mxu0 0
        %515 = vmatprep.subr.bf16.mxu0 0
        %516 = vmatpush1.bf16.xpose.msra.mxu0 0
        %517 = vmatprep.subr.bf16.mxu0 0
        %518 = vmatpush1.bf16.xpose.msra.mxu0 0
        %519 = vmatprep.subr.bf16.mxu0 0
        %520 = vmatpush1.bf16.xpose.msra.mxu0 0
        %521 = vmatprep.subr.bf16.mxu0 0
        %522 = vmatpush1.bf16.xpose.msra.mxu0 0
        %523 = vmatprep.subr.bf16.mxu0 0
        %524 = vmatpush1.bf16.xpose.msra.mxu0 0
        %525 = vmatprep.subr.bf16.mxu0 0
        %526 = vmatpush1.bf16.xpose.msra.mxu0 0
        %527 = vmatprep.mubr.bf16.mxu0 0
        %528 = vmatmul.mubr.bf16.gmra.mrb[0].mxu0 %v490
        %v529 = vpop.f32.mrb[0].mxu0
        %v530 = vadd.f32 %v434, %v529
        %v531 = vpop.f32.mrb[0].mxu0
        %v532 = vpop.f32.mrb[0].mxu0
        %v533 = vpop.f32.mrb[0].mxu0
        %534 = vdwg.mxu0
        %536 = vrot.lane.b32.xlu0 %v425, 96
        %v537 = vpop.permute.xlu0 %536
        %v539 = vsel %vm439, %v425, 0
        %v542 = vsel %vm439, %v537, 0
        %544 = vmatprep.subr.bf16.mxu0 0
        %545 = vmatpush1.bf16.xpose.msra.mxu0 %v542
        %546 = vmatprep.subr.bf16.mxu0 0
        %547 = vmatpush1.bf16.xpose.msra.mxu0 0
        %548 = vmatprep.subr.bf16.mxu0 0
        %549 = vmatpush1.bf16.xpose.msra.mxu0 0
        %550 = vmatprep.subr.bf16.mxu0 0
        %551 = vmatpush1.bf16.xpose.msra.mxu0 0
        %552 = vmatprep.subr.bf16.mxu0 0
        %553 = vmatpush1.bf16.xpose.msra.mxu0 0
        %554 = vmatprep.subr.bf16.mxu0 0
        %555 = vmatpush1.bf16.xpose.msra.mxu0 0
        %556 = vmatprep.subr.bf16.mxu0 0
        %557 = vmatpush1.bf16.xpose.msra.mxu0 0
        %558 = vmatprep.subr.bf16.mxu0 0
        %559 = vmatpush1.bf16.xpose.msra.mxu0 0
        %560 = vmatprep.subr.bf16.mxu0 0
        %561 = vmatpush1.bf16.xpose.msra.mxu0 0
        %562 = vmatprep.subr.bf16.mxu0 0
        %563 = vmatpush1.bf16.xpose.msra.mxu0 0
        %564 = vmatprep.subr.bf16.mxu0 0
        %565 = vmatpush1.bf16.xpose.msra.mxu0 0
        %566 = vmatprep.subr.bf16.mxu0 0
        %567 = vmatpush1.bf16.xpose.msra.mxu0 0
        %568 = vmatprep.subr.bf16.mxu0 0
        %569 = vmatpush1.bf16.xpose.msra.mxu0 0
        %570 = vmatprep.subr.bf16.mxu0 0
        %571 = vmatpush1.bf16.xpose.msra.mxu0 0
        %572 = vmatprep.subr.bf16.mxu0 0
        %573 = vmatpush1.bf16.xpose.msra.mxu0 0
        %574 = vmatprep.subr.bf16.mxu0 0
        %575 = vmatpush1.bf16.xpose.msra.mxu0 0
        %576 = vmatprep.mubr.bf16.mxu0 0
        %577 = vmatmul.mubr.bf16.gmra.mrb[0].mxu0 %v539
        %v578 = vpop.f32.mrb[0].mxu0
        %v579 = vadd.f32 %v434, %v578
        %v580 = vpop.f32.mrb[0].mxu0
        %v581 = vpop.f32.mrb[0].mxu0
        %v582 = vpop.f32.mrb[0].mxu0
        %583 = vdwg.mxu0
        %585 = vrot.lane.b32.xlu0 %v426, 96
        %v586 = vpop.permute.xlu0 %585
        %v588 = vsel %vm439, %v426, 0
        %v591 = vsel %vm439, %v586, 0
        %593 = vmatprep.subr.bf16.mxu0 0
        %594 = vmatpush1.bf16.xpose.msra.mxu0 %v591
        %595 = vmatprep.subr.bf16.mxu0 0
        %596 = vmatpush1.bf16.xpose.msra.mxu0 0
        %597 = vmatprep.subr.bf16.mxu0 0
        %598 = vmatpush1.bf16.xpose.msra.mxu0 0
        %599 = vmatprep.subr.bf16.mxu0 0
        %600 = vmatpush1.bf16.xpose.msra.mxu0 0
        %601 = vmatprep.subr.bf16.mxu0 0
        %602 = vmatpush1.bf16.xpose.msra.mxu0 0
        %603 = vmatprep.subr.bf16.mxu0 0
        %604 = vmatpush1.bf16.xpose.msra.mxu0 0
        %605 = vmatprep.subr.bf16.mxu0 0
        %606 = vmatpush1.bf16.xpose.msra.mxu0 0
        %607 = vmatprep.subr.bf16.mxu0 0
        %608 = vmatpush1.bf16.xpose.msra.mxu0 0
        %609 = vmatprep.subr.bf16.mxu0 0
        %610 = vmatpush1.bf16.xpose.msra.mxu0 0
        %611 = vmatprep.subr.bf16.mxu0 0
        %612 = vmatpush1.bf16.xpose.msra.mxu0 0
        %613 = vmatprep.subr.bf16.mxu0 0
        %614 = vmatpush1.bf16.xpose.msra.mxu0 0
        %615 = vmatprep.subr.bf16.mxu0 0
        %616 = vmatpush1.bf16.xpose.msra.mxu0 0
        %617 = vmatprep.subr.bf16.mxu0 0
        %618 = vmatpush1.bf16.xpose.msra.mxu0 0
        %619 = vmatprep.subr.bf16.mxu0 0
        %620 = vmatpush1.bf16.xpose.msra.mxu0 0
        %621 = vmatprep.subr.bf16.mxu0 0
        %622 = vmatpush1.bf16.xpose.msra.mxu0 0
        %623 = vmatprep.subr.bf16.mxu0 0
        %624 = vmatpush1.bf16.xpose.msra.mxu0 0
        %625 = vmatprep.mubr.bf16.mxu0 0
        %626 = vmatmul.mubr.bf16.gmra.mrb[0].mxu0 %v588
        %v627 = vpop.f32.mrb[0].mxu0
        %v628 = vadd.f32 %v434, %v627
        %v629 = vpop.f32.mrb[0].mxu0
        %v630 = vpop.f32.mrb[0].mxu0
        %v631 = vpop.f32.mrb[0].mxu0
        %632 = vdwg.mxu0
        %v633 = vsel %vm439, %v481, -inf
        %634 = vmax.xlane.f32.xlu0 %v633
        %v635 = vpop.xlane.xlu0 %634
        %v636 = vsel %vm439, %v530, -inf
        %637 = vmax.xlane.f32.xlu0 %v636
        %v638 = vpop.xlane.xlu0 %637
        %v639 = vsel %vm439, %v579, -inf
        %640 = vmax.xlane.f32.xlu0 %v639
        %v641 = vpop.xlane.xlu0 %640
        %v642 = vsel %vm439, %v628, -inf
        %643 = vmax.xlane.f32.xlu0 %v642
        %v644 = vpop.xlane.xlu0 %643
        %v645 = vsub.f32 %v481, %v635
        %v646 = vsub.f32 %v530, %v638
        %v647 = vsub.f32 %v579, %v641
        %v648 = vsub.f32 %v628, %v644
        %v649 = vmul.f32 %v645, 1.442695
        %v650 = vpow.pop %v649
        %v651 = vmul.f32 %v646, 1.442695
        %v652 = vpow.pop %v651
        %v653 = vmul.f32 %v647, 1.442695
        %v654 = vpow.pop %v653
        %v655 = vmul.f32 %v648, 1.442695
        %v656 = vpow.pop %v655
        %v657 = vsel %vm439, %v650, 0.0
        %658 = vadd.xlane.f32.xlu0 %v657
        %v659 = vpop.xlane.xlu0 %658
        %v660 = vsel %vm439, %v652, 0.0
        %661 = vadd.xlane.f32.xlu0 %v660
        %v662 = vpop.xlane.xlu0 %661
        %v663 = vsel %vm439, %v654, 0.0
        %664 = vadd.xlane.f32.xlu0 %v663
        %v665 = vpop.xlane.xlu0 %664
        %v666 = vsel %vm439, %v656, 0.0
        %667 = vadd.xlane.f32.xlu0 %v666
        %v668 = vpop.xlane.xlu0 %667
        %v669 = vrcp.pop %v659
        %v670 = vrcp.pop %v662
        %v671 = vrcp.pop %v665
        %v672 = vrcp.pop %v668
        %v673 = vmul.f32 %v650, %v669
        %v674 = vmul.f32 %v652, %v670
        %v675 = vmul.f32 %v654, %v671
        %v676 = vmul.f32 %v656, %v672
        %v677 = vpack.c.bf16 %v673, %v673
        %v678 = vpack.c.bf16 %v674, %v674
        %v679 = vpack.c.bf16 %v675, %v675
        %v680 = vpack.c.bf16 %v676, %v676
        %681 = vrot.lane.b32.xlu0 %v423, 64
        %v682 = vpop.permute.xlu0 %681
        %v684 = vsel %vm439, %v677, 0
        %vm686 = vcmask 1043456
        %v688 = vsel %vm686, %v682, 0
        %690 = vmatprep.subr.bf16.mxu0 0
        %691 = vmatpush1.bf16.msra.mxu0 %v688
        %692 = vmatprep.subr.bf16.mxu0 0
        %693 = vmatpush1.bf16.msra.mxu0 0
        %694 = vmatprep.subr.bf16.mxu0 0
        %695 = vmatpush1.bf16.msra.mxu0 0
        %696 = vmatprep.subr.bf16.mxu0 0
        %697 = vmatpush1.bf16.msra.mxu0 0
        %698 = vmatprep.subr.bf16.mxu0 0
        %699 = vmatpush1.bf16.msra.mxu0 0
        %700 = vmatprep.subr.bf16.mxu0 0
        %701 = vmatpush1.bf16.msra.mxu0 0
        %702 = vmatprep.subr.bf16.mxu0 0
        %703 = vmatpush1.bf16.msra.mxu0 0
        %704 = vmatprep.subr.bf16.mxu0 0
        %705 = vmatpush1.bf16.msra.mxu0 0
        %706 = vmatprep.subr.bf16.mxu0 0
        %707 = vmatpush1.bf16.msra.mxu0 0
        %708 = vmatprep.subr.bf16.mxu0 0
        %709 = vmatpush1.bf16.msra.mxu0 0
        %710 = vmatprep.subr.bf16.mxu0 0
        %711 = vmatpush1.bf16.msra.mxu0 0
        %712 = vmatprep.subr.bf16.mxu0 0
        %713 = vmatpush1.bf16.msra.mxu0 0
        %714 = vmatprep.subr.bf16.mxu0 0
        %715 = vmatpush1.bf16.msra.mxu0 0
        %716 = vmatprep.subr.bf16.mxu0 0
        %717 = vmatpush1.bf16.msra.mxu0 0
        %718 = vmatprep.subr.bf16.mxu0 0
        %719 = vmatpush1.bf16.msra.mxu0 0
        %720 = vmatprep.subr.bf16.mxu0 0
        %721 = vmatpush1.bf16.msra.mxu0 0
        %722 = vmatprep.mubr.bf16.mxu0 0
        %723 = vmatmul.mubr.bf16.gmra.mrb[0].mxu0 %v684
        %v724 = vpop.f32.mrb[0].mxu0
        %v725 = vadd.f32 0.0, %v724
        %v726 = vpop.f32.mrb[0].mxu0
        %v727 = vpop.f32.mrb[0].mxu0
        %v728 = vpop.f32.mrb[0].mxu0
        %729 = vdwg.mxu0
        %730 = vrot.lane.b32.xlu0 %v424, 64
        %v731 = vpop.permute.xlu0 %730
        %v733 = vsel %vm439, %v678, 0
        %v736 = vsel %vm686, %v731, 0
        %738 = vmatprep.subr.bf16.mxu0 0
        %739 = vmatpush1.bf16.msra.mxu0 %v736
        %740 = vmatprep.subr.bf16.mxu0 0
        %741 = vmatpush1.bf16.msra.mxu0 0
        %742 = vmatprep.subr.bf16.mxu0 0
        %743 = vmatpush1.bf16.msra.mxu0 0
        %744 = vmatprep.subr.bf16.mxu0 0
        %745 = vmatpush1.bf16.msra.mxu0 0
        %746 = vmatprep.subr.bf16.mxu0 0
        %747 = vmatpush1.bf16.msra.mxu0 0
        %748 = vmatprep.subr.bf16.mxu0 0
        %749 = vmatpush1.bf16.msra.mxu0 0
        %750 = vmatprep.subr.bf16.mxu0 0
        %751 = vmatpush1.bf16.msra.mxu0 0
        %752 = vmatprep.subr.bf16.mxu0 0
        %753 = vmatpush1.bf16.msra.mxu0 0
        %754 = vmatprep.subr.bf16.mxu0 0
        %755 = vmatpush1.bf16.msra.mxu0 0
        %756 = vmatprep.subr.bf16.mxu0 0
        %757 = vmatpush1.bf16.msra.mxu0 0
        %758 = vmatprep.subr.bf16.mxu0 0
        %759 = vmatpush1.bf16.msra.mxu0 0
        %760 = vmatprep.subr.bf16.mxu0 0
        %761 = vmatpush1.bf16.msra.mxu0 0
        %762 = vmatprep.subr.bf16.mxu0 0
        %763 = vmatpush1.bf16.msra.mxu0 0
        %764 = vmatprep.subr.bf16.mxu0 0
        %765 = vmatpush1.bf16.msra.mxu0 0
        %766 = vmatprep.subr.bf16.mxu0 0
        %767 = vmatpush1.bf16.msra.mxu0 0
        %768 = vmatprep.subr.bf16.mxu0 0
        %769 = vmatpush1.bf16.msra.mxu0 0
        %770 = vmatprep.mubr.bf16.mxu0 0
        %771 = vmatmul.mubr.bf16.gmra.mrb[0].mxu0 %v733
        %v772 = vpop.f32.mrb[0].mxu0
        %v773 = vadd.f32 0.0, %v772
        %v774 = vpop.f32.mrb[0].mxu0
        %v775 = vpop.f32.mrb[0].mxu0
        %v776 = vpop.f32.mrb[0].mxu0
        %777 = vdwg.mxu0
        %778 = vrot.lane.b32.xlu0 %v425, 64
        %v779 = vpop.permute.xlu0 %778
        %v781 = vsel %vm439, %v679, 0
        %v784 = vsel %vm686, %v779, 0
        %786 = vmatprep.subr.bf16.mxu0 0
        %787 = vmatpush1.bf16.msra.mxu0 %v784
        %788 = vmatprep.subr.bf16.mxu0 0
        %789 = vmatpush1.bf16.msra.mxu0 0
        %790 = vmatprep.subr.bf16.mxu0 0
        %791 = vmatpush1.bf16.msra.mxu0 0
        %792 = vmatprep.subr.bf16.mxu0 0
        %793 = vmatpush1.bf16.msra.mxu0 0
        %794 = vmatprep.subr.bf16.mxu0 0
        %795 = vmatpush1.bf16.msra.mxu0 0
        %796 = vmatprep.subr.bf16.mxu0 0
        %797 = vmatpush1.bf16.msra.mxu0 0
        %798 = vmatprep.subr.bf16.mxu0 0
        %799 = vmatpush1.bf16.msra.mxu0 0
        %800 = vmatprep.subr.bf16.mxu0 0
        %801 = vmatpush1.bf16.msra.mxu0 0
        %802 = vmatprep.subr.bf16.mxu0 0
        %803 = vmatpush1.bf16.msra.mxu0 0
        %804 = vmatprep.subr.bf16.mxu0 0
        %805 = vmatpush1.bf16.msra.mxu0 0
        %806 = vmatprep.subr.bf16.mxu0 0
        %807 = vmatpush1.bf16.msra.mxu0 0
        %808 = vmatprep.subr.bf16.mxu0 0
        %809 = vmatpush1.bf16.msra.mxu0 0
        %810 = vmatprep.subr.bf16.mxu0 0
        %811 = vmatpush1.bf16.msra.mxu0 0
        %812 = vmatprep.subr.bf16.mxu0 0
        %813 = vmatpush1.bf16.msra.mxu0 0
        %814 = vmatprep.subr.bf16.mxu0 0
        %815 = vmatpush1.bf16.msra.mxu0 0
        %816 = vmatprep.subr.bf16.mxu0 0
        %817 = vmatpush1.bf16.msra.mxu0 0
        %818 = vmatprep.mubr.bf16.mxu0 0
        %819 = vmatmul.mubr.bf16.gmra.mrb[0].mxu0 %v781
        %v820 = vpop.f32.mrb[0].mxu0
        %v821 = vadd.f32 0.0, %v820
        %v822 = vpop.f32.mrb[0].mxu0
        %v823 = vpop.f32.mrb[0].mxu0
        %v824 = vpop.f32.mrb[0].mxu0
        %825 = vdwg.mxu0
        %826 = vrot.lane.b32.xlu0 %v426, 64
        %v827 = vpop.permute.xlu0 %826
        %v829 = vsel %vm439, %v680, 0
        %v832 = vsel %vm686, %v827, 0
        %834 = vmatprep.subr.bf16.mxu0 0
        %835 = vmatpush1.bf16.msra.mxu0 %v832
        %836 = vmatprep.subr.bf16.mxu0 0
        %837 = vmatpush1.bf16.msra.mxu0 0
        %838 = vmatprep.subr.bf16.mxu0 0
        %839 = vmatpush1.bf16.msra.mxu0 0
        %840 = vmatprep.subr.bf16.mxu0 0
        %841 = vmatpush1.bf16.msra.mxu0 0
        %842 = vmatprep.subr.bf16.mxu0 0
        %843 = vmatpush1.bf16.msra.mxu0 0
        %844 = vmatprep.subr.bf16.mxu0 0
        %845 = vmatpush1.bf16.msra.mxu0 0
        %846 = vmatprep.subr.bf16.mxu0 0
        %847 = vmatpush1.bf16.msra.mxu0 0
        %848 = vmatprep.subr.bf16.mxu0 0
        %849 = vmatpush1.bf16.msra.mxu0 0
        %850 = vmatprep.subr.bf16.mxu0 0
        %851 = vmatpush1.bf16.msra.mxu0 0
        %852 = vmatprep.subr.bf16.mxu0 0
        %853 = vmatpush1.bf16.msra.mxu0 0
        %854 = vmatprep.subr.bf16.mxu0 0
        %855 = vmatpush1.bf16.msra.mxu0 0
        %856 = vmatprep.subr.bf16.mxu0 0
        %857 = vmatpush1.bf16.msra.mxu0 0
        %858 = vmatprep.subr.bf16.mxu0 0
        %859 = vmatpush1.bf16.msra.mxu0 0
        %860 = vmatprep.subr.bf16.mxu0 0
        %861 = vmatpush1.bf16.msra.mxu0 0
        %862 = vmatprep.subr.bf16.mxu0 0
        %863 = vmatpush1.bf16.msra.mxu0 0
        %864 = vmatprep.subr.bf16.mxu0 0
        %865 = vmatpush1.bf16.msra.mxu0 0
        %866 = vmatprep.mubr.bf16.mxu0 0
        %867 = vmatmul.mubr.bf16.gmra.mrb[0].mxu0 %v829
        %v868 = vpop.f32.mrb[0].mxu0
        %v869 = vadd.f32 0.0, %v868
        %v870 = vpop.f32.mrb[0].mxu0
        %v871 = vpop.f32.mrb[0].mxu0
        %v872 = vpop.f32.mrb[0].mxu0
        %873 = vdwg.mxu0
        %875 = vrot.lane.b32.xlu0 %v773, 8
        %v876 = vpop.permute.xlu0 %875
        %879 = vrot.lane.b32.xlu0 %v821, 16
        %v880 = vpop.permute.xlu0 %879
        %883 = vrot.lane.b32.xlu0 %v869, 24
        %v884 = vpop.permute.xlu0 %883
        %v886 = vsel %vm439, %v725, %v876
        %vm887 = vcmask 130048
        %v888 = vsel %vm887, %v886, %v880
        %vm889 = vcmask 195584
        %v890 = vsel %vm889, %v888, %v884
        %v891 = vpack.c.bf16 %v890, %v890
        %v892 = vld [vmem:[%s4] sm:$0xf]
        %v893 = vld [vmem:[%s4 + $0x4] sm:$0xf]
        %v894 = vld [vmem:[%s4 + $0x8] sm:$0xf]
        %v895 = vld [vmem:[%s4 + $0xc] sm:$0xf]
        %v896 = vlaneseq
        %v897 = vshrl.u32 %v896, 7
        %v898 = vsub.s32 0, %v897
        %v899 = vrot.slane %v344, %v898
        %v904 = vunpack.c.l.b16 %v892
        %v905 = vunpack.c.l.b16 %v893
        %v906 = vunpack.c.l.b16 %v894
        %v907 = vunpack.c.l.b16 %v895
        %v908 = vpack.c.b16 %v905, %v904
        %v909 = vpack.c.b16 %v907, %v906
        %v913 = vsel %vm369, %v891, 0
        %915 = vmatprep.subr.bf16.mxu0 0
        %916 = vmatpush1.bf16.msra.mxu0 %v908
        %917 = vmatprep.subr.bf16.mxu0 0
        %918 = vmatpush1.bf16.msra.mxu0 %v909
        %919 = vmatprep.subr.bf16.mxu0 0
        %920 = vmatpush1.bf16.msra.mxu0 0
        %921 = vmatprep.subr.bf16.mxu0 0
        %922 = vmatpush1.bf16.msra.mxu0 0
        %923 = vmatprep.subr.bf16.mxu0 0
        %924 = vmatpush1.bf16.msra.mxu0 0
        %925 = vmatprep.subr.bf16.mxu0 0
        %926 = vmatpush1.bf16.msra.mxu0 0
        %927 = vmatprep.subr.bf16.mxu0 0
        %928 = vmatpush1.bf16.msra.mxu0 0
        %929 = vmatprep.subr.bf16.mxu0 0
        %930 = vmatpush1.bf16.msra.mxu0 0
        %931 = vmatprep.subr.bf16.mxu0 0
        %932 = vmatpush1.bf16.msra.mxu0 0
        %933 = vmatprep.subr.bf16.mxu0 0
        %934 = vmatpush1.bf16.msra.mxu0 0
        %935 = vmatprep.subr.bf16.mxu0 0
        %936 = vmatpush1.bf16.msra.mxu0 0
        %937 = vmatprep.subr.bf16.mxu0 0
        %938 = vmatpush1.bf16.msra.mxu0 0
        %939 = vmatprep.subr.bf16.mxu0 0
        %940 = vmatpush1.bf16.msra.mxu0 0
        %941 = vmatprep.subr.bf16.mxu0 0
        %942 = vmatpush1.bf16.msra.mxu0 0
        %943 = vmatprep.subr.bf16.mxu0 0
        %944 = vmatpush1.bf16.msra.mxu0 0
        %945 = vmatprep.subr.bf16.mxu0 0
        %946 = vmatpush1.bf16.msra.mxu0 0
        %947 = vmatprep.mubr.bf16.mxu0 0
        %948 = vmatmul.mubr.bf16.gmra.mrb[0].mxu0 %v913
        %v949 = vpop.f32.mrb[0].mxu0
        %v950 = vadd.f32 %v899, %v949
        %v951 = vpop.f32.mrb[0].mxu0
        %v952 = vpop.f32.mrb[0].mxu0
        %v953 = vpop.f32.mrb[0].mxu0
        %954 = vdwg.mxu0
        %v955 = vadd.f32 %v343, %v950
        %v956 = vsel %vm369, %v955, 0.0
        %957 = vadd.xlane.f32.xlu0 %v956
        %v958 = vpop.xlane.xlu0 %957
        %v959 = vrcp.pop 32.0
        %v960 = vmul.f32 %v958, %v959
        %v961 = vsub.f32 %v955, %v960
        %v962 = vmul.f32 %v961, %v961
        %v963 = vsel %vm369, %v962, 0.0
        %964 = vadd.xlane.f32.xlu0 %v963
        %v965 = vpop.xlane.xlu0 %964
        %v966 = vmul.f32 %v965, %v959
        %v967 = vadd.f32 %v966, 1e-05
        %v968 = vrsqrt.pop %v967
        %v969 = vmul.f32 %v961, %v968
        %v970 = vlaneseq
        %v971 = vshrl.u32 %v970, 7
        %v972 = vsub.s32 2, %v971
        %v973 = vrot.slane %v344, %v972
        %v974 = vmul.f32 %v969, %v973
        %v975 = vlaneseq
        %v976 = vshrl.u32 %v975, 7
        %v977 = vsub.s32 3, %v976
        %v978 = vrot.slane %v344, %v977
        %v979 = vadd.f32 %v974, %v978
        %v980 = vpack.c.bf16 %v979, %v979
        %v981 = vld [vmem:[%s5] sm:$0xff]
        %v982 = vld [vmem:[%s5 + $0x8] sm:$0xff]
        %v983 = vld [vmem:[%s5 + $0x10] sm:$0xff]
        %v984 = vld [vmem:[%s5 + $0x18] sm:$0xff]
        %v985 = vld [vmem:[%s7] sm:$0x3]
        %v987 = vlaneseq
        %v988 = vshrl.u32 %v987, 7
        %v989 = vsub.s32 0, %v988
        %v990 = vrot.slane %v985, %v989
        %v991 = vlaneseq
        %v992 = vshrl.u32 %v991, 7
        %v993 = vsub.s32 1, %v992
        %v994 = vrot.slane %v985, %v993
        %v1001 = vunpack.c.l.b16 %v981
        %v1002 = vunpack.c.h.b16 %v981
        %v1003 = vunpack.c.l.b16 %v982
        %v1004 = vunpack.c.h.b16 %v982
        %v1005 = vunpack.c.l.b16 %v983
        %v1006 = vunpack.c.h.b16 %v983
        %v1007 = vunpack.c.l.b16 %v984
        %v1008 = vunpack.c.h.b16 %v984
        %v1009 = vpack.c.b16 %v1003, %v1001
        %v1010 = vpack.c.b16 %v1004, %v1002
        %v1011 = vpack.c.b16 %v1007, %v1005
        %v1012 = vpack.c.b16 %v1008, %v1006
        %v1018 = vsel %vm369, %v980, 0
        %1020 = vmatprep.subr.bf16.mxu0 %v1010
        %1021 = vmatpush1.bf16.msra.mxu0 %v1009
        %1022 = vmatprep.subr.bf16.mxu0 %v1012
        %1023 = vmatpush1.bf16.msra.mxu0 %v1011
        %1024 = vmatprep.subr.bf16.mxu0 0
        %1025 = vmatpush1.bf16.msra.mxu0 0
        %1026 = vmatprep.subr.bf16.mxu0 0
        %1027 = vmatpush1.bf16.msra.mxu0 0
        %1028 = vmatprep.subr.bf16.mxu0 0
        %1029 = vmatpush1.bf16.msra.mxu0 0
        %1030 = vmatprep.subr.bf16.mxu0 0
        %1031 = vmatpush1.bf16.msra.mxu0 0
        %1032 = vmatprep.subr.bf16.mxu0 0
        %1033 = vmatpush1.bf16.msra.mxu0 0
        %1034 = vmatprep.subr.bf16.mxu0 0
        %1035 = vmatpush1.bf16.msra.mxu0 0
        %1036 = vmatprep.subr.bf16.mxu0 0
        %1037 = vmatpush1.bf16.msra.mxu0 0
        %1038 = vmatprep.subr.bf16.mxu0 0
        %1039 = vmatpush1.bf16.msra.mxu0 0
        %1040 = vmatprep.subr.bf16.mxu0 0
        %1041 = vmatpush1.bf16.msra.mxu0 0
        %1042 = vmatprep.subr.bf16.mxu0 0
        %1043 = vmatpush1.bf16.msra.mxu0 0
        %1044 = vmatprep.subr.bf16.mxu0 0
        %1045 = vmatpush1.bf16.msra.mxu0 0
        %1046 = vmatprep.subr.bf16.mxu0 0
        %1047 = vmatpush1.bf16.msra.mxu0 0
        %1048 = vmatprep.subr.bf16.mxu0 0
        %1049 = vmatpush1.bf16.msra.mxu0 0
        %1050 = vmatprep.subr.bf16.mxu0 0
        %1051 = vmatpush1.bf16.msra.mxu0 0
        %1052 = vmatprep.mubr.bf16.mxu0 0
        %1053 = vmatmul.mubr.bf16.gmra.mrb[0].mxu0 %v1018
        %v1054 = vpop.f32.mrb[0].mxu0
        %v1055 = vadd.f32 %v990, %v1054
        %v1056 = vpop.f32.mrb[0].mxu0
        %v1057 = vadd.f32 %v994, %v1056
        %v1058 = vpop.f32.mrb[0].mxu0
        %v1059 = vpop.f32.mrb[0].mxu0
        %1060 = vdwg.mxu0
        %v1061 = vxor.u32 %v1057, 2147483648
        %v1062 = vmul.f32 %v1061, 1.442695
        %v1063 = vpow.pop %v1062
        %v1064 = vadd.f32 %v1063, 1.0
        %v1065 = vrcp.pop %v1064
        %v1066 = vmul.f32 1.0, %v1065
        %1068 = vset.pattern.permute.xlu0 0
        %1069 = vperm.xlu0 %1068, %v1066
        %v1070 = vpop.permute.xlu0 %1069
        %v1072 = vmul.f32 %v1055, %v1070
        %v1073 = vmul.f32 %v1057, %v1070
        %v1074 = vmax.f32 %v1072, 0.0
        %v1075 = vmax.f32 %v1073, 0.0
        %v1076 = vpack.c.bf16 %v1074, %v1074
        %v1077 = vpack.c.bf16 %v1075, %v1075
        %v1078 = vld [vmem:[%s6] sm:$0xf]
        %v1079 = vld [vmem:[%s6 + $0x4] sm:$0xf]
        %v1080 = vld [vmem:[%s6 + $0x8] sm:$0xf]
        %v1081 = vld [vmem:[%s6 + $0xc] sm:$0xf]
        %v1082 = vld [vmem:[%s6 + $0x10] sm:$0xf]
        %v1083 = vld [vmem:[%s6 + $0x14] sm:$0xf]
        %v1084 = vld [vmem:[%s6 + $0x18] sm:$0xf]
        %v1085 = vld [vmem:[%s6 + $0x1c] sm:$0xf]
        %v1086 = vld [vmem:[%s6 + $0x20] sm:$0xf]
        %v1087 = vld [vmem:[%s6 + $0x24] sm:$0xf]
        %v1088 = vld [vmem:[%s6 + $0x28] sm:$0xf]
        %v1089 = vld [vmem:[%s6 + $0x2c] sm:$0xf]
        %v1090 = vld [vmem:[%s6 + $0x30] sm:$0xf]
        %v1091 = vld [vmem:[%s6 + $0x34] sm:$0xf]
        %v1092 = vld [vmem:[%s6 + $0x38] sm:$0xf]
        %v1093 = vld [vmem:[%s6 + $0x3c] sm:$0xf]
        %v1094 = vld [vmem:[%s6 + $0x40] sm:$0xf]
        %v1095 = vld [vmem:[%s6 + $0x44] sm:$0xf]
        %v1096 = vld [vmem:[%s6 + $0x48] sm:$0xf]
        %v1097 = vld [vmem:[%s6 + $0x4c] sm:$0xf]
        %v1098 = vld [vmem:[%s6 + $0x50] sm:$0xf]
        %v1099 = vld [vmem:[%s6 + $0x54] sm:$0xf]
        %v1100 = vld [vmem:[%s6 + $0x58] sm:$0xf]
        %v1101 = vld [vmem:[%s6 + $0x5c] sm:$0xf]
        %v1102 = vld [vmem:[%s6 + $0x60] sm:$0xf]
        %v1103 = vld [vmem:[%s6 + $0x64] sm:$0xf]
        %v1104 = vld [vmem:[%s6 + $0x68] sm:$0xf]
        %v1105 = vld [vmem:[%s6 + $0x6c] sm:$0xf]
        %v1106 = vld [vmem:[%s6 + $0x70] sm:$0xf]
        %v1107 = vld [vmem:[%s6 + $0x74] sm:$0xf]
        %v1108 = vld [vmem:[%s6 + $0x78] sm:$0xf]
        %v1109 = vld [vmem:[%s6 + $0x7c] sm:$0xf]
        %v1110 = vlaneseq
        %v1111 = vshrl.u32 %v1110, 7
        %v1112 = vsub.s32 1, %v1111
        %v1113 = vrot.slane %v344, %v1112
        %v1146 = vunpack.c.l.b16 %v1078
        %v1147 = vunpack.c.l.b16 %v1079
        %v1148 = vunpack.c.l.b16 %v1080
        %v1149 = vunpack.c.l.b16 %v1081
        %v1150 = vunpack.c.l.b16 %v1082
        %v1151 = vunpack.c.l.b16 %v1083
        %v1152 = vunpack.c.l.b16 %v1084
        %v1153 = vunpack.c.l.b16 %v1085
        %v1154 = vunpack.c.l.b16 %v1086
        %v1155 = vunpack.c.l.b16 %v1087
        %v1156 = vunpack.c.l.b16 %v1088
        %v1157 = vunpack.c.l.b16 %v1089
        %v1158 = vunpack.c.l.b16 %v1090
        %v1159 = vunpack.c.l.b16 %v1091
        %v1160 = vunpack.c.l.b16 %v1092
        %v1161 = vunpack.c.l.b16 %v1093
        %v1162 = vunpack.c.l.b16 %v1094
        %v1163 = vunpack.c.l.b16 %v1095
        %v1164 = vunpack.c.l.b16 %v1096
        %v1165 = vunpack.c.l.b16 %v1097
        %v1166 = vunpack.c.l.b16 %v1098
        %v1167 = vunpack.c.l.b16 %v1099
        %v1168 = vunpack.c.l.b16 %v1100
        %v1169 = vunpack.c.l.b16 %v1101
        %v1170 = vunpack.c.l.b16 %v1102
        %v1171 = vunpack.c.l.b16 %v1103
        %v1172 = vunpack.c.l.b16 %v1104
        %v1173 = vunpack.c.l.b16 %v1105
        %v1174 = vunpack.c.l.b16 %v1106
        %v1175 = vunpack.c.l.b16 %v1107
        %v1176 = vunpack.c.l.b16 %v1108
        %v1177 = vunpack.c.l.b16 %v1109
        %v1178 = vpack.c.b16 %v1147, %v1146
        %v1179 = vpack.c.b16 %v1149, %v1148
        %v1180 = vpack.c.b16 %v1151, %v1150
        %v1181 = vpack.c.b16 %v1153, %v1152
        %v1182 = vpack.c.b16 %v1155, %v1154
        %v1183 = vpack.c.b16 %v1157, %v1156
        %v1184 = vpack.c.b16 %v1159, %v1158
        %v1185 = vpack.c.b16 %v1161, %v1160
        %v1186 = vpack.c.b16 %v1163, %v1162
        %v1187 = vpack.c.b16 %v1165, %v1164
        %v1188 = vpack.c.b16 %v1167, %v1166
        %v1189 = vpack.c.b16 %v1169, %v1168
        %v1190 = vpack.c.b16 %v1171, %v1170
        %v1191 = vpack.c.b16 %v1173, %v1172
        %v1192 = vpack.c.b16 %v1175, %v1174
        %v1193 = vpack.c.b16 %v1177, %v1176
        %1210 = vmatprep.subr.bf16.mxu0 0
        %1211 = vmatpush1.bf16.msra.mxu0 %v1178
        %1212 = vmatprep.subr.bf16.mxu0 0
        %1213 = vmatpush1.bf16.msra.mxu0 %v1179
        %1214 = vmatprep.subr.bf16.mxu0 0
        %1215 = vmatpush1.bf16.msra.mxu0 %v1180
        %1216 = vmatprep.subr.bf16.mxu0 0
        %1217 = vmatpush1.bf16.msra.mxu0 %v1181
        %1218 = vmatprep.subr.bf16.mxu0 0
        %1219 = vmatpush1.bf16.msra.mxu0 %v1182
        %1220 = vmatprep.subr.bf16.mxu0 0
        %1221 = vmatpush1.bf16.msra.mxu0 %v1183
        %1222 = vmatprep.subr.bf16.mxu0 0
        %1223 = vmatpush1.bf16.msra.mxu0 %v1184
        %1224 = vmatprep.subr.bf16.mxu0 0
        %1225 = vmatpush1.bf16.msra.mxu0 %v1185
        %1226 = vmatprep.subr.bf16.mxu0 0
        %1227 = vmatpush1.bf16.msra.mxu0 %v1186
        %1228 = vmatprep.subr.bf16.mxu0 0
        %1229 = vmatpush1.bf16.msra.mxu0 %v1187
        %1230 = vmatprep.subr.bf16.mxu0 0
        %1231 = vmatpush1.bf16.msra.mxu0 %v1188
        %1232 = vmatprep.subr.bf16.mxu0 0
        %1233 = vmatpush1.bf16.msra.mxu0 %v1189
        %1234 = vmatprep.subr.bf16.mxu0 0
        %1235 = vmatpush1.bf16.msra.mxu0 %v1190
        %1236 = vmatprep.subr.bf16.mxu0 0
        %1237 = vmatpush1.bf16.msra.mxu0 %v1191
        %1238 = vmatprep.subr.bf16.mxu0 0
        %1239 = vmatpush1.bf16.msra.mxu0 %v1192
        %1240 = vmatprep.subr.bf16.mxu0 0
        %1241 = vmatpush1.bf16.msra.mxu0 %v1193
        %1242 = vmatprep.mubr.bf16.mxu0 %v1077
        %1243 = vmatmul.mubr.bf16.gmra.mrb[0].mxu0 %v1076
        %v1244 = vpop.f32.mrb[0].mxu0
        %v1245 = vadd.f32 %v1113, %v1244
        %v1246 = vpop.f32.mrb[0].mxu0
        %v1247 = vpop.f32.mrb[0].mxu0
        %v1248 = vpop.f32.mrb[0].mxu0
        %1249 = vdwg.mxu0
        %v1250 = vadd.f32 %v979, %v1245
        %v1251 = vsel %vm369, %v1250, 0.0
        %1252 = vadd.xlane.f32.xlu0 %v1251
        %v1253 = vpop.xlane.xlu0 %1252
        %v1254 = vmul.f32 %v1253, %v959
        %v1255 = vsub.f32 %v1250, %v1254
        %v1256 = vmul.f32 %v1255, %v1255
        %v1257 = vsel %vm369, %v1256, 0.0
        %1258 = vadd.xlane.f32.xlu0 %v1257
        %v1259 = vpop.xlane.xlu0 %1258
        %v1260 = vmul.f32 %v1259, %v959
        %v1261 = vadd.f32 %v1260, 1e-05
        %v1262 = vrsqrt.pop %v1261
        %v1263 = vmul.f32 %v1255, %v1262
        %v1264 = vlaneseq
        %v1265 = vshrl.u32 %v1264, 7
        %v1266 = vsub.s32 4, %v1265
        %v1267 = vrot.slane %v344, %v1266
        %v1268 = vmul.f32 %v1263, %v1267
        %v1269 = vlaneseq
        %v1270 = vshrl.u32 %v1269, 7
        %v1271 = vsub.s32 5, %v1270
        %v1272 = vrot.slane %v344, %v1271
        %v1273 = vadd.f32 %v1268, %v1272
        %1274 = vst.msk [vmem:[%s334] sm:$0xff] %vm369, %v1273
        %s1275 = sand.u32 %s230, 1
        %s1276 = scalar_lea.sflag [#allocation3], %s1275
        %s1277 = sand.u32 %s230, 1
        %s1278 = smul.addr %s1277, 8
        %s1279 = scalar_lea.vmem [#allocation2], %s1278
        // Predicated region
        $region57: #{tpu_custom_call.1} parent=55 // pred_check
          %p1280 = pneg %p240
        $region58: #{tpu_custom_call.1} parent=55 // pred_check_branch
          %1282 = sbr.rel (%p1280) target = $region60
        $region59: #{tpu_custom_call.1} parent=55 // pred_region
          %s1284 = ssub.s32 128, 128
          %1285 = vsyncadd %s1276, %s1284
          %s1286 = smul.addr %s23, 128
          %s1287 = scalar_lea.hbm %s9, %s1286
          %s1289 = sshll.u32 %s1279, 4
          %s1290 = int_to_ptr.vmem [resolvable:$true] %s1289
          %1292 = dma.vmem_to_hbm [thread:$0]  %s1290, 128, %s1287, %s1276
        $region60: #{tpu_custom_call.1} parent=55 // pred_fallthru
          _
      $region56: #{tpu_custom_call.1} parent=5 // pred_fallthru
        _
      %p1293 = scmp.le.s32.totalorder 2, %s18
      // Predicated region
      $region61: #{tpu_custom_call.1} parent=5 // pred_check
        %p1294 = pneg %p1293
      $region62: #{tpu_custom_call.1} parent=5 // pred_check_branch
        %1296 = sbr.rel (%p1294) target = $region64
      $region63: #{tpu_custom_call.1} parent=5 // pred_region
        %s1297 = ssub.s32 %s18, 2
        // Predicated region
        $region65: #{tpu_custom_call.1} parent=63 // pred_check
          %p1298 = pneg %p246
        $region66: #{tpu_custom_call.1} parent=63 // pred_check_branch
          %1300 = sbr.rel (%p1298) target = $region68
        $region67: #{tpu_custom_call.1} parent=63 // pred_region
          %s1301 = sand.u32 %s231, 1
          %s1302 = scalar_lea.sflag [#allocation3], %s1301
          %s1303 = sand.u32 %s231, 1
          %s1304 = smul.addr %s1303, 8
          %s1305 = scalar_lea.vmem [#allocation2], %s1304
          %1306 = dma.done %s1302, 128
        $region68: #{tpu_custom_call.1} parent=63 // pred_fallthru
          _
      $region64: #{tpu_custom_call.1} parent=5 // pred_fallthru
        _
    $region6: #{tpu_custom_call.1} parent=1 // loop_footer
      %s22 = sadd.s32 1, %s18
    $region7: #{tpu_custom_call.1} parent=1 // loop_footer_branch
      %17 = sbr.rel target = $region3
    $region8: #{tpu_custom_call.1} parent=1 // loop_exit
      _
    %1307 = vsyncpa [#allocation3], 1
    %s1308 = scalar_lea.sflag [#allocation3], 1
    %1309 = vsyncpa %s1308, 1

</llo_original>
